<compile_context>
chip_gen: v7x
topology: tpu7x:2x2x1
jax: 0.10.0
libtpu: 0.0.40
codegen_flags: <defaults>
</compile_context>

<pallas_src>
import jax
import jax.numpy as jnp
from jax import lax
from jax.experimental import pallas as pl
from jax.experimental.pallas import tpu as pltpu


_STRIDES = (1, 2, 2, 2, 2)
_PADS = (0, 1, 1, 1, 1)
_KSIZES = (3, 4, 4, 4, 4)
_BN_EPS = 1e-5


# --------------------------- fused decoder kernel ---------------------------

def _decoder_kernel(z_ref,
                    w0, s0, v0, w1, s1, v1, w2, s2, v2,
                    w3, s3, v3, w4, s4, v4,
                    out_ref):
    layers = ((w0, s0, v0), (w1, s1, v1), (w2, s2, v2),
              (w3, s3, v3), (w4, s4, v4))
    act = z_ref[...]                                   # (N*H_in, W_in*Cin) slab
    for li, (w_r, s_r, v_r) in enumerate(layers):
        ktaps = w_r.shape[0]
        # ConvTranspose2d == sum_kh  S_kh @ (act @ M_kh)  -> (N*H_out, W_out*Cout)
        acc = None
        for kh in range(ktaps):
            t = jnp.dot(act, w_r[kh], preferred_element_type=jnp.float32)
            c = jnp.dot(s_r[kh], t, preferred_element_type=jnp.float32)
            acc = c if acc is None else acc + c
        pre = acc + v_r[...]                           # BN shift / conv bias
        if li < 4:
            act = jnp.maximum(pre, 0.0)                # (BN scale folded) + ReLU
        else:
            # numerically safe sigmoid (no inf intermediates)
            act = jnp.where(pre >= 0.0,
                            1.0 / (1.0 + jnp.exp(-pre)),
                            jnp.exp(pre) / (1.0 + jnp.exp(pre)))
    out_ref[...] = act


# --------------------------- operand preparation ----------------------------

def _width_operator(w, stride, pad, w_in, scale):
    """PyTorch ConvTranspose2d weight (Cin, Cout, KH, KW) -> per-kh dense width
    operators of shape (KH, W_in*Cin, W_out*Cout); BN scale folded into columns."""
    cin, cout, kh_, kw_ = w.shape
    w_out = stride * (w_in - 1) + kw_ - 2 * pad
    iw = jnp.arange(w_in)
    x = jnp.arange(w_out)
    kw_need = x[None, :] - stride * iw[:, None] + pad            # (W_in, W_out)
    valid = ((kw_need >= 0) & (kw_need < kw_)).astype(w.dtype)
    kw_clip = jnp.clip(kw_need, 0, kw_ - 1)
    g = w[:, :, :, kw_clip]                                      # (Cin,Cout,KH,W_in,W_out)
    g = g * valid[None, None, None, :, :]
    if scale is not None:
        g = g * scale[None, :, None, None, None]
    g = jnp.transpose(g, (2, 3, 0, 4, 1))                        # (KH,W_in,Cin,W_out,Cout)
    return g.reshape(kh_, w_in * cin, w_out * cout)


def _height_operator(ksize, stride, pad, h_in, batch):
    """0/1 selection matrices (KH, batch*H_out, batch*H_in): output row (n, y)
    picks input row (n, ih) iff y == stride*ih + kh - pad (block-diag over batch)."""
    h_out = stride * (h_in - 1) + ksize - 2 * pad
    kh = jnp.arange(ksize)
    y = jnp.arange(h_out)
    ih = jnp.arange(h_in)
    sel = (y[None, :, None] + pad - kh[:, None, None]
           == stride * ih[None, None, :]).astype(jnp.float32)    # (KH, H_out, H_in)
    eye = jnp.eye(batch, dtype=jnp.float32)
    bd = jnp.einsum("ab,kyi->kaybi", eye, sel)                   # (KH,N,H_out,N,H_in)
    return bd.reshape(ksize, batch * h_out, batch * h_in)


def prepare_operands(params, batch):
    """One-time (per params / batch-size) prep of all kernel operands."""
    ops = []
    h = w = 1
    for i in range(5):
        wgt = params[f"w{i}"]                                    # (Cin,Cout,KH,KW)
        cout = wgt.shape[1]
        s, p, k = _STRIDES[i], _PADS[i], _KSIZES[i]
        h_out = s * (h - 1) + k - 2 * p
        w_out = s * (w - 1) + k - 2 * p
        if i < 4:
            scale = params[f"gamma{i}"] / jnp.sqrt(params[f"var{i}"] + _BN_EPS)
            shift = params[f"beta{i}"] - params[f"mean{i}"] * scale
            vec = jnp.tile(shift, w_out).reshape(1, w_out * cout)
        else:
            scale = None
            vec = jnp.tile(params["b4"], w_out).reshape(1, w_out * cout)
        ops.append(_width_operator(wgt, s, p, w, scale).astype(jnp.float32))
        ops.append(_height_operator(k, s, p, h, batch))
        ops.append(vec.astype(jnp.float32))
        h, w = h_out, w_out
    return tuple(ops)


# ------------------------------ the decoder ---------------------------------

def pybullet_decoder_forward(z, ops):
    """z: (N, embedding_dim); ops: prepare_operands(...) -> (N, 3, 48, 48) NCHW."""
    n = z.shape[0]
    out_rows = ops[-2].shape[1]            # N * H_final
    out_cols = ops[-3].shape[2]            # W_final * 3
    operands = (z.astype(jnp.float32),) + tuple(ops)
    slab = pl.pallas_call(
        _decoder_kernel,
        out_shape=jax.ShapeDtypeStruct((out_rows, out_cols), jnp.float32),
        in_specs=[pl.BlockSpec(memory_space=pltpu.MemorySpace.VMEM)
                  for _ in operands],
        out_specs=pl.BlockSpec(memory_space=pltpu.MemorySpace.VMEM),
    )(*operands)
    img = slab.reshape(n, out_rows // n, out_cols // 3, 3)       # NHWC
    return jnp.transpose(img, (0, 3, 1, 2))                      # -> NCHW


# ------------------------------- parameters ---------------------------------

def init_params(key, init_num_filters=8, embedding_dim=16):
    nf = init_num_filters
    chans = [embedding_dim, nf * 8, nf * 4, nf * 2, nf, 3]
    params = {}
    for i in range(5):
        key, wk = jax.random.split(key)
        cin, cout, k = chans[i], chans[i + 1], _KSIZES[i]
        params[f"w{i}"] = (jax.random.normal(wk, (cin, cout, k, k), jnp.float32)
                           / jnp.sqrt(float(cin * k * k)))
    # BatchNorm2d params + running stats (eval-mode BN).
    for i in range(4):
        c = chans[i + 1]
        key, k1, k2, k3 = jax.random.split(key, 4)
        params[f"gamma{i}"] = 1.0 + 0.1 * jax.random.normal(k1, (c,), jnp.float32)
        params[f"beta{i}"] = 0.1 * jax.random.normal(k2, (c,), jnp.float32)
        params[f"mean{i}"] = 0.1 * jax.random.normal(k3, (c,), jnp.float32)
        params[f"var{i}"] = 1.0 + 0.05 * jnp.arange(c, dtype=jnp.float32)
    key, bk = jax.random.split(key)
    params["b4"] = 0.1 * jax.random.normal(bk, (3,), jnp.float32)
    return params


# ----------------------- independent pure-JAX reference ---------------------

def reference_forward(z, params):
    N, emb = z.shape
    x = z.reshape(N, emb, 1, 1).astype(jnp.float32)  # NCHW like PyTorch
    for i in range(5):
        w = params[f"w{i}"]                          # (Cin, Cout, KH, KW)
        KH, KW = w.shape[2], w.shape[3]
        p, s = _PADS[i], _STRIDES[i]
        w_conv = jnp.flip(jnp.transpose(w, (1, 0, 2, 3)), (2, 3))  # OIHW
        x = lax.conv_general_dilated(
            x, w_conv, window_strides=(1, 1),
            padding=[(KH - 1 - p, KH - 1 - p), (KW - 1 - p, KW - 1 - p)],
            lhs_dilation=(s, s),
            dimension_numbers=("NCHW", "OIHW", "NCHW"))
        if i < 4:
            scale = params[f"gamma{i}"] / jnp.sqrt(params[f"var{i}"] + _BN_EPS)
            shift = params[f"beta{i}"] - params[f"mean{i}"] * scale
            x = jnp.maximum(x * scale[None, :, None, None]
                            + shift[None, :, None, None], 0.0)
        else:
            x = jax.nn.sigmoid(x + params["b4"][None, :, None, None])
    return x


if __name__ == "__main__":
    key = jax.random.PRNGKey(0)
    pkey, zkey = jax.random.split(key)

    init_num_filters, embedding_dim, batch = 8, 16, 2
    params = init_params(pkey, init_num_filters, embedding_dim)
    z = jax.random.normal(zkey, (batch, embedding_dim), jnp.float32)

    ops = prepare_operands(params, batch)          # one-time, weight-only prep
    fwd = jax.jit(pybullet_decoder_forward)
    out = jax.block_until_ready(fwd(z, ops))
    assert out.shape == (batch, 3, 48, 48), out.shape
    assert bool(jnp.all(jnp.isfinite(out)))

    ref = jax.block_until_ready(reference_forward(z, params))
    assert jnp.allclose(out, ref, atol=2e-3, rtol=2e-3), \
        float(jnp.max(jnp.abs(out - ref)))

    print("KERNEL_OK")
</pallas_src>

<mosaic_0001>
module attributes {stable_mosaic.version = 11 : i64} {
  func.func @_decoder_kernel(%arg0: memref<2x16xf32, #tpu.memory_space<vmem>>, %arg1: memref<3x16x192xf32, #tpu.memory_space<vmem>>, %arg2: memref<3x6x2xf32, #tpu.memory_space<vmem>>, %arg3: memref<1x192xf32, #tpu.memory_space<vmem>>, %arg4: memref<4x192x192xf32, #tpu.memory_space<vmem>>, %arg5: memref<4x12x6xf32, #tpu.memory_space<vmem>>, %arg6: memref<1x192xf32, #tpu.memory_space<vmem>>, %arg7: memref<4x192x192xf32, #tpu.memory_space<vmem>>, %arg8: memref<4x24x12xf32, #tpu.memory_space<vmem>>, %arg9: memref<1x192xf32, #tpu.memory_space<vmem>>, %arg10: memref<4x192x192xf32, #tpu.memory_space<vmem>>, %arg11: memref<4x48x24xf32, #tpu.memory_space<vmem>>, %arg12: memref<1x192xf32, #tpu.memory_space<vmem>>, %arg13: memref<4x192x144xf32, #tpu.memory_space<vmem>>, %arg14: memref<4x96x48xf32, #tpu.memory_space<vmem>>, %arg15: memref<1x144xf32, #tpu.memory_space<vmem>>, %arg16: memref<96x144xf32, #tpu.memory_space<vmem>>) attributes {dimension_semantics = [], scalar_prefetch = 0 : i64, scratch_operands = 0 : i64, tpu.core_type = #tpu.core_type<tc>} {
    %c0 = arith.constant 0 : index
    %c0_0 = arith.constant 0 : index
    %0 = vector.load %arg0[%c0, %c0_0] : memref<2x16xf32, #tpu.memory_space<vmem>>, vector<2x16xf32>
    %c0_1 = arith.constant 0 : index
    %c0_2 = arith.constant 0 : index
    %c0_3 = arith.constant 0 : index
    %1 = vector.load %arg1[%c0_1, %c0_2, %c0_3] : memref<3x16x192xf32, #tpu.memory_space<vmem>>, vector<1x16x192xf32>
    %2 = vector.shape_cast %1 : vector<1x16x192xf32> to vector<16x192xf32>
    %cst = arith.constant dense<0.000000e+00> : vector<2x192xf32>
    %3 = tpu.matmul %0, %2, %cst {dimension_numbers = #tpu.dot_dimension_numbers<[1], [0], [0], [1], [0, 0, 1, 1], [], []>} : vector<2x16xf32>, vector<16x192xf32>, vector<2x192xf32> -> vector<2x192xf32>
    %c0_4 = arith.constant 0 : index
    %c0_5 = arith.constant 0 : index
    %c0_6 = arith.constant 0 : index
    %4 = vector.load %arg2[%c0_4, %c0_5, %c0_6] : memref<3x6x2xf32, #tpu.memory_space<vmem>>, vector<1x6x2xf32>
    %5 = vector.shape_cast %4 : vector<1x6x2xf32> to vector<6x2xf32>
    %cst_7 = arith.constant dense<0.000000e+00> : vector<6x192xf32>
    %6 = tpu.matmul %5, %3, %cst_7 {dimension_numbers = #tpu.dot_dimension_numbers<[1], [0], [0], [1], [0, 0, 1, 1], [], []>} : vector<6x2xf32>, vector<2x192xf32>, vector<6x192xf32> -> vector<6x192xf32>
    %c1 = arith.constant 1 : index
    %c0_8 = arith.constant 0 : index
    %c0_9 = arith.constant 0 : index
    %7 = vector.load %arg1[%c1, %c0_8, %c0_9] : memref<3x16x192xf32, #tpu.memory_space<vmem>>, vector<1x16x192xf32>
    %8 = vector.shape_cast %7 : vector<1x16x192xf32> to vector<16x192xf32>
    %cst_10 = arith.constant dense<0.000000e+00> : vector<2x192xf32>
    %9 = tpu.matmul %0, %8, %cst_10 {dimension_numbers = #tpu.dot_dimension_numbers<[1], [0], [0], [1], [0, 0, 1, 1], [], []>} : vector<2x16xf32>, vector<16x192xf32>, vector<2x192xf32> -> vector<2x192xf32>
    %c1_11 = arith.constant 1 : index
    %c0_12 = arith.constant 0 : index
    %c0_13 = arith.constant 0 : index
    %10 = vector.load %arg2[%c1_11, %c0_12, %c0_13] : memref<3x6x2xf32, #tpu.memory_space<vmem>>, vector<1x6x2xf32>
    %11 = vector.shape_cast %10 : vector<1x6x2xf32> to vector<6x2xf32>
    %cst_14 = arith.constant dense<0.000000e+00> : vector<6x192xf32>
    %12 = tpu.matmul %11, %9, %cst_14 {dimension_numbers = #tpu.dot_dimension_numbers<[1], [0], [0], [1], [0, 0, 1, 1], [], []>} : vector<6x2xf32>, vector<2x192xf32>, vector<6x192xf32> -> vector<6x192xf32>
    %13 = arith.addf %6, %12 : vector<6x192xf32>
    %c2 = arith.constant 2 : index
    %c0_15 = arith.constant 0 : index
    %c0_16 = arith.constant 0 : index
    %14 = vector.load %arg1[%c2, %c0_15, %c0_16] : memref<3x16x192xf32, #tpu.memory_space<vmem>>, vector<1x16x192xf32>
    %15 = vector.shape_cast %14 : vector<1x16x192xf32> to vector<16x192xf32>
    %cst_17 = arith.constant dense<0.000000e+00> : vector<2x192xf32>
    %16 = tpu.matmul %0, %15, %cst_17 {dimension_numbers = #tpu.dot_dimension_numbers<[1], [0], [0], [1], [0, 0, 1, 1], [], []>} : vector<2x16xf32>, vector<16x192xf32>, vector<2x192xf32> -> vector<2x192xf32>
    %c2_18 = arith.constant 2 : index
    %c0_19 = arith.constant 0 : index
    %c0_20 = arith.constant 0 : index
    %17 = vector.load %arg2[%c2_18, %c0_19, %c0_20] : memref<3x6x2xf32, #tpu.memory_space<vmem>>, vector<1x6x2xf32>
    %18 = vector.shape_cast %17 : vector<1x6x2xf32> to vector<6x2xf32>
    %cst_21 = arith.constant dense<0.000000e+00> : vector<6x192xf32>
    %19 = tpu.matmul %18, %16, %cst_21 {dimension_numbers = #tpu.dot_dimension_numbers<[1], [0], [0], [1], [0, 0, 1, 1], [], []>} : vector<6x2xf32>, vector<2x192xf32>, vector<6x192xf32> -> vector<6x192xf32>
    %20 = arith.addf %13, %19 : vector<6x192xf32>
    %c0_22 = arith.constant 0 : index
    %c0_23 = arith.constant 0 : index
    %21 = vector.load %arg3[%c0_22, %c0_23] : memref<1x192xf32, #tpu.memory_space<vmem>>, vector<1x192xf32>
    %22 = vector.broadcast %21 : vector<1x192xf32> to vector<6x192xf32>
    %23 = arith.addf %20, %22 : vector<6x192xf32>
    %cst_24 = arith.constant 0.000000e+00 : f32
    %24 = vector.broadcast %cst_24 : f32 to vector<6x192xf32>
    %25 = arith.maximumf %23, %24 : vector<6x192xf32>
    %c0_25 = arith.constant 0 : index
    %c0_26 = arith.constant 0 : index
    %c0_27 = arith.constant 0 : index
    %26 = vector.load %arg4[%c0_25, %c0_26, %c0_27] : memref<4x192x192xf32, #tpu.memory_space<vmem>>, vector<1x192x192xf32>
    %27 = vector.shape_cast %26 : vector<1x192x192xf32> to vector<192x192xf32>
    %cst_28 = arith.constant dense<0.000000e+00> : vector<6x192xf32>
    %28 = tpu.matmul %25, %27, %cst_28 {dimension_numbers = #tpu.dot_dimension_numbers<[1], [0], [0], [1], [0, 0, 1, 1], [], []>} : vector<6x192xf32>, vector<192x192xf32>, vector<6x192xf32> -> vector<6x192xf32>
    %c0_29 = arith.constant 0 : index
    %c0_30 = arith.constant 0 : index
    %c0_31 = arith.constant 0 : index
    %29 = vector.load %arg5[%c0_29, %c0_30, %c0_31] : memref<4x12x6xf32, #tpu.memory_space<vmem>>, vector<1x12x6xf32>
    %30 = vector.shape_cast %29 : vector<1x12x6xf32> to vector<12x6xf32>
    %cst_32 = arith.constant dense<0.000000e+00> : vector<12x192xf32>
    %31 = tpu.matmul %30, %28, %cst_32 {dimension_numbers = #tpu.dot_dimension_numbers<[1], [0], [0], [1], [0, 0, 1, 1], [], []>} : vector<12x6xf32>, vector<6x192xf32>, vector<12x192xf32> -> vector<12x192xf32>
    %c1_33 = arith.constant 1 : index
    %c0_34 = arith.constant 0 : index
    %c0_35 = arith.constant 0 : index
    %32 = vector.load %arg4[%c1_33, %c0_34, %c0_35] : memref<4x192x192xf32, #tpu.memory_space<vmem>>, vector<1x192x192xf32>
    %33 = vector.shape_cast %32 : vector<1x192x192xf32> to vector<192x192xf32>
    %cst_36 = arith.constant dense<0.000000e+00> : vector<6x192xf32>
    %34 = tpu.matmul %25, %33, %cst_36 {dimension_numbers = #tpu.dot_dimension_numbers<[1], [0], [0], [1], [0, 0, 1, 1], [], []>} : vector<6x192xf32>, vector<192x192xf32>, vector<6x192xf32> -> vector<6x192xf32>
    %c1_37 = arith.constant 1 : index
    %c0_38 = arith.constant 0 : index
    %c0_39 = arith.constant 0 : index
    %35 = vector.load %arg5[%c1_37, %c0_38, %c0_39] : memref<4x12x6xf32, #tpu.memory_space<vmem>>, vector<1x12x6xf32>
    %36 = vector.shape_cast %35 : vector<1x12x6xf32> to vector<12x6xf32>
    %cst_40 = arith.constant dense<0.000000e+00> : vector<12x192xf32>
    %37 = tpu.matmul %36, %34, %cst_40 {dimension_numbers = #tpu.dot_dimension_numbers<[1], [0], [0], [1], [0, 0, 1, 1], [], []>} : vector<12x6xf32>, vector<6x192xf32>, vector<12x192xf32> -> vector<12x192xf32>
    %38 = arith.addf %31, %37 : vector<12x192xf32>
    %c2_41 = arith.constant 2 : index
    %c0_42 = arith.constant 0 : index
    %c0_43 = arith.constant 0 : index
    %39 = vector.load %arg4[%c2_41, %c0_42, %c0_43] : memref<4x192x192xf32, #tpu.memory_space<vmem>>, vector<1x192x192xf32>
    %40 = vector.shape_cast %39 : vector<1x192x192xf32> to vector<192x192xf32>
    %cst_44 = arith.constant dense<0.000000e+00> : vector<6x192xf32>
    %41 = tpu.matmul %25, %40, %cst_44 {dimension_numbers = #tpu.dot_dimension_numbers<[1], [0], [0], [1], [0, 0, 1, 1], [], []>} : vector<6x192xf32>, vector<192x192xf32>, vector<6x192xf32> -> vector<6x192xf32>
    %c2_45 = arith.constant 2 : index
    %c0_46 = arith.constant 0 : index
    %c0_47 = arith.constant 0 : index
    %42 = vector.load %arg5[%c2_45, %c0_46, %c0_47] : memref<4x12x6xf32, #tpu.memory_space<vmem>>, vector<1x12x6xf32>
    %43 = vector.shape_cast %42 : vector<1x12x6xf32> to vector<12x6xf32>
    %cst_48 = arith.constant dense<0.000000e+00> : vector<12x192xf32>
    %44 = tpu.matmul %43, %41, %cst_48 {dimension_numbers = #tpu.dot_dimension_numbers<[1], [0], [0], [1], [0, 0, 1, 1], [], []>} : vector<12x6xf32>, vector<6x192xf32>, vector<12x192xf32> -> vector<12x192xf32>
    %45 = arith.addf %38, %44 : vector<12x192xf32>
    %c3 = arith.constant 3 : index
    %c0_49 = arith.constant 0 : index
    %c0_50 = arith.constant 0 : index
    %46 = vector.load %arg4[%c3, %c0_49, %c0_50] : memref<4x192x192xf32, #tpu.memory_space<vmem>>, vector<1x192x192xf32>
    %47 = vector.shape_cast %46 : vector<1x192x192xf32> to vector<192x192xf32>
    %cst_51 = arith.constant dense<0.000000e+00> : vector<6x192xf32>
    %48 = tpu.matmul %25, %47, %cst_51 {dimension_numbers = #tpu.dot_dimension_numbers<[1], [0], [0], [1], [0, 0, 1, 1], [], []>} : vector<6x192xf32>, vector<192x192xf32>, vector<6x192xf32> -> vector<6x192xf32>
    %c3_52 = arith.constant 3 : index
    %c0_53 = arith.constant 0 : index
    %c0_54 = arith.constant 0 : index
    %49 = vector.load %arg5[%c3_52, %c0_53, %c0_54] : memref<4x12x6xf32, #tpu.memory_space<vmem>>, vector<1x12x6xf32>
    %50 = vector.shape_cast %49 : vector<1x12x6xf32> to vector<12x6xf32>
    %cst_55 = arith.constant dense<0.000000e+00> : vector<12x192xf32>
    %51 = tpu.matmul %50, %48, %cst_55 {dimension_numbers = #tpu.dot_dimension_numbers<[1], [0], [0], [1], [0, 0, 1, 1], [], []>} : vector<12x6xf32>, vector<6x192xf32>, vector<12x192xf32> -> vector<12x192xf32>
    %52 = arith.addf %45, %51 : vector<12x192xf32>
    %c0_56 = arith.constant 0 : index
    %c0_57 = arith.constant 0 : index
    %53 = vector.load %arg6[%c0_56, %c0_57] : memref<1x192xf32, #tpu.memory_space<vmem>>, vector<1x192xf32>
    %54 = vector.broadcast %53 : vector<1x192xf32> to vector<12x192xf32>
    %55 = arith.addf %52, %54 : vector<12x192xf32>
    %cst_58 = arith.constant 0.000000e+00 : f32
    %56 = vector.broadcast %cst_58 : f32 to vector<12x192xf32>
    %57 = arith.maximumf %55, %56 : vector<12x192xf32>
    %c0_59 = arith.constant 0 : index
    %c0_60 = arith.constant 0 : index
    %c0_61 = arith.constant 0 : index
    %58 = vector.load %arg7[%c0_59, %c0_60, %c0_61] : memref<4x192x192xf32, #tpu.memory_space<vmem>>, vector<1x192x192xf32>
    %59 = vector.shape_cast %58 : vector<1x192x192xf32> to vector<192x192xf32>
    %cst_62 = arith.constant dense<0.000000e+00> : vector<12x192xf32>
    %60 = tpu.matmul %57, %59, %cst_62 {dimension_numbers = #tpu.dot_dimension_numbers<[1], [0], [0], [1], [0, 0, 1, 1], [], []>} : vector<12x192xf32>, vector<192x192xf32>, vector<12x192xf32> -> vector<12x192xf32>
    %c0_63 = arith.constant 0 : index
    %c0_64 = arith.constant 0 : index
    %c0_65 = arith.constant 0 : index
    %61 = vector.load %arg8[%c0_63, %c0_64, %c0_65] : memref<4x24x12xf32, #tpu.memory_space<vmem>>, vector<1x24x12xf32>
    %62 = vector.shape_cast %61 : vector<1x24x12xf32> to vector<24x12xf32>
    %cst_66 = arith.constant dense<0.000000e+00> : vector<24x192xf32>
    %63 = tpu.matmul %62, %60, %cst_66 {dimension_numbers = #tpu.dot_dimension_numbers<[1], [0], [0], [1], [0, 0, 1, 1], [], []>} : vector<24x12xf32>, vector<12x192xf32>, vector<24x192xf32> -> vector<24x192xf32>
    %c1_67 = arith.constant 1 : index
    %c0_68 = arith.constant 0 : index
    %c0_69 = arith.constant 0 : index
    %64 = vector.load %arg7[%c1_67, %c0_68, %c0_69] : memref<4x192x192xf32, #tpu.memory_space<vmem>>, vector<1x192x192xf32>
    %65 = vector.shape_cast %64 : vector<1x192x192xf32> to vector<192x192xf32>
    %cst_70 = arith.constant dense<0.000000e+00> : vector<12x192xf32>
    %66 = tpu.matmul %57, %65, %cst_70 {dimension_numbers = #tpu.dot_dimension_numbers<[1], [0], [0], [1], [0, 0, 1, 1], [], []>} : vector<12x192xf32>, vector<192x192xf32>, vector<12x192xf32> -> vector<12x192xf32>
    %c1_71 = arith.constant 1 : index
    %c0_72 = arith.constant 0 : index
    %c0_73 = arith.constant 0 : index
    %67 = vector.load %arg8[%c1_71, %c0_72, %c0_73] : memref<4x24x12xf32, #tpu.memory_space<vmem>>, vector<1x24x12xf32>
    %68 = vector.shape_cast %67 : vector<1x24x12xf32> to vector<24x12xf32>
    %cst_74 = arith.constant dense<0.000000e+00> : vector<24x192xf32>
    %69 = tpu.matmul %68, %66, %cst_74 {dimension_numbers = #tpu.dot_dimension_numbers<[1], [0], [0], [1], [0, 0, 1, 1], [], []>} : vector<24x12xf32>, vector<12x192xf32>, vector<24x192xf32> -> vector<24x192xf32>
    %70 = arith.addf %63, %69 : vector<24x192xf32>
    %c2_75 = arith.constant 2 : index
    %c0_76 = arith.constant 0 : index
    %c0_77 = arith.constant 0 : index
    %71 = vector.load %arg7[%c2_75, %c0_76, %c0_77] : memref<4x192x192xf32, #tpu.memory_space<vmem>>, vector<1x192x192xf32>
    %72 = vector.shape_cast %71 : vector<1x192x192xf32> to vector<192x192xf32>
    %cst_78 = arith.constant dense<0.000000e+00> : vector<12x192xf32>
    %73 = tpu.matmul %57, %72, %cst_78 {dimension_numbers = #tpu.dot_dimension_numbers<[1], [0], [0], [1], [0, 0, 1, 1], [], []>} : vector<12x192xf32>, vector<192x192xf32>, vector<12x192xf32> -> vector<12x192xf32>
    %c2_79 = arith.constant 2 : index
    %c0_80 = arith.constant 0 : index
    %c0_81 = arith.constant 0 : index
    %74 = vector.load %arg8[%c2_79, %c0_80, %c0_81] : memref<4x24x12xf32, #tpu.memory_space<vmem>>, vector<1x24x12xf32>
    %75 = vector.shape_cast %74 : vector<1x24x12xf32> to vector<24x12xf32>
    %cst_82 = arith.constant dense<0.000000e+00> : vector<24x192xf32>
    %76 = tpu.matmul %75, %73, %cst_82 {dimension_numbers = #tpu.dot_dimension_numbers<[1], [0], [0], [1], [0, 0, 1, 1], [], []>} : vector<24x12xf32>, vector<12x192xf32>, vector<24x192xf32> -> vector<24x192xf32>
    %77 = arith.addf %70, %76 : vector<24x192xf32>
    %c3_83 = arith.constant 3 : index
    %c0_84 = arith.constant 0 : index
    %c0_85 = arith.constant 0 : index
    %78 = vector.load %arg7[%c3_83, %c0_84, %c0_85] : memref<4x192x192xf32, #tpu.memory_space<vmem>>, vector<1x192x192xf32>
    %79 = vector.shape_cast %78 : vector<1x192x192xf32> to vector<192x192xf32>
    %cst_86 = arith.constant dense<0.000000e+00> : vector<12x192xf32>
    %80 = tpu.matmul %57, %79, %cst_86 {dimension_numbers = #tpu.dot_dimension_numbers<[1], [0], [0], [1], [0, 0, 1, 1], [], []>} : vector<12x192xf32>, vector<192x192xf32>, vector<12x192xf32> -> vector<12x192xf32>
    %c3_87 = arith.constant 3 : index
    %c0_88 = arith.constant 0 : index
    %c0_89 = arith.constant 0 : index
    %81 = vector.load %arg8[%c3_87, %c0_88, %c0_89] : memref<4x24x12xf32, #tpu.memory_space<vmem>>, vector<1x24x12xf32>
    %82 = vector.shape_cast %81 : vector<1x24x12xf32> to vector<24x12xf32>
    %cst_90 = arith.constant dense<0.000000e+00> : vector<24x192xf32>
    %83 = tpu.matmul %82, %80, %cst_90 {dimension_numbers = #tpu.dot_dimension_numbers<[1], [0], [0], [1], [0, 0, 1, 1], [], []>} : vector<24x12xf32>, vector<12x192xf32>, vector<24x192xf32> -> vector<24x192xf32>
    %84 = arith.addf %77, %83 : vector<24x192xf32>
    %c0_91 = arith.constant 0 : index
    %c0_92 = arith.constant 0 : index
    %85 = vector.load %arg9[%c0_91, %c0_92] : memref<1x192xf32, #tpu.memory_space<vmem>>, vector<1x192xf32>
    %86 = vector.broadcast %85 : vector<1x192xf32> to vector<24x192xf32>
    %87 = arith.addf %84, %86 : vector<24x192xf32>
    %cst_93 = arith.constant 0.000000e+00 : f32
    %88 = vector.broadcast %cst_93 : f32 to vector<24x192xf32>
    %89 = arith.maximumf %87, %88 : vector<24x192xf32>
    %c0_94 = arith.constant 0 : index
    %c0_95 = arith.constant 0 : index
    %c0_96 = arith.constant 0 : index
    %90 = vector.load %arg10[%c0_94, %c0_95, %c0_96] : memref<4x192x192xf32, #tpu.memory_space<vmem>>, vector<1x192x192xf32>
    %91 = vector.shape_cast %90 : vector<1x192x192xf32> to vector<192x192xf32>
    %cst_97 = arith.constant dense<0.000000e+00> : vector<24x192xf32>
    %92 = tpu.matmul %89, %91, %cst_97 {dimension_numbers = #tpu.dot_dimension_numbers<[1], [0], [0], [1], [0, 0, 1, 1], [], []>} : vector<24x192xf32>, vector<192x192xf32>, vector<24x192xf32> -> vector<24x192xf32>
    %c0_98 = arith.constant 0 : index
    %c0_99 = arith.constant 0 : index
    %c0_100 = arith.constant 0 : index
    %93 = vector.load %arg11[%c0_98, %c0_99, %c0_100] : memref<4x48x24xf32, #tpu.memory_space<vmem>>, vector<1x48x24xf32>
    %94 = vector.shape_cast %93 : vector<1x48x24xf32> to vector<48x24xf32>
    %cst_101 = arith.constant dense<0.000000e+00> : vector<48x192xf32>
    %95 = tpu.matmul %94, %92, %cst_101 {dimension_numbers = #tpu.dot_dimension_numbers<[1], [0], [0], [1], [0, 0, 1, 1], [], []>} : vector<48x24xf32>, vector<24x192xf32>, vector<48x192xf32> -> vector<48x192xf32>
    %c1_102 = arith.constant 1 : index
    %c0_103 = arith.constant 0 : index
    %c0_104 = arith.constant 0 : index
    %96 = vector.load %arg10[%c1_102, %c0_103, %c0_104] : memref<4x192x192xf32, #tpu.memory_space<vmem>>, vector<1x192x192xf32>
    %97 = vector.shape_cast %96 : vector<1x192x192xf32> to vector<192x192xf32>
    %cst_105 = arith.constant dense<0.000000e+00> : vector<24x192xf32>
    %98 = tpu.matmul %89, %97, %cst_105 {dimension_numbers = #tpu.dot_dimension_numbers<[1], [0], [0], [1], [0, 0, 1, 1], [], []>} : vector<24x192xf32>, vector<192x192xf32>, vector<24x192xf32> -> vector<24x192xf32>
    %c1_106 = arith.constant 1 : index
    %c0_107 = arith.constant 0 : index
    %c0_108 = arith.constant 0 : index
    %99 = vector.load %arg11[%c1_106, %c0_107, %c0_108] : memref<4x48x24xf32, #tpu.memory_space<vmem>>, vector<1x48x24xf32>
    %100 = vector.shape_cast %99 : vector<1x48x24xf32> to vector<48x24xf32>
    %cst_109 = arith.constant dense<0.000000e+00> : vector<48x192xf32>
    %101 = tpu.matmul %100, %98, %cst_109 {dimension_numbers = #tpu.dot_dimension_numbers<[1], [0], [0], [1], [0, 0, 1, 1], [], []>} : vector<48x24xf32>, vector<24x192xf32>, vector<48x192xf32> -> vector<48x192xf32>
    %102 = arith.addf %95, %101 : vector<48x192xf32>
    %c2_110 = arith.constant 2 : index
    %c0_111 = arith.constant 0 : index
    %c0_112 = arith.constant 0 : index
    %103 = vector.load %arg10[%c2_110, %c0_111, %c0_112] : memref<4x192x192xf32, #tpu.memory_space<vmem>>, vector<1x192x192xf32>
    %104 = vector.shape_cast %103 : vector<1x192x192xf32> to vector<192x192xf32>
    %cst_113 = arith.constant dense<0.000000e+00> : vector<24x192xf32>
    %105 = tpu.matmul %89, %104, %cst_113 {dimension_numbers = #tpu.dot_dimension_numbers<[1], [0], [0], [1], [0, 0, 1, 1], [], []>} : vector<24x192xf32>, vector<192x192xf32>, vector<24x192xf32> -> vector<24x192xf32>
    %c2_114 = arith.constant 2 : index
    %c0_115 = arith.constant 0 : index
    %c0_116 = arith.constant 0 : index
    %106 = vector.load %arg11[%c2_114, %c0_115, %c0_116] : memref<4x48x24xf32, #tpu.memory_space<vmem>>, vector<1x48x24xf32>
    %107 = vector.shape_cast %106 : vector<1x48x24xf32> to vector<48x24xf32>
    %cst_117 = arith.constant dense<0.000000e+00> : vector<48x192xf32>
    %108 = tpu.matmul %107, %105, %cst_117 {dimension_numbers = #tpu.dot_dimension_numbers<[1], [0], [0], [1], [0, 0, 1, 1], [], []>} : vector<48x24xf32>, vector<24x192xf32>, vector<48x192xf32> -> vector<48x192xf32>
    %109 = arith.addf %102, %108 : vector<48x192xf32>
    %c3_118 = arith.constant 3 : index
    %c0_119 = arith.constant 0 : index
    %c0_120 = arith.constant 0 : index
    %110 = vector.load %arg10[%c3_118, %c0_119, %c0_120] : memref<4x192x192xf32, #tpu.memory_space<vmem>>, vector<1x192x192xf32>
    %111 = vector.shape_cast %110 : vector<1x192x192xf32> to vector<192x192xf32>
    %cst_121 = arith.constant dense<0.000000e+00> : vector<24x192xf32>
    %112 = tpu.matmul %89, %111, %cst_121 {dimension_numbers = #tpu.dot_dimension_numbers<[1], [0], [0], [1], [0, 0, 1, 1], [], []>} : vector<24x192xf32>, vector<192x192xf32>, vector<24x192xf32> -> vector<24x192xf32>
    %c3_122 = arith.constant 3 : index
    %c0_123 = arith.constant 0 : index
    %c0_124 = arith.constant 0 : index
    %113 = vector.load %arg11[%c3_122, %c0_123, %c0_124] : memref<4x48x24xf32, #tpu.memory_space<vmem>>, vector<1x48x24xf32>
    %114 = vector.shape_cast %113 : vector<1x48x24xf32> to vector<48x24xf32>
    %cst_125 = arith.constant dense<0.000000e+00> : vector<48x192xf32>
    %115 = tpu.matmul %114, %112, %cst_125 {dimension_numbers = #tpu.dot_dimension_numbers<[1], [0], [0], [1], [0, 0, 1, 1], [], []>} : vector<48x24xf32>, vector<24x192xf32>, vector<48x192xf32> -> vector<48x192xf32>
    %116 = arith.addf %109, %115 : vector<48x192xf32>
    %c0_126 = arith.constant 0 : index
    %c0_127 = arith.constant 0 : index
    %117 = vector.load %arg12[%c0_126, %c0_127] : memref<1x192xf32, #tpu.memory_space<vmem>>, vector<1x192xf32>
    %118 = vector.broadcast %117 : vector<1x192xf32> to vector<48x192xf32>
    %119 = arith.addf %116, %118 : vector<48x192xf32>
    %cst_128 = arith.constant 0.000000e+00 : f32
    %120 = vector.broadcast %cst_128 : f32 to vector<48x192xf32>
    %121 = arith.maximumf %119, %120 : vector<48x192xf32>
    %c0_129 = arith.constant 0 : index
    %c0_130 = arith.constant 0 : index
    %c0_131 = arith.constant 0 : index
    %122 = vector.load %arg13[%c0_129, %c0_130, %c0_131] : memref<4x192x144xf32, #tpu.memory_space<vmem>>, vector<1x192x144xf32>
    %123 = vector.shape_cast %122 : vector<1x192x144xf32> to vector<192x144xf32>
    %cst_132 = arith.constant dense<0.000000e+00> : vector<48x144xf32>
    %124 = tpu.matmul %121, %123, %cst_132 {dimension_numbers = #tpu.dot_dimension_numbers<[1], [0], [0], [1], [0, 0, 1, 1], [], []>} : vector<48x192xf32>, vector<192x144xf32>, vector<48x144xf32> -> vector<48x144xf32>
    %c0_133 = arith.constant 0 : index
    %c0_134 = arith.constant 0 : index
    %c0_135 = arith.constant 0 : index
    %125 = vector.load %arg14[%c0_133, %c0_134, %c0_135] : memref<4x96x48xf32, #tpu.memory_space<vmem>>, vector<1x96x48xf32>
    %126 = vector.shape_cast %125 : vector<1x96x48xf32> to vector<96x48xf32>
    %cst_136 = arith.constant dense<0.000000e+00> : vector<96x144xf32>
    %127 = tpu.matmul %126, %124, %cst_136 {dimension_numbers = #tpu.dot_dimension_numbers<[1], [0], [0], [1], [0, 0, 1, 1], [], []>} : vector<96x48xf32>, vector<48x144xf32>, vector<96x144xf32> -> vector<96x144xf32>
    %c1_137 = arith.constant 1 : index
    %c0_138 = arith.constant 0 : index
    %c0_139 = arith.constant 0 : index
    %128 = vector.load %arg13[%c1_137, %c0_138, %c0_139] : memref<4x192x144xf32, #tpu.memory_space<vmem>>, vector<1x192x144xf32>
    %129 = vector.shape_cast %128 : vector<1x192x144xf32> to vector<192x144xf32>
    %cst_140 = arith.constant dense<0.000000e+00> : vector<48x144xf32>
    %130 = tpu.matmul %121, %129, %cst_140 {dimension_numbers = #tpu.dot_dimension_numbers<[1], [0], [0], [1], [0, 0, 1, 1], [], []>} : vector<48x192xf32>, vector<192x144xf32>, vector<48x144xf32> -> vector<48x144xf32>
    %c1_141 = arith.constant 1 : index
    %c0_142 = arith.constant 0 : index
    %c0_143 = arith.constant 0 : index
    %131 = vector.load %arg14[%c1_141, %c0_142, %c0_143] : memref<4x96x48xf32, #tpu.memory_space<vmem>>, vector<1x96x48xf32>
    %132 = vector.shape_cast %131 : vector<1x96x48xf32> to vector<96x48xf32>
    %cst_144 = arith.constant dense<0.000000e+00> : vector<96x144xf32>
    %133 = tpu.matmul %132, %130, %cst_144 {dimension_numbers = #tpu.dot_dimension_numbers<[1], [0], [0], [1], [0, 0, 1, 1], [], []>} : vector<96x48xf32>, vector<48x144xf32>, vector<96x144xf32> -> vector<96x144xf32>
    %134 = arith.addf %127, %133 : vector<96x144xf32>
    %c2_145 = arith.constant 2 : index
    %c0_146 = arith.constant 0 : index
    %c0_147 = arith.constant 0 : index
    %135 = vector.load %arg13[%c2_145, %c0_146, %c0_147] : memref<4x192x144xf32, #tpu.memory_space<vmem>>, vector<1x192x144xf32>
    %136 = vector.shape_cast %135 : vector<1x192x144xf32> to vector<192x144xf32>
    %cst_148 = arith.constant dense<0.000000e+00> : vector<48x144xf32>
    %137 = tpu.matmul %121, %136, %cst_148 {dimension_numbers = #tpu.dot_dimension_numbers<[1], [0], [0], [1], [0, 0, 1, 1], [], []>} : vector<48x192xf32>, vector<192x144xf32>, vector<48x144xf32> -> vector<48x144xf32>
    %c2_149 = arith.constant 2 : index
    %c0_150 = arith.constant 0 : index
    %c0_151 = arith.constant 0 : index
    %138 = vector.load %arg14[%c2_149, %c0_150, %c0_151] : memref<4x96x48xf32, #tpu.memory_space<vmem>>, vector<1x96x48xf32>
    %139 = vector.shape_cast %138 : vector<1x96x48xf32> to vector<96x48xf32>
    %cst_152 = arith.constant dense<0.000000e+00> : vector<96x144xf32>
    %140 = tpu.matmul %139, %137, %cst_152 {dimension_numbers = #tpu.dot_dimension_numbers<[1], [0], [0], [1], [0, 0, 1, 1], [], []>} : vector<96x48xf32>, vector<48x144xf32>, vector<96x144xf32> -> vector<96x144xf32>
    %141 = arith.addf %134, %140 : vector<96x144xf32>
    %c3_153 = arith.constant 3 : index
    %c0_154 = arith.constant 0 : index
    %c0_155 = arith.constant 0 : index
    %142 = vector.load %arg13[%c3_153, %c0_154, %c0_155] : memref<4x192x144xf32, #tpu.memory_space<vmem>>, vector<1x192x144xf32>
    %143 = vector.shape_cast %142 : vector<1x192x144xf32> to vector<192x144xf32>
    %cst_156 = arith.constant dense<0.000000e+00> : vector<48x144xf32>
    %144 = tpu.matmul %121, %143, %cst_156 {dimension_numbers = #tpu.dot_dimension_numbers<[1], [0], [0], [1], [0, 0, 1, 1], [], []>} : vector<48x192xf32>, vector<192x144xf32>, vector<48x144xf32> -> vector<48x144xf32>
    %c3_157 = arith.constant 3 : index
    %c0_158 = arith.constant 0 : index
    %c0_159 = arith.constant 0 : index
    %145 = vector.load %arg14[%c3_157, %c0_158, %c0_159] : memref<4x96x48xf32, #tpu.memory_space<vmem>>, vector<1x96x48xf32>
    %146 = vector.shape_cast %145 : vector<1x96x48xf32> to vector<96x48xf32>
    %cst_160 = arith.constant dense<0.000000e+00> : vector<96x144xf32>
    %147 = tpu.matmul %146, %144, %cst_160 {dimension_numbers = #tpu.dot_dimension_numbers<[1], [0], [0], [1], [0, 0, 1, 1], [], []>} : vector<96x48xf32>, vector<48x144xf32>, vector<96x144xf32> -> vector<96x144xf32>
    %148 = arith.addf %141, %147 : vector<96x144xf32>
    %c0_161 = arith.constant 0 : index
    %c0_162 = arith.constant 0 : index
    %149 = vector.load %arg15[%c0_161, %c0_162] : memref<1x144xf32, #tpu.memory_space<vmem>>, vector<1x144xf32>
    %150 = vector.broadcast %149 : vector<1x144xf32> to vector<96x144xf32>
    %151 = arith.addf %148, %150 : vector<96x144xf32>
    %cst_163 = arith.constant 0.000000e+00 : f32
    %152 = vector.broadcast %cst_163 : f32 to vector<96x144xf32>
    %153 = arith.cmpf oge, %151, %152 : vector<96x144xf32>
    %cst_164 = arith.constant 0.000000e+00 : f32
    %154 = vector.broadcast %cst_164 : f32 to vector<96x144xf32>
    %155 = arith.subf %154, %151 : vector<96x144xf32>
    %156 = math.exp %155 : vector<96x144xf32>
    %cst_165 = arith.constant 1.000000e+00 : f32
    %157 = vector.broadcast %cst_165 : f32 to vector<96x144xf32>
    %158 = arith.addf %157, %156 : vector<96x144xf32>
    %cst_166 = arith.constant 1.000000e+00 : f32
    %159 = vector.broadcast %cst_166 : f32 to vector<96x144xf32>
    %160 = arith.divf %159, %158 : vector<96x144xf32>
    %161 = math.exp %151 : vector<96x144xf32>
    %162 = math.exp %151 : vector<96x144xf32>
    %cst_167 = arith.constant 1.000000e+00 : f32
    %163 = vector.broadcast %cst_167 : f32 to vector<96x144xf32>
    %164 = arith.addf %163, %162 : vector<96x144xf32>
    %165 = arith.divf %161, %164 : vector<96x144xf32>
    %166 = arith.select %153, %160, %165 : vector<96x144xi1>, vector<96x144xf32>
    %c0_168 = arith.constant 0 : index
    %c0_169 = arith.constant 0 : index
    %167 = vector.load %arg16[%c0_168, %c0_169] : memref<96x144xf32, #tpu.memory_space<vmem>>, vector<96x144xf32>
    tpu.vector_store %arg16[%c0_168, %c0_169], %166 {strides = array<i32>} : memref<96x144xf32, #tpu.memory_space<vmem>>, vector<96x144xf32>,
    return
  }
}

</mosaic_0001>

<llo_original>
// kernel: pybullet_decoder_forward.1
$region0: #{pybullet_decoder_forward.1}
  #allocation0 [shape = 'u32[]', space=smem, size = 0x4, offset = 0x4, fixed_abs, tag = 'smem constant byte address 0x4 - core index']
  #allocation1 [shape = 'u32[144,128]{1,0:T(1,128)}', space=vmem, size = 0x12000, scoped, tag = 'internal scratch']
  %s0 = inlined_call_operand.vmem [shape: f32[2,16], index: 0, kind: input, shape index: {}]
  %s1 = inlined_call_operand.vmem [shape: f32[3,16,192], index: 1, kind: input, shape index: {}]
  %s2 = inlined_call_operand.vmem [shape: f32[3,6,2], index: 2, kind: input, shape index: {}]
  %s3 = inlined_call_operand.vmem [shape: f32[1,192], index: 3, kind: input, shape index: {}]
  %s4 = inlined_call_operand.vmem [shape: f32[4,192,192], index: 4, kind: input, shape index: {}]
  %s5 = inlined_call_operand.vmem [shape: f32[4,12,6], index: 5, kind: input, shape index: {}]
  %s6 = inlined_call_operand.vmem [shape: f32[1,192], index: 6, kind: input, shape index: {}]
  %s7 = inlined_call_operand.vmem [shape: f32[4,192,192], index: 7, kind: input, shape index: {}]
  %s8 = inlined_call_operand.vmem [shape: f32[4,24,12], index: 8, kind: input, shape index: {}]
  %s9 = inlined_call_operand.vmem [shape: f32[1,192], index: 9, kind: input, shape index: {}]
  %s10 = inlined_call_operand.hbm [shape: f32[4,192,192], index: 10, kind: input, shape index: {}]
  %s11 = inlined_call_operand.vmem [shape: f32[4,48,24], index: 11, kind: input, shape index: {}]
  %s12 = inlined_call_operand.vmem [shape: f32[1,192], index: 12, kind: input, shape index: {}]
  %s13 = inlined_call_operand.vmem [shape: f32[4,192,144], index: 13, kind: input, shape index: {}]
  %s14 = inlined_call_operand.vmem [shape: f32[4,96,48], index: 14, kind: input, shape index: {}]
  %s15 = inlined_call_operand.vmem [shape: f32[1,144], index: 15, kind: input, shape index: {}]
  %s16 = inlined_call_operand.vmem [shape: f32[96,144], index: 16, kind: output, shape index: {}]
  %s17 = sld [smem:[#allocation0]]
  $region78: #{pybullet_decoder_forward.1} parent=0
    _
  %s19 = ssub.s32 1, %s17
  %s20 = scalar_select 0, %s19, %s17
  $region1: #{pybullet_decoder_forward.1} parent=0
    #allocation2 [shape = 'u8[786432]{0}', space=vmem, size = 0xc0000, scoped, tag = 'input window, operand 10, single buffered']
    #allocation3 [shape = 's32[1]{0}', space=sflag, size = 0x4, scoped, tag = 'scoped memory for pybullet_decoder_forward.1']
    %21 = vsyncpa [#allocation3], 0
    // Predicated region
    $region2: #{pybullet_decoder_forward.1} parent=1 // pred_check
      _
    $region3: #{pybullet_decoder_forward.1} parent=1 // pred_check_branch
      %23 = sbr.rel (0) target = $region5
    $region4: #{pybullet_decoder_forward.1} parent=1 // pred_region
      _
    $region5: #{pybullet_decoder_forward.1} parent=1 // pred_fallthru
      _
    // Predicated region
    $region6: #{pybullet_decoder_forward.1} parent=1 // pred_check
      _
    $region7: #{pybullet_decoder_forward.1} parent=1 // pred_check_branch
      %25 = sbr.rel (0) target = $region9
    $region8: #{pybullet_decoder_forward.1} parent=1 // pred_region
      _
    $region9: #{pybullet_decoder_forward.1} parent=1 // pred_fallthru
      _
    // Predicated region
    $region10: #{pybullet_decoder_forward.1} parent=1 // pred_check
      _
    $region11: #{pybullet_decoder_forward.1} parent=1 // pred_check_branch
      %27 = sbr.rel (0) target = $region13
    $region12: #{pybullet_decoder_forward.1} parent=1 // pred_region
      _
    $region13: #{pybullet_decoder_forward.1} parent=1 // pred_fallthru
      _
    // Predicated region
    $region14: #{pybullet_decoder_forward.1} parent=1 // pred_check
      _
    $region15: #{pybullet_decoder_forward.1} parent=1 // pred_check_branch
      %29 = sbr.rel (0) target = $region17
    $region16: #{pybullet_decoder_forward.1} parent=1 // pred_region
      _
    $region17: #{pybullet_decoder_forward.1} parent=1 // pred_fallthru
      _
    // Predicated region
    $region18: #{pybullet_decoder_forward.1} parent=1 // pred_check
      _
    $region19: #{pybullet_decoder_forward.1} parent=1 // pred_check_branch
      %31 = sbr.rel (0) target = $region21
    $region20: #{pybullet_decoder_forward.1} parent=1 // pred_region
      _
    $region21: #{pybullet_decoder_forward.1} parent=1 // pred_fallthru
      _
    // Predicated region
    $region22: #{pybullet_decoder_forward.1} parent=1 // pred_check
      _
    $region23: #{pybullet_decoder_forward.1} parent=1 // pred_check_branch
      %33 = sbr.rel (0) target = $region25
    $region24: #{pybullet_decoder_forward.1} parent=1 // pred_region
      _
    $region25: #{pybullet_decoder_forward.1} parent=1 // pred_fallthru
      _
    // Predicated region
    $region26: #{pybullet_decoder_forward.1} parent=1 // pred_check
      _
    $region27: #{pybullet_decoder_forward.1} parent=1 // pred_check_branch
      %35 = sbr.rel (0) target = $region29
    $region28: #{pybullet_decoder_forward.1} parent=1 // pred_region
      _
    $region29: #{pybullet_decoder_forward.1} parent=1 // pred_fallthru
      _
    // Predicated region
    $region30: #{pybullet_decoder_forward.1} parent=1 // pred_check
      _
    $region31: #{pybullet_decoder_forward.1} parent=1 // pred_check_branch
      %37 = sbr.rel (0) target = $region33
    $region32: #{pybullet_decoder_forward.1} parent=1 // pred_region
      _
    $region33: #{pybullet_decoder_forward.1} parent=1 // pred_fallthru
      _
    // Predicated region
    $region34: #{pybullet_decoder_forward.1} parent=1 // pred_check
      _
    $region35: #{pybullet_decoder_forward.1} parent=1 // pred_check_branch
      %39 = sbr.rel (0) target = $region37
    $region36: #{pybullet_decoder_forward.1} parent=1 // pred_region
      _
    $region37: #{pybullet_decoder_forward.1} parent=1 // pred_fallthru
      _
    // Predicated region
    $region38: #{pybullet_decoder_forward.1} parent=1 // pred_check
      _
    $region39: #{pybullet_decoder_forward.1} parent=1 // pred_check_branch
      %41 = sbr.rel (0) target = $region41
    $region40: #{pybullet_decoder_forward.1} parent=1 // pred_region
      _
    $region41: #{pybullet_decoder_forward.1} parent=1 // pred_fallthru
      _
    // Predicated region
    $region42: #{pybullet_decoder_forward.1} parent=1 // pred_check
      _
    $region43: #{pybullet_decoder_forward.1} parent=1 // pred_check_branch
      %43 = sbr.rel (0) target = $region45
    $region44: #{pybullet_decoder_forward.1} parent=1 // pred_region
      %s45 = ssub.s32 24576, 24576
      %46 = vsyncadd [#allocation3], %s45
      %s47 = sshll.u32 [#allocation2], 4
      %s48 = int_to_ptr.vmem [resolvable:$true] %s47
      %53 = dma.hbm_to_vmem [thread:$0]  %s10, 24576, %s48, [#allocation3], 256, 256, 16
    $region45: #{pybullet_decoder_forward.1} parent=1 // pred_fallthru
      _
    // Predicated region
    $region46: #{pybullet_decoder_forward.1} parent=1 // pred_check
      _
    $region47: #{pybullet_decoder_forward.1} parent=1 // pred_check_branch
      %55 = sbr.rel (0) target = $region49
    $region48: #{pybullet_decoder_forward.1} parent=1 // pred_region
      _
    $region49: #{pybullet_decoder_forward.1} parent=1 // pred_fallthru
      _
    // Predicated region
    $region50: #{pybullet_decoder_forward.1} parent=1 // pred_check
      _
    $region51: #{pybullet_decoder_forward.1} parent=1 // pred_check_branch
      %57 = sbr.rel (0) target = $region53
    $region52: #{pybullet_decoder_forward.1} parent=1 // pred_region
      _
    $region53: #{pybullet_decoder_forward.1} parent=1 // pred_fallthru
      _
    // Predicated region
    $region54: #{pybullet_decoder_forward.1} parent=1 // pred_check
      _
    $region55: #{pybullet_decoder_forward.1} parent=1 // pred_check_branch
      %59 = sbr.rel (0) target = $region57
    $region56: #{pybullet_decoder_forward.1} parent=1 // pred_region
      _
    $region57: #{pybullet_decoder_forward.1} parent=1 // pred_fallthru
      _
    // Predicated region
    $region58: #{pybullet_decoder_forward.1} parent=1 // pred_check
      _
    $region59: #{pybullet_decoder_forward.1} parent=1 // pred_check_branch
      %61 = sbr.rel (0) target = $region61
    $region60: #{pybullet_decoder_forward.1} parent=1 // pred_region
      _
    $region61: #{pybullet_decoder_forward.1} parent=1 // pred_fallthru
      _
    // Predicated region
    $region62: #{pybullet_decoder_forward.1} parent=1 // pred_check
      _
    $region63: #{pybullet_decoder_forward.1} parent=1 // pred_check_branch
      %63 = sbr.rel (0) target = $region65
    $region64: #{pybullet_decoder_forward.1} parent=1 // pred_region
      _
    $region65: #{pybullet_decoder_forward.1} parent=1 // pred_fallthru
      _
    // Predicated region
    $region66: #{pybullet_decoder_forward.1} parent=1 // pred_check
      _
    $region67: #{pybullet_decoder_forward.1} parent=1 // pred_check_branch
      %65 = sbr.rel (0) target = $region69
    $region68: #{pybullet_decoder_forward.1} parent=1 // pred_region
      %66 = dma.done [#allocation3], 24576
    $region69: #{pybullet_decoder_forward.1} parent=1 // pred_fallthru
      _
    %v67 = vld [vmem:[%s0] sm:$0x3]
    %v68 = vld [vmem:[%s1] sm:$0xff]
    %v69 = vld [vmem:[%s1 + $0x8] sm:$0xff]
    %v70 = vld [vmem:[%s1 + $0x10] sm:$0xff]
    %v71 = vld [vmem:[%s1 + $0x18] sm:$0xff]
    %vm72 = vcmask 130048
    %v74 = vsel %vm72, %v67, 0
    %76 = vmatprep.subr.mxu0 %v69
    %77 = vmatpush1.msra.mxu0 %v68
    %78 = vmatprep.subr.mxu0 %v71
    %79 = vmatpush1.msra.mxu0 %v70
    %80 = vmatprep.subr.mxu0 0.0
    %81 = vmatpush1.msra.mxu0 0.0
    %82 = vmatprep.subr.mxu0 0.0
    %83 = vmatpush1.msra.mxu0 0.0
    %84 = vmatprep.subr.mxu0 0.0
    %85 = vmatpush1.msra.mxu0 0.0
    %86 = vmatprep.subr.mxu0 0.0
    %87 = vmatpush1.msra.mxu0 0.0
    %88 = vmatprep.subr.mxu0 0.0
    %89 = vmatpush1.msra.mxu0 0.0
    %90 = vmatprep.subr.mxu0 0.0
    %91 = vmatpush1.msra.mxu0 0.0
    %92 = vmatprep.subr.mxu0 0.0
    %93 = vmatpush1.msra.mxu0 0.0
    %94 = vmatprep.subr.mxu0 0.0
    %95 = vmatpush1.msra.mxu0 0.0
    %96 = vmatprep.subr.mxu0 0.0
    %97 = vmatpush1.msra.mxu0 0.0
    %98 = vmatprep.subr.mxu0 0.0
    %99 = vmatpush1.msra.mxu0 0.0
    %100 = vmatprep.subr.mxu0 0.0
    %101 = vmatpush1.msra.mxu0 0.0
    %102 = vmatprep.subr.mxu0 0.0
    %103 = vmatpush1.msra.mxu0 0.0
    %104 = vmatprep.subr.mxu0 0.0
    %105 = vmatpush1.msra.mxu0 0.0
    %106 = vmatprep.subr.mxu0 0.0
    %107 = vmatpush1.msra.mxu0 0.0
    %108 = vmatprep.subr.mxu0 0.0
    %109 = vmatpush1.msra.mxu0 0.0
    %110 = vmatprep.subr.mxu0 0.0
    %111 = vmatpush1.msra.mxu0 0.0
    %112 = vmatprep.subr.mxu0 0.0
    %113 = vmatpush1.msra.mxu0 0.0
    %114 = vmatprep.subr.mxu0 0.0
    %115 = vmatpush1.msra.mxu0 0.0
    %116 = vmatprep.subr.mxu0 0.0
    %117 = vmatpush1.msra.mxu0 0.0
    %118 = vmatprep.subr.mxu0 0.0
    %119 = vmatpush1.msra.mxu0 0.0
    %120 = vmatprep.subr.mxu0 0.0
    %121 = vmatpush1.msra.mxu0 0.0
    %122 = vmatprep.subr.mxu0 0.0
    %123 = vmatpush1.msra.mxu0 0.0
    %124 = vmatprep.subr.mxu0 0.0
    %125 = vmatpush1.msra.mxu0 0.0
    %126 = vmatprep.subr.mxu0 0.0
    %127 = vmatpush1.msra.mxu0 0.0
    %128 = vmatprep.subr.mxu0 0.0
    %129 = vmatpush1.msra.mxu0 0.0
    %130 = vmatprep.subr.mxu0 0.0
    %131 = vmatpush1.msra.mxu0 0.0
    %132 = vmatprep.subr.mxu0 0.0
    %133 = vmatpush1.msra.mxu0 0.0
    %134 = vmatprep.subr.mxu0 0.0
    %135 = vmatpush1.msra.mxu0 0.0
    %136 = vmatprep.subr.mxu0 0.0
    %137 = vmatpush1.msra.mxu0 0.0
    %138 = vmatprep.subr.mxu0 0.0
    %139 = vmatpush1.msra.mxu0 0.0
    %140 = vmatprep.mubr.f32.mxu0 0.0
    %141 = vmatmul.mubr.f32.gmra.mrb[0].mxu0 %v74
    %v142 = vpop.f32.mrb[0].mxu0
    %v143 = vadd.f32 0.0, %v142
    %v144 = vpop.f32.mrb[0].mxu0
    %v145 = vadd.f32 0.0, %v144
    %146 = vdwg.mxu0
    %v147 = vld [vmem:[%s2] sm:$0x3f]
    %s148 = scalar_lea.vmem %s1, 32
    %v149 = vld [vmem:[%s148] sm:$0xff]
    %v150 = vld [vmem:[%s148 + $0x8] sm:$0xff]
    %v151 = vld [vmem:[%s148 + $0x10] sm:$0xff]
    %v152 = vld [vmem:[%s148 + $0x18] sm:$0xff]
    %153 = vmatprep.subr.mxu0 %v150
    %154 = vmatpush1.msra.mxu0 %v149
    %155 = vmatprep.subr.mxu0 %v152
    %156 = vmatpush1.msra.mxu0 %v151
    %157 = vmatprep.subr.mxu0 0.0
    %158 = vmatpush1.msra.mxu0 0.0
    %159 = vmatprep.subr.mxu0 0.0
    %160 = vmatpush1.msra.mxu0 0.0
    %161 = vmatprep.subr.mxu0 0.0
    %162 = vmatpush1.msra.mxu0 0.0
    %163 = vmatprep.subr.mxu0 0.0
    %164 = vmatpush1.msra.mxu0 0.0
    %165 = vmatprep.subr.mxu0 0.0
    %166 = vmatpush1.msra.mxu0 0.0
    %167 = vmatprep.subr.mxu0 0.0
    %168 = vmatpush1.msra.mxu0 0.0
    %169 = vmatprep.subr.mxu0 0.0
    %170 = vmatpush1.msra.mxu0 0.0
    %171 = vmatprep.subr.mxu0 0.0
    %172 = vmatpush1.msra.mxu0 0.0
    %173 = vmatprep.subr.mxu0 0.0
    %174 = vmatpush1.msra.mxu0 0.0
    %175 = vmatprep.subr.mxu0 0.0
    %176 = vmatpush1.msra.mxu0 0.0
    %177 = vmatprep.subr.mxu0 0.0
    %178 = vmatpush1.msra.mxu0 0.0
    %179 = vmatprep.subr.mxu0 0.0
    %180 = vmatpush1.msra.mxu0 0.0
    %181 = vmatprep.subr.mxu0 0.0
    %182 = vmatpush1.msra.mxu0 0.0
    %183 = vmatprep.subr.mxu0 0.0
    %184 = vmatpush1.msra.mxu0 0.0
    %185 = vmatprep.subr.mxu0 0.0
    %186 = vmatpush1.msra.mxu0 0.0
    %187 = vmatprep.subr.mxu0 0.0
    %188 = vmatpush1.msra.mxu0 0.0
    %189 = vmatprep.subr.mxu0 0.0
    %190 = vmatpush1.msra.mxu0 0.0
    %191 = vmatprep.subr.mxu0 0.0
    %192 = vmatpush1.msra.mxu0 0.0
    %193 = vmatprep.subr.mxu0 0.0
    %194 = vmatpush1.msra.mxu0 0.0
    %195 = vmatprep.subr.mxu0 0.0
    %196 = vmatpush1.msra.mxu0 0.0
    %197 = vmatprep.subr.mxu0 0.0
    %198 = vmatpush1.msra.mxu0 0.0
    %199 = vmatprep.subr.mxu0 0.0
    %200 = vmatpush1.msra.mxu0 0.0
    %201 = vmatprep.subr.mxu0 0.0
    %202 = vmatpush1.msra.mxu0 0.0
    %203 = vmatprep.subr.mxu0 0.0
    %204 = vmatpush1.msra.mxu0 0.0
    %205 = vmatprep.subr.mxu0 0.0
    %206 = vmatpush1.msra.mxu0 0.0
    %207 = vmatprep.subr.mxu0 0.0
    %208 = vmatpush1.msra.mxu0 0.0
    %209 = vmatprep.subr.mxu0 0.0
    %210 = vmatpush1.msra.mxu0 0.0
    %211 = vmatprep.subr.mxu0 0.0
    %212 = vmatpush1.msra.mxu0 0.0
    %213 = vmatprep.subr.mxu0 0.0
    %214 = vmatpush1.msra.mxu0 0.0
    %215 = vmatprep.subr.mxu0 0.0
    %216 = vmatpush1.msra.mxu0 0.0
    %217 = vmatprep.mubr.f32.mxu0 0.0
    %218 = vmatmul.mubr.f32.gmra.mrb[0].mxu0 %v74
    %v219 = vpop.f32.mrb[0].mxu0
    %v220 = vadd.f32 0.0, %v219
    %v221 = vpop.f32.mrb[0].mxu0
    %v222 = vadd.f32 0.0, %v221
    %223 = vdwg.mxu0
    %s224 = scalar_lea.vmem %s2, 8
    %v225 = vld [vmem:[%s224] sm:$0x3f]
    %vm226 = vcmask 15360
    %v228 = vsel %vm226, %v225, 0
    %vm230 = vcmask 1041408
    %v232 = vsel %vm230, %v220, 0
    %v235 = vsel %vm230, %v222, 0
    %237 = vmatprep.subr.mxu0 %v235
    %238 = vmatpush1.msra.mxu0 %v232
    %239 = vmatprep.subr.mxu0 0.0
    %240 = vmatpush1.msra.mxu0 0.0
    %241 = vmatprep.subr.mxu0 0.0
    %242 = vmatpush1.msra.mxu0 0.0
    %243 = vmatprep.subr.mxu0 0.0
    %244 = vmatpush1.msra.mxu0 0.0
    %245 = vmatprep.subr.mxu0 0.0
    %246 = vmatpush1.msra.mxu0 0.0
    %247 = vmatprep.subr.mxu0 0.0
    %248 = vmatpush1.msra.mxu0 0.0
    %249 = vmatprep.subr.mxu0 0.0
    %250 = vmatpush1.msra.mxu0 0.0
    %251 = vmatprep.subr.mxu0 0.0
    %252 = vmatpush1.msra.mxu0 0.0
    %253 = vmatprep.subr.mxu0 0.0
    %254 = vmatpush1.msra.mxu0 0.0
    %255 = vmatprep.subr.mxu0 0.0
    %256 = vmatpush1.msra.mxu0 0.0
    %257 = vmatprep.subr.mxu0 0.0
    %258 = vmatpush1.msra.mxu0 0.0
    %259 = vmatprep.subr.mxu0 0.0
    %260 = vmatpush1.msra.mxu0 0.0
    %261 = vmatprep.subr.mxu0 0.0
    %262 = vmatpush1.msra.mxu0 0.0
    %263 = vmatprep.subr.mxu0 0.0
    %264 = vmatpush1.msra.mxu0 0.0
    %265 = vmatprep.subr.mxu0 0.0
    %266 = vmatpush1.msra.mxu0 0.0
    %267 = vmatprep.subr.mxu0 0.0
    %268 = vmatpush1.msra.mxu0 0.0
    %269 = vmatprep.subr.mxu0 0.0
    %270 = vmatpush1.msra.mxu0 0.0
    %271 = vmatprep.subr.mxu0 0.0
    %272 = vmatpush1.msra.mxu0 0.0
    %273 = vmatprep.subr.mxu0 0.0
    %274 = vmatpush1.msra.mxu0 0.0
    %275 = vmatprep.subr.mxu0 0.0
    %276 = vmatpush1.msra.mxu0 0.0
    %277 = vmatprep.subr.mxu0 0.0
    %278 = vmatpush1.msra.mxu0 0.0
    %279 = vmatprep.subr.mxu0 0.0
    %280 = vmatpush1.msra.mxu0 0.0
    %281 = vmatprep.subr.mxu0 0.0
    %282 = vmatpush1.msra.mxu0 0.0
    %283 = vmatprep.subr.mxu0 0.0
    %284 = vmatpush1.msra.mxu0 0.0
    %285 = vmatprep.subr.mxu0 0.0
    %286 = vmatpush1.msra.mxu0 0.0
    %287 = vmatprep.subr.mxu0 0.0
    %288 = vmatpush1.msra.mxu0 0.0
    %289 = vmatprep.subr.mxu0 0.0
    %290 = vmatpush1.msra.mxu0 0.0
    %291 = vmatprep.subr.mxu0 0.0
    %292 = vmatpush1.msra.mxu0 0.0
    %293 = vmatprep.subr.mxu0 0.0
    %294 = vmatpush1.msra.mxu0 0.0
    %295 = vmatprep.subr.mxu0 0.0
    %296 = vmatpush1.msra.mxu0 0.0
    %297 = vmatprep.subr.mxu0 0.0
    %298 = vmatpush1.msra.mxu0 0.0
    %299 = vmatprep.subr.mxu0 0.0
    %300 = vmatpush1.msra.mxu0 0.0
    %301 = vmatprep.mubr.f32.mxu0 0.0
    %302 = vmatmul.mubr.f32.gmra.mrb[0].mxu0 %v228
    %v303 = vpop.f32.mrb[0].mxu0
    %v304 = vadd.f32 0.0, %v303
    %v305 = vpop.f32.mrb[0].mxu0
    %v306 = vadd.f32 0.0, %v305
    %307 = vdwg.mxu0
    %v309 = vsel %vm226, %v147, 0
    %v312 = vsel %vm230, %v143, 0
    %v315 = vsel %vm230, %v145, 0
    %317 = vmatprep.subr.mxu0 %v315
    %318 = vmatpush1.msra.mxu0 %v312
    %319 = vmatprep.subr.mxu0 0.0
    %320 = vmatpush1.msra.mxu0 0.0
    %321 = vmatprep.subr.mxu0 0.0
    %322 = vmatpush1.msra.mxu0 0.0
    %323 = vmatprep.subr.mxu0 0.0
    %324 = vmatpush1.msra.mxu0 0.0
    %325 = vmatprep.subr.mxu0 0.0
    %326 = vmatpush1.msra.mxu0 0.0
    %327 = vmatprep.subr.mxu0 0.0
    %328 = vmatpush1.msra.mxu0 0.0
    %329 = vmatprep.subr.mxu0 0.0
    %330 = vmatpush1.msra.mxu0 0.0
    %331 = vmatprep.subr.mxu0 0.0
    %332 = vmatpush1.msra.mxu0 0.0
    %333 = vmatprep.subr.mxu0 0.0
    %334 = vmatpush1.msra.mxu0 0.0
    %335 = vmatprep.subr.mxu0 0.0
    %336 = vmatpush1.msra.mxu0 0.0
    %337 = vmatprep.subr.mxu0 0.0
    %338 = vmatpush1.msra.mxu0 0.0
    %339 = vmatprep.subr.mxu0 0.0
    %340 = vmatpush1.msra.mxu0 0.0
    %341 = vmatprep.subr.mxu0 0.0
    %342 = vmatpush1.msra.mxu0 0.0
    %343 = vmatprep.subr.mxu0 0.0
    %344 = vmatpush1.msra.mxu0 0.0
    %345 = vmatprep.subr.mxu0 0.0
    %346 = vmatpush1.msra.mxu0 0.0
    %347 = vmatprep.subr.mxu0 0.0
    %348 = vmatpush1.msra.mxu0 0.0
    %349 = vmatprep.subr.mxu0 0.0
    %350 = vmatpush1.msra.mxu0 0.0
    %351 = vmatprep.subr.mxu0 0.0
    %352 = vmatpush1.msra.mxu0 0.0
    %353 = vmatprep.subr.mxu0 0.0
    %354 = vmatpush1.msra.mxu0 0.0
    %355 = vmatprep.subr.mxu0 0.0
    %356 = vmatpush1.msra.mxu0 0.0
    %357 = vmatprep.subr.mxu0 0.0
    %358 = vmatpush1.msra.mxu0 0.0
    %359 = vmatprep.subr.mxu0 0.0
    %360 = vmatpush1.msra.mxu0 0.0
    %361 = vmatprep.subr.mxu0 0.0
    %362 = vmatpush1.msra.mxu0 0.0
    %363 = vmatprep.subr.mxu0 0.0
    %364 = vmatpush1.msra.mxu0 0.0
    %365 = vmatprep.subr.mxu0 0.0
    %366 = vmatpush1.msra.mxu0 0.0
    %367 = vmatprep.subr.mxu0 0.0
    %368 = vmatpush1.msra.mxu0 0.0
    %369 = vmatprep.subr.mxu0 0.0
    %370 = vmatpush1.msra.mxu0 0.0
    %371 = vmatprep.subr.mxu0 0.0
    %372 = vmatpush1.msra.mxu0 0.0
    %373 = vmatprep.subr.mxu0 0.0
    %374 = vmatpush1.msra.mxu0 0.0
    %375 = vmatprep.subr.mxu0 0.0
    %376 = vmatpush1.msra.mxu0 0.0
    %377 = vmatprep.subr.mxu0 0.0
    %378 = vmatpush1.msra.mxu0 0.0
    %379 = vmatprep.subr.mxu0 0.0
    %380 = vmatpush1.msra.mxu0 0.0
    %381 = vmatprep.mubr.f32.mxu0 0.0
    %382 = vmatmul.mubr.f32.gmra.mrb[0].mxu0 %v309
    %v383 = vpop.f32.mrb[0].mxu0
    %v384 = vadd.f32 %v304, %v383
    %v385 = vpop.f32.mrb[0].mxu0
    %v386 = vadd.f32 %v306, %v385
    %387 = vdwg.mxu0
    %s388 = scalar_lea.vmem %s1, 64
    %v389 = vld [vmem:[%s388] sm:$0xff]
    %v390 = vld [vmem:[%s388 + $0x8] sm:$0xff]
    %v391 = vld [vmem:[%s388 + $0x10] sm:$0xff]
    %v392 = vld [vmem:[%s388 + $0x18] sm:$0xff]
    %393 = vmatprep.subr.mxu0 %v390
    %394 = vmatpush1.msra.mxu0 %v389
    %395 = vmatprep.subr.mxu0 %v392
    %396 = vmatpush1.msra.mxu0 %v391
    %397 = vmatprep.subr.mxu0 0.0
    %398 = vmatpush1.msra.mxu0 0.0
    %399 = vmatprep.subr.mxu0 0.0
    %400 = vmatpush1.msra.mxu0 0.0
    %401 = vmatprep.subr.mxu0 0.0
    %402 = vmatpush1.msra.mxu0 0.0
    %403 = vmatprep.subr.mxu0 0.0
    %404 = vmatpush1.msra.mxu0 0.0
    %405 = vmatprep.subr.mxu0 0.0
    %406 = vmatpush1.msra.mxu0 0.0
    %407 = vmatprep.subr.mxu0 0.0
    %408 = vmatpush1.msra.mxu0 0.0
    %409 = vmatprep.subr.mxu0 0.0
    %410 = vmatpush1.msra.mxu0 0.0
    %411 = vmatprep.subr.mxu0 0.0
    %412 = vmatpush1.msra.mxu0 0.0
    %413 = vmatprep.subr.mxu0 0.0
    %414 = vmatpush1.msra.mxu0 0.0
    %415 = vmatprep.subr.mxu0 0.0
    %416 = vmatpush1.msra.mxu0 0.0
    %417 = vmatprep.subr.mxu0 0.0
    %418 = vmatpush1.msra.mxu0 0.0
    %419 = vmatprep.subr.mxu0 0.0
    %420 = vmatpush1.msra.mxu0 0.0
    %421 = vmatprep.subr.mxu0 0.0
    %422 = vmatpush1.msra.mxu0 0.0
    %423 = vmatprep.subr.mxu0 0.0
    %424 = vmatpush1.msra.mxu0 0.0
    %425 = vmatprep.subr.mxu0 0.0
    %426 = vmatpush1.msra.mxu0 0.0
    %427 = vmatprep.subr.mxu0 0.0
    %428 = vmatpush1.msra.mxu0 0.0
    %429 = vmatprep.subr.mxu0 0.0
    %430 = vmatpush1.msra.mxu0 0.0
    %431 = vmatprep.subr.mxu0 0.0
    %432 = vmatpush1.msra.mxu0 0.0
    %433 = vmatprep.subr.mxu0 0.0
    %434 = vmatpush1.msra.mxu0 0.0
    %435 = vmatprep.subr.mxu0 0.0
    %436 = vmatpush1.msra.mxu0 0.0
    %437 = vmatprep.subr.mxu0 0.0
    %438 = vmatpush1.msra.mxu0 0.0
    %439 = vmatprep.subr.mxu0 0.0
    %440 = vmatpush1.msra.mxu0 0.0
    %441 = vmatprep.subr.mxu0 0.0
    %442 = vmatpush1.msra.mxu0 0.0
    %443 = vmatprep.subr.mxu0 0.0
    %444 = vmatpush1.msra.mxu0 0.0
    %445 = vmatprep.subr.mxu0 0.0
    %446 = vmatpush1.msra.mxu0 0.0
    %447 = vmatprep.subr.mxu0 0.0
    %448 = vmatpush1.msra.mxu0 0.0
    %449 = vmatprep.subr.mxu0 0.0
    %450 = vmatpush1.msra.mxu0 0.0
    %451 = vmatprep.subr.mxu0 0.0
    %452 = vmatpush1.msra.mxu0 0.0
    %453 = vmatprep.subr.mxu0 0.0
    %454 = vmatpush1.msra.mxu0 0.0
    %455 = vmatprep.subr.mxu0 0.0
    %456 = vmatpush1.msra.mxu0 0.0
    %457 = vmatprep.mubr.f32.mxu0 0.0
    %458 = vmatmul.mubr.f32.gmra.mrb[0].mxu0 %v74
    %v459 = vpop.f32.mrb[0].mxu0
    %v460 = vadd.f32 0.0, %v459
    %v461 = vpop.f32.mrb[0].mxu0
    %v462 = vadd.f32 0.0, %v461
    %463 = vdwg.mxu0
    %s464 = scalar_lea.vmem %s2, 16
    %v465 = vld [vmem:[%s464] sm:$0x3f]
    %v467 = vsel %vm226, %v465, 0
    %v470 = vsel %vm230, %v460, 0
    %v473 = vsel %vm230, %v462, 0
    %475 = vmatprep.subr.mxu0 %v473
    %476 = vmatpush1.msra.mxu0 %v470
    %477 = vmatprep.subr.mxu0 0.0
    %478 = vmatpush1.msra.mxu0 0.0
    %479 = vmatprep.subr.mxu0 0.0
    %480 = vmatpush1.msra.mxu0 0.0
    %481 = vmatprep.subr.mxu0 0.0
    %482 = vmatpush1.msra.mxu0 0.0
    %483 = vmatprep.subr.mxu0 0.0
    %484 = vmatpush1.msra.mxu0 0.0
    %485 = vmatprep.subr.mxu0 0.0
    %486 = vmatpush1.msra.mxu0 0.0
    %487 = vmatprep.subr.mxu0 0.0
    %488 = vmatpush1.msra.mxu0 0.0
    %489 = vmatprep.subr.mxu0 0.0
    %490 = vmatpush1.msra.mxu0 0.0
    %491 = vmatprep.subr.mxu0 0.0
    %492 = vmatpush1.msra.mxu0 0.0
    %493 = vmatprep.subr.mxu0 0.0
    %494 = vmatpush1.msra.mxu0 0.0
    %495 = vmatprep.subr.mxu0 0.0
    %496 = vmatpush1.msra.mxu0 0.0
    %497 = vmatprep.subr.mxu0 0.0
    %498 = vmatpush1.msra.mxu0 0.0
    %499 = vmatprep.subr.mxu0 0.0
    %500 = vmatpush1.msra.mxu0 0.0
    %501 = vmatprep.subr.mxu0 0.0
    %502 = vmatpush1.msra.mxu0 0.0
    %503 = vmatprep.subr.mxu0 0.0
    %504 = vmatpush1.msra.mxu0 0.0
    %505 = vmatprep.subr.mxu0 0.0
    %506 = vmatpush1.msra.mxu0 0.0
    %507 = vmatprep.subr.mxu0 0.0
    %508 = vmatpush1.msra.mxu0 0.0
    %509 = vmatprep.subr.mxu0 0.0
    %510 = vmatpush1.msra.mxu0 0.0
    %511 = vmatprep.subr.mxu0 0.0
    %512 = vmatpush1.msra.mxu0 0.0
    %513 = vmatprep.subr.mxu0 0.0
    %514 = vmatpush1.msra.mxu0 0.0
    %515 = vmatprep.subr.mxu0 0.0
    %516 = vmatpush1.msra.mxu0 0.0
    %517 = vmatprep.subr.mxu0 0.0
    %518 = vmatpush1.msra.mxu0 0.0
    %519 = vmatprep.subr.mxu0 0.0
    %520 = vmatpush1.msra.mxu0 0.0
    %521 = vmatprep.subr.mxu0 0.0
    %522 = vmatpush1.msra.mxu0 0.0
    %523 = vmatprep.subr.mxu0 0.0
    %524 = vmatpush1.msra.mxu0 0.0
    %525 = vmatprep.subr.mxu0 0.0
    %526 = vmatpush1.msra.mxu0 0.0
    %527 = vmatprep.subr.mxu0 0.0
    %528 = vmatpush1.msra.mxu0 0.0
    %529 = vmatprep.subr.mxu0 0.0
    %530 = vmatpush1.msra.mxu0 0.0
    %531 = vmatprep.subr.mxu0 0.0
    %532 = vmatpush1.msra.mxu0 0.0
    %533 = vmatprep.subr.mxu0 0.0
    %534 = vmatpush1.msra.mxu0 0.0
    %535 = vmatprep.subr.mxu0 0.0
    %536 = vmatpush1.msra.mxu0 0.0
    %537 = vmatprep.subr.mxu0 0.0
    %538 = vmatpush1.msra.mxu0 0.0
    %539 = vmatprep.mubr.f32.mxu0 0.0
    %540 = vmatmul.mubr.f32.gmra.mrb[0].mxu0 %v467
    %v541 = vpop.f32.mrb[0].mxu0
    %v542 = vadd.f32 0.0, %v541
    %v543 = vpop.f32.mrb[0].mxu0
    %v544 = vadd.f32 0.0, %v543
    %545 = vdwg.mxu0
    %v546 = vadd.f32 %v384, %v542
    %v547 = vadd.f32 %v386, %v544
    %v548 = vld [vmem:[%s3] sm:$0x3]
    %v550 = vlaneseq
    %v551 = vshrl.u32 %v550, 7
    %v552 = vsub.s32 0, %v551
    %v553 = vrot.slane %v548, %v552
    %v554 = vlaneseq
    %v555 = vshrl.u32 %v554, 7
    %v556 = vsub.s32 1, %v555
    %v557 = vrot.slane %v548, %v556
    %v560 = vadd.f32 %v546, %v553
    %v561 = vadd.f32 %v547, %v557
    %v562 = vmax.f32 %v560, 0.0
    %v563 = vmax.f32 %v561, 0.0
    %v564 = vld [vmem:[%s4] sm:$0xff]
    %v565 = vld [vmem:[%s4 + $0x8] sm:$0xff]
    %v566 = vld [vmem:[%s4 + $0x10] sm:$0xff]
    %v567 = vld [vmem:[%s4 + $0x18] sm:$0xff]
    %v568 = vld [vmem:[%s4 + $0x20] sm:$0xff]
    %v569 = vld [vmem:[%s4 + $0x28] sm:$0xff]
    %v570 = vld [vmem:[%s4 + $0x30] sm:$0xff]
    %v571 = vld [vmem:[%s4 + $0x38] sm:$0xff]
    %v572 = vld [vmem:[%s4 + $0x40] sm:$0xff]
    %v573 = vld [vmem:[%s4 + $0x48] sm:$0xff]
    %v574 = vld [vmem:[%s4 + $0x50] sm:$0xff]
    %v575 = vld [vmem:[%s4 + $0x58] sm:$0xff]
    %v576 = vld [vmem:[%s4 + $0x60] sm:$0xff]
    %v577 = vld [vmem:[%s4 + $0x68] sm:$0xff]
    %v578 = vld [vmem:[%s4 + $0x70] sm:$0xff]
    %v579 = vld [vmem:[%s4 + $0x78] sm:$0xff]
    %v580 = vld [vmem:[%s4 + $0x80] sm:$0xff]
    %v581 = vld [vmem:[%s4 + $0x88] sm:$0xff]
    %v582 = vld [vmem:[%s4 + $0x90] sm:$0xff]
    %v583 = vld [vmem:[%s4 + $0x98] sm:$0xff]
    %v584 = vld [vmem:[%s4 + $0xa0] sm:$0xff]
    %v585 = vld [vmem:[%s4 + $0xa8] sm:$0xff]
    %v586 = vld [vmem:[%s4 + $0xb0] sm:$0xff]
    %v587 = vld [vmem:[%s4 + $0xb8] sm:$0xff]
    %v588 = vld [vmem:[%s4 + $0xc0] sm:$0xff]
    %v589 = vld [vmem:[%s4 + $0xc8] sm:$0xff]
    %v590 = vld [vmem:[%s4 + $0xd0] sm:$0xff]
    %v591 = vld [vmem:[%s4 + $0xd8] sm:$0xff]
    %v592 = vld [vmem:[%s4 + $0xe0] sm:$0xff]
    %v593 = vld [vmem:[%s4 + $0xe8] sm:$0xff]
    %v594 = vld [vmem:[%s4 + $0xf0] sm:$0xff]
    %v595 = vld [vmem:[%s4 + $0xf8] sm:$0xff]
    %v596 = vld [vmem:[%s4 + $0x100] sm:$0xff]
    %v597 = vld [vmem:[%s4 + $0x108] sm:$0xff]
    %v598 = vld [vmem:[%s4 + $0x110] sm:$0xff]
    %v599 = vld [vmem:[%s4 + $0x118] sm:$0xff]
    %v600 = vld [vmem:[%s4 + $0x120] sm:$0xff]
    %v601 = vld [vmem:[%s4 + $0x128] sm:$0xff]
    %v602 = vld [vmem:[%s4 + $0x130] sm:$0xff]
    %v603 = vld [vmem:[%s4 + $0x138] sm:$0xff]
    %v604 = vld [vmem:[%s4 + $0x140] sm:$0xff]
    %v605 = vld [vmem:[%s4 + $0x148] sm:$0xff]
    %v606 = vld [vmem:[%s4 + $0x150] sm:$0xff]
    %v607 = vld [vmem:[%s4 + $0x158] sm:$0xff]
    %v608 = vld [vmem:[%s4 + $0x160] sm:$0xff]
    %v609 = vld [vmem:[%s4 + $0x168] sm:$0xff]
    %v610 = vld [vmem:[%s4 + $0x170] sm:$0xff]
    %v611 = vld [vmem:[%s4 + $0x178] sm:$0xff]
    %vm612 = vcmask 523264
    %v614 = vsel %vm612, %v563, 0
    %616 = vmatprep.subr.mxu0 %v565
    %617 = vmatpush1.msra.mxu0 %v564
    %618 = vmatprep.subr.mxu0 %v567
    %619 = vmatpush1.msra.mxu0 %v566
    %620 = vmatprep.subr.mxu0 %v569
    %621 = vmatpush1.msra.mxu0 %v568
    %622 = vmatprep.subr.mxu0 %v571
    %623 = vmatpush1.msra.mxu0 %v570
    %624 = vmatprep.subr.mxu0 %v573
    %625 = vmatpush1.msra.mxu0 %v572
    %626 = vmatprep.subr.mxu0 %v575
    %627 = vmatpush1.msra.mxu0 %v574
    %628 = vmatprep.subr.mxu0 %v577
    %629 = vmatpush1.msra.mxu0 %v576
    %630 = vmatprep.subr.mxu0 %v579
    %631 = vmatpush1.msra.mxu0 %v578
    %632 = vmatprep.subr.mxu0 %v581
    %633 = vmatpush1.msra.mxu0 %v580
    %634 = vmatprep.subr.mxu0 %v583
    %635 = vmatpush1.msra.mxu0 %v582
    %636 = vmatprep.subr.mxu0 %v585
    %637 = vmatpush1.msra.mxu0 %v584
    %638 = vmatprep.subr.mxu0 %v587
    %639 = vmatpush1.msra.mxu0 %v586
    %640 = vmatprep.subr.mxu0 %v589
    %641 = vmatpush1.msra.mxu0 %v588
    %642 = vmatprep.subr.mxu0 %v591
    %643 = vmatpush1.msra.mxu0 %v590
    %644 = vmatprep.subr.mxu0 %v593
    %645 = vmatpush1.msra.mxu0 %v592
    %646 = vmatprep.subr.mxu0 %v595
    %647 = vmatpush1.msra.mxu0 %v594
    %648 = vmatprep.subr.mxu0 %v597
    %649 = vmatpush1.msra.mxu0 %v596
    %650 = vmatprep.subr.mxu0 %v599
    %651 = vmatpush1.msra.mxu0 %v598
    %652 = vmatprep.subr.mxu0 %v601
    %653 = vmatpush1.msra.mxu0 %v600
    %654 = vmatprep.subr.mxu0 %v603
    %655 = vmatpush1.msra.mxu0 %v602
    %656 = vmatprep.subr.mxu0 %v605
    %657 = vmatpush1.msra.mxu0 %v604
    %658 = vmatprep.subr.mxu0 %v607
    %659 = vmatpush1.msra.mxu0 %v606
    %660 = vmatprep.subr.mxu0 %v609
    %661 = vmatpush1.msra.mxu0 %v608
    %662 = vmatprep.subr.mxu0 %v611
    %663 = vmatpush1.msra.mxu0 %v610
    %664 = vmatprep.subr.mxu0 0.0
    %665 = vmatpush1.msra.mxu0 0.0
    %666 = vmatprep.subr.mxu0 0.0
    %667 = vmatpush1.msra.mxu0 0.0
    %668 = vmatprep.subr.mxu0 0.0
    %669 = vmatpush1.msra.mxu0 0.0
    %670 = vmatprep.subr.mxu0 0.0
    %671 = vmatpush1.msra.mxu0 0.0
    %672 = vmatprep.subr.mxu0 0.0
    %673 = vmatpush1.msra.mxu0 0.0
    %674 = vmatprep.subr.mxu0 0.0
    %675 = vmatpush1.msra.mxu0 0.0
    %676 = vmatprep.subr.mxu0 0.0
    %677 = vmatpush1.msra.mxu0 0.0
    %678 = vmatprep.subr.mxu0 0.0
    %679 = vmatpush1.msra.mxu0 0.0
    %680 = vmatprep.mubr.f32.mxu0 %v614
    %681 = vmatmul.mubr.f32.gmra.mrb[0].mxu0 %v562
    %v682 = vpop.f32.mrb[0].mxu0
    %v683 = vadd.f32 0.0, %v682
    %v684 = vpop.f32.mrb[0].mxu0
    %v685 = vadd.f32 0.0, %v684
    %686 = vdwg.mxu0
    %v687 = vld [vmem:[%s5] sm:$0xff]
    %v688 = vld [vmem:[%s5 + $0x8] sm:$0xf]
    %s689 = scalar_lea.vmem %s4, 384
    %v690 = vld [vmem:[%s689] sm:$0xff]
    %v691 = vld [vmem:[%s689 + $0x8] sm:$0xff]
    %v692 = vld [vmem:[%s689 + $0x10] sm:$0xff]
    %v693 = vld [vmem:[%s689 + $0x18] sm:$0xff]
    %v694 = vld [vmem:[%s689 + $0x20] sm:$0xff]
    %v695 = vld [vmem:[%s689 + $0x28] sm:$0xff]
    %v696 = vld [vmem:[%s689 + $0x30] sm:$0xff]
    %v697 = vld [vmem:[%s689 + $0x38] sm:$0xff]
    %v698 = vld [vmem:[%s689 + $0x40] sm:$0xff]
    %v699 = vld [vmem:[%s689 + $0x48] sm:$0xff]
    %v700 = vld [vmem:[%s689 + $0x50] sm:$0xff]
    %v701 = vld [vmem:[%s689 + $0x58] sm:$0xff]
    %v702 = vld [vmem:[%s689 + $0x60] sm:$0xff]
    %v703 = vld [vmem:[%s689 + $0x68] sm:$0xff]
    %v704 = vld [vmem:[%s689 + $0x70] sm:$0xff]
    %v705 = vld [vmem:[%s689 + $0x78] sm:$0xff]
    %v706 = vld [vmem:[%s689 + $0x80] sm:$0xff]
    %v707 = vld [vmem:[%s689 + $0x88] sm:$0xff]
    %v708 = vld [vmem:[%s689 + $0x90] sm:$0xff]
    %v709 = vld [vmem:[%s689 + $0x98] sm:$0xff]
    %v710 = vld [vmem:[%s689 + $0xa0] sm:$0xff]
    %v711 = vld [vmem:[%s689 + $0xa8] sm:$0xff]
    %v712 = vld [vmem:[%s689 + $0xb0] sm:$0xff]
    %v713 = vld [vmem:[%s689 + $0xb8] sm:$0xff]
    %v714 = vld [vmem:[%s689 + $0xc0] sm:$0xff]
    %v715 = vld [vmem:[%s689 + $0xc8] sm:$0xff]
    %v716 = vld [vmem:[%s689 + $0xd0] sm:$0xff]
    %v717 = vld [vmem:[%s689 + $0xd8] sm:$0xff]
    %v718 = vld [vmem:[%s689 + $0xe0] sm:$0xff]
    %v719 = vld [vmem:[%s689 + $0xe8] sm:$0xff]
    %v720 = vld [vmem:[%s689 + $0xf0] sm:$0xff]
    %v721 = vld [vmem:[%s689 + $0xf8] sm:$0xff]
    %v722 = vld [vmem:[%s689 + $0x100] sm:$0xff]
    %v723 = vld [vmem:[%s689 + $0x108] sm:$0xff]
    %v724 = vld [vmem:[%s689 + $0x110] sm:$0xff]
    %v725 = vld [vmem:[%s689 + $0x118] sm:$0xff]
    %v726 = vld [vmem:[%s689 + $0x120] sm:$0xff]
    %v727 = vld [vmem:[%s689 + $0x128] sm:$0xff]
    %v728 = vld [vmem:[%s689 + $0x130] sm:$0xff]
    %v729 = vld [vmem:[%s689 + $0x138] sm:$0xff]
    %v730 = vld [vmem:[%s689 + $0x140] sm:$0xff]
    %v731 = vld [vmem:[%s689 + $0x148] sm:$0xff]
    %v732 = vld [vmem:[%s689 + $0x150] sm:$0xff]
    %v733 = vld [vmem:[%s689 + $0x158] sm:$0xff]
    %v734 = vld [vmem:[%s689 + $0x160] sm:$0xff]
    %v735 = vld [vmem:[%s689 + $0x168] sm:$0xff]
    %v736 = vld [vmem:[%s689 + $0x170] sm:$0xff]
    %v737 = vld [vmem:[%s689 + $0x178] sm:$0xff]
    %738 = vmatprep.subr.mxu0 %v691
    %739 = vmatpush1.msra.mxu0 %v690
    %740 = vmatprep.subr.mxu0 %v693
    %741 = vmatpush1.msra.mxu0 %v692
    %742 = vmatprep.subr.mxu0 %v695
    %743 = vmatpush1.msra.mxu0 %v694
    %744 = vmatprep.subr.mxu0 %v697
    %745 = vmatpush1.msra.mxu0 %v696
    %746 = vmatprep.subr.mxu0 %v699
    %747 = vmatpush1.msra.mxu0 %v698
    %748 = vmatprep.subr.mxu0 %v701
    %749 = vmatpush1.msra.mxu0 %v700
    %750 = vmatprep.subr.mxu0 %v703
    %751 = vmatpush1.msra.mxu0 %v702
    %752 = vmatprep.subr.mxu0 %v705
    %753 = vmatpush1.msra.mxu0 %v704
    %754 = vmatprep.subr.mxu0 %v707
    %755 = vmatpush1.msra.mxu0 %v706
    %756 = vmatprep.subr.mxu0 %v709
    %757 = vmatpush1.msra.mxu0 %v708
    %758 = vmatprep.subr.mxu0 %v711
    %759 = vmatpush1.msra.mxu0 %v710
    %760 = vmatprep.subr.mxu0 %v713
    %761 = vmatpush1.msra.mxu0 %v712
    %762 = vmatprep.subr.mxu0 %v715
    %763 = vmatpush1.msra.mxu0 %v714
    %764 = vmatprep.subr.mxu0 %v717
    %765 = vmatpush1.msra.mxu0 %v716
    %766 = vmatprep.subr.mxu0 %v719
    %767 = vmatpush1.msra.mxu0 %v718
    %768 = vmatprep.subr.mxu0 %v721
    %769 = vmatpush1.msra.mxu0 %v720
    %770 = vmatprep.subr.mxu0 %v723
    %771 = vmatpush1.msra.mxu0 %v722
    %772 = vmatprep.subr.mxu0 %v725
    %773 = vmatpush1.msra.mxu0 %v724
    %774 = vmatprep.subr.mxu0 %v727
    %775 = vmatpush1.msra.mxu0 %v726
    %776 = vmatprep.subr.mxu0 %v729
    %777 = vmatpush1.msra.mxu0 %v728
    %778 = vmatprep.subr.mxu0 %v731
    %779 = vmatpush1.msra.mxu0 %v730
    %780 = vmatprep.subr.mxu0 %v733
    %781 = vmatpush1.msra.mxu0 %v732
    %782 = vmatprep.subr.mxu0 %v735
    %783 = vmatpush1.msra.mxu0 %v734
    %784 = vmatprep.subr.mxu0 %v737
    %785 = vmatpush1.msra.mxu0 %v736
    %786 = vmatprep.subr.mxu0 0.0
    %787 = vmatpush1.msra.mxu0 0.0
    %788 = vmatprep.subr.mxu0 0.0
    %789 = vmatpush1.msra.mxu0 0.0
    %790 = vmatprep.subr.mxu0 0.0
    %791 = vmatpush1.msra.mxu0 0.0
    %792 = vmatprep.subr.mxu0 0.0
    %793 = vmatpush1.msra.mxu0 0.0
    %794 = vmatprep.subr.mxu0 0.0
    %795 = vmatpush1.msra.mxu0 0.0
    %796 = vmatprep.subr.mxu0 0.0
    %797 = vmatpush1.msra.mxu0 0.0
    %798 = vmatprep.subr.mxu0 0.0
    %799 = vmatpush1.msra.mxu0 0.0
    %800 = vmatprep.subr.mxu0 0.0
    %801 = vmatpush1.msra.mxu0 0.0
    %802 = vmatprep.mubr.f32.mxu0 %v614
    %803 = vmatmul.mubr.f32.gmra.mrb[0].mxu0 %v562
    %v804 = vpop.f32.mrb[0].mxu0
    %v805 = vadd.f32 0.0, %v804
    %v806 = vpop.f32.mrb[0].mxu0
    %v807 = vadd.f32 0.0, %v806
    %808 = vdwg.mxu0
    %s809 = scalar_lea.vmem %s5, 16
    %v810 = vld [vmem:[%s809] sm:$0xff]
    %v811 = vld [vmem:[%s809 + $0x8] sm:$0xf]
    %vm812 = vcmask 48128
    %v814 = vsel %vm812, %v810, 0
    %v817 = vsel %vm812, %v811, 0
    %vm819 = vcmask 1045504
    %v821 = vsel %vm819, %v805, 0
    %v824 = vsel %vm819, %v807, 0
    %826 = vmatprep.subr.mxu0 %v824
    %827 = vmatpush1.msra.mxu0 %v821
    %828 = vmatprep.subr.mxu0 0.0
    %829 = vmatpush1.msra.mxu0 0.0
    %830 = vmatprep.subr.mxu0 0.0
    %831 = vmatpush1.msra.mxu0 0.0
    %832 = vmatprep.subr.mxu0 0.0
    %833 = vmatpush1.msra.mxu0 0.0
    %834 = vmatprep.subr.mxu0 0.0
    %835 = vmatpush1.msra.mxu0 0.0
    %836 = vmatprep.subr.mxu0 0.0
    %837 = vmatpush1.msra.mxu0 0.0
    %838 = vmatprep.subr.mxu0 0.0
    %839 = vmatpush1.msra.mxu0 0.0
    %840 = vmatprep.subr.mxu0 0.0
    %841 = vmatpush1.msra.mxu0 0.0
    %842 = vmatprep.subr.mxu0 0.0
    %843 = vmatpush1.msra.mxu0 0.0
    %844 = vmatprep.subr.mxu0 0.0
    %845 = vmatpush1.msra.mxu0 0.0
    %846 = vmatprep.subr.mxu0 0.0
    %847 = vmatpush1.msra.mxu0 0.0
    %848 = vmatprep.subr.mxu0 0.0
    %849 = vmatpush1.msra.mxu0 0.0
    %850 = vmatprep.subr.mxu0 0.0
    %851 = vmatpush1.msra.mxu0 0.0
    %852 = vmatprep.subr.mxu0 0.0
    %853 = vmatpush1.msra.mxu0 0.0
    %854 = vmatprep.subr.mxu0 0.0
    %855 = vmatpush1.msra.mxu0 0.0
    %856 = vmatprep.subr.mxu0 0.0
    %857 = vmatpush1.msra.mxu0 0.0
    %858 = vmatprep.subr.mxu0 0.0
    %859 = vmatpush1.msra.mxu0 0.0
    %860 = vmatprep.subr.mxu0 0.0
    %861 = vmatpush1.msra.mxu0 0.0
    %862 = vmatprep.subr.mxu0 0.0
    %863 = vmatpush1.msra.mxu0 0.0
    %864 = vmatprep.subr.mxu0 0.0
    %865 = vmatpush1.msra.mxu0 0.0
    %866 = vmatprep.subr.mxu0 0.0
    %867 = vmatpush1.msra.mxu0 0.0
    %868 = vmatprep.subr.mxu0 0.0
    %869 = vmatpush1.msra.mxu0 0.0
    %870 = vmatprep.subr.mxu0 0.0
    %871 = vmatpush1.msra.mxu0 0.0
    %872 = vmatprep.subr.mxu0 0.0
    %873 = vmatpush1.msra.mxu0 0.0
    %874 = vmatprep.subr.mxu0 0.0
    %875 = vmatpush1.msra.mxu0 0.0
    %876 = vmatprep.subr.mxu0 0.0
    %877 = vmatpush1.msra.mxu0 0.0
    %878 = vmatprep.subr.mxu0 0.0
    %879 = vmatpush1.msra.mxu0 0.0
    %880 = vmatprep.subr.mxu0 0.0
    %881 = vmatpush1.msra.mxu0 0.0
    %882 = vmatprep.subr.mxu0 0.0
    %883 = vmatpush1.msra.mxu0 0.0
    %884 = vmatprep.subr.mxu0 0.0
    %885 = vmatpush1.msra.mxu0 0.0
    %886 = vmatprep.subr.mxu0 0.0
    %887 = vmatpush1.msra.mxu0 0.0
    %888 = vmatprep.subr.mxu0 0.0
    %889 = vmatpush1.msra.mxu0 0.0
    %890 = vmatprep.mubr.f32.mxu0 0.0
    %891 = vmatmul.mubr.f32.gmra.mrb[0].mxu0 %v814
    %v892 = vpop.f32.mrb[0].mxu0
    %v893 = vadd.f32 0.0, %v892
    %v894 = vpop.f32.mrb[0].mxu0
    %v895 = vadd.f32 0.0, %v894
    %896 = vmatprep.mubr.f32.mxu0 0.0
    %897 = vmatmul.mubr.f32.gmra.mrb[0].mxu0 %v817
    %v898 = vpop.f32.mrb[0].mxu0
    %v899 = vadd.f32 0.0, %v898
    %v900 = vpop.f32.mrb[0].mxu0
    %v901 = vadd.f32 0.0, %v900
    %902 = vdwg.mxu0
    %v904 = vsel %vm812, %v687, 0
    %v907 = vsel %vm812, %v688, 0
    %v910 = vsel %vm819, %v683, 0
    %v913 = vsel %vm819, %v685, 0
    %915 = vmatprep.subr.mxu0 %v913
    %916 = vmatpush1.msra.mxu0 %v910
    %917 = vmatprep.subr.mxu0 0.0
    %918 = vmatpush1.msra.mxu0 0.0
    %919 = vmatprep.subr.mxu0 0.0
    %920 = vmatpush1.msra.mxu0 0.0
    %921 = vmatprep.subr.mxu0 0.0
    %922 = vmatpush1.msra.mxu0 0.0
    %923 = vmatprep.subr.mxu0 0.0
    %924 = vmatpush1.msra.mxu0 0.0
    %925 = vmatprep.subr.mxu0 0.0
    %926 = vmatpush1.msra.mxu0 0.0
    %927 = vmatprep.subr.mxu0 0.0
    %928 = vmatpush1.msra.mxu0 0.0
    %929 = vmatprep.subr.mxu0 0.0
    %930 = vmatpush1.msra.mxu0 0.0
    %931 = vmatprep.subr.mxu0 0.0
    %932 = vmatpush1.msra.mxu0 0.0
    %933 = vmatprep.subr.mxu0 0.0
    %934 = vmatpush1.msra.mxu0 0.0
    %935 = vmatprep.subr.mxu0 0.0
    %936 = vmatpush1.msra.mxu0 0.0
    %937 = vmatprep.subr.mxu0 0.0
    %938 = vmatpush1.msra.mxu0 0.0
    %939 = vmatprep.subr.mxu0 0.0
    %940 = vmatpush1.msra.mxu0 0.0
    %941 = vmatprep.subr.mxu0 0.0
    %942 = vmatpush1.msra.mxu0 0.0
    %943 = vmatprep.subr.mxu0 0.0
    %944 = vmatpush1.msra.mxu0 0.0
    %945 = vmatprep.subr.mxu0 0.0
    %946 = vmatpush1.msra.mxu0 0.0
    %947 = vmatprep.subr.mxu0 0.0
    %948 = vmatpush1.msra.mxu0 0.0
    %949 = vmatprep.subr.mxu0 0.0
    %950 = vmatpush1.msra.mxu0 0.0
    %951 = vmatprep.subr.mxu0 0.0
    %952 = vmatpush1.msra.mxu0 0.0
    %953 = vmatprep.subr.mxu0 0.0
    %954 = vmatpush1.msra.mxu0 0.0
    %955 = vmatprep.subr.mxu0 0.0
    %956 = vmatpush1.msra.mxu0 0.0
    %957 = vmatprep.subr.mxu0 0.0
    %958 = vmatpush1.msra.mxu0 0.0
    %959 = vmatprep.subr.mxu0 0.0
    %960 = vmatpush1.msra.mxu0 0.0
    %961 = vmatprep.subr.mxu0 0.0
    %962 = vmatpush1.msra.mxu0 0.0
    %963 = vmatprep.subr.mxu0 0.0
    %964 = vmatpush1.msra.mxu0 0.0
    %965 = vmatprep.subr.mxu0 0.0
    %966 = vmatpush1.msra.mxu0 0.0
    %967 = vmatprep.subr.mxu0 0.0
    %968 = vmatpush1.msra.mxu0 0.0
    %969 = vmatprep.subr.mxu0 0.0
    %970 = vmatpush1.msra.mxu0 0.0
    %971 = vmatprep.subr.mxu0 0.0
    %972 = vmatpush1.msra.mxu0 0.0
    %973 = vmatprep.subr.mxu0 0.0
    %974 = vmatpush1.msra.mxu0 0.0
    %975 = vmatprep.subr.mxu0 0.0
    %976 = vmatpush1.msra.mxu0 0.0
    %977 = vmatprep.subr.mxu0 0.0
    %978 = vmatpush1.msra.mxu0 0.0
    %979 = vmatprep.mubr.f32.mxu0 0.0
    %980 = vmatmul.mubr.f32.gmra.mrb[0].mxu0 %v904
    %v981 = vpop.f32.mrb[0].mxu0
    %v982 = vadd.f32 %v893, %v981
    %v983 = vpop.f32.mrb[0].mxu0
    %v984 = vadd.f32 %v895, %v983
    %985 = vmatprep.mubr.f32.mxu0 0.0
    %986 = vmatmul.mubr.f32.gmra.mrb[0].mxu0 %v907
    %v987 = vpop.f32.mrb[0].mxu0
    %v988 = vadd.f32 %v899, %v987
    %v989 = vpop.f32.mrb[0].mxu0
    %v990 = vadd.f32 %v901, %v989
    %991 = vdwg.mxu0
    %s992 = scalar_lea.vmem %s4, 768
    %v993 = vld [vmem:[%s992] sm:$0xff]
    %v994 = vld [vmem:[%s992 + $0x8] sm:$0xff]
    %v995 = vld [vmem:[%s992 + $0x10] sm:$0xff]
    %v996 = vld [vmem:[%s992 + $0x18] sm:$0xff]
    %v997 = vld [vmem:[%s992 + $0x20] sm:$0xff]
    %v998 = vld [vmem:[%s992 + $0x28] sm:$0xff]
    %v999 = vld [vmem:[%s992 + $0x30] sm:$0xff]
    %v1000 = vld [vmem:[%s992 + $0x38] sm:$0xff]
    %v1001 = vld [vmem:[%s992 + $0x40] sm:$0xff]
    %v1002 = vld [vmem:[%s992 + $0x48] sm:$0xff]
    %v1003 = vld [vmem:[%s992 + $0x50] sm:$0xff]
    %v1004 = vld [vmem:[%s992 + $0x58] sm:$0xff]
    %v1005 = vld [vmem:[%s992 + $0x60] sm:$0xff]
    %v1006 = vld [vmem:[%s992 + $0x68] sm:$0xff]
    %v1007 = vld [vmem:[%s992 + $0x70] sm:$0xff]
    %v1008 = vld [vmem:[%s992 + $0x78] sm:$0xff]
    %v1009 = vld [vmem:[%s992 + $0x80] sm:$0xff]
    %v1010 = vld [vmem:[%s992 + $0x88] sm:$0xff]
    %v1011 = vld [vmem:[%s992 + $0x90] sm:$0xff]
    %v1012 = vld [vmem:[%s992 + $0x98] sm:$0xff]
    %v1013 = vld [vmem:[%s992 + $0xa0] sm:$0xff]
    %v1014 = vld [vmem:[%s992 + $0xa8] sm:$0xff]
    %v1015 = vld [vmem:[%s992 + $0xb0] sm:$0xff]
    %v1016 = vld [vmem:[%s992 + $0xb8] sm:$0xff]
    %v1017 = vld [vmem:[%s992 + $0xc0] sm:$0xff]
    %v1018 = vld [vmem:[%s992 + $0xc8] sm:$0xff]
    %v1019 = vld [vmem:[%s992 + $0xd0] sm:$0xff]
    %v1020 = vld [vmem:[%s992 + $0xd8] sm:$0xff]
    %v1021 = vld [vmem:[%s992 + $0xe0] sm:$0xff]
    %v1022 = vld [vmem:[%s992 + $0xe8] sm:$0xff]
    %v1023 = vld [vmem:[%s992 + $0xf0] sm:$0xff]
    %v1024 = vld [vmem:[%s992 + $0xf8] sm:$0xff]
    %v1025 = vld [vmem:[%s992 + $0x100] sm:$0xff]
    %v1026 = vld [vmem:[%s992 + $0x108] sm:$0xff]
    %v1027 = vld [vmem:[%s992 + $0x110] sm:$0xff]
    %v1028 = vld [vmem:[%s992 + $0x118] sm:$0xff]
    %v1029 = vld [vmem:[%s992 + $0x120] sm:$0xff]
    %v1030 = vld [vmem:[%s992 + $0x128] sm:$0xff]
    %v1031 = vld [vmem:[%s992 + $0x130] sm:$0xff]
    %v1032 = vld [vmem:[%s992 + $0x138] sm:$0xff]
    %v1033 = vld [vmem:[%s992 + $0x140] sm:$0xff]
    %v1034 = vld [vmem:[%s992 + $0x148] sm:$0xff]
    %v1035 = vld [vmem:[%s992 + $0x150] sm:$0xff]
    %v1036 = vld [vmem:[%s992 + $0x158] sm:$0xff]
    %v1037 = vld [vmem:[%s992 + $0x160] sm:$0xff]
    %v1038 = vld [vmem:[%s992 + $0x168] sm:$0xff]
    %v1039 = vld [vmem:[%s992 + $0x170] sm:$0xff]
    %v1040 = vld [vmem:[%s992 + $0x178] sm:$0xff]
    %1041 = vmatprep.subr.mxu0 %v994
    %1042 = vmatpush1.msra.mxu0 %v993
    %1043 = vmatprep.subr.mxu0 %v996
    %1044 = vmatpush1.msra.mxu0 %v995
    %1045 = vmatprep.subr.mxu0 %v998
    %1046 = vmatpush1.msra.mxu0 %v997
    %1047 = vmatprep.subr.mxu0 %v1000
    %1048 = vmatpush1.msra.mxu0 %v999
    %1049 = vmatprep.subr.mxu0 %v1002
    %1050 = vmatpush1.msra.mxu0 %v1001
    %1051 = vmatprep.subr.mxu0 %v1004
    %1052 = vmatpush1.msra.mxu0 %v1003
    %1053 = vmatprep.subr.mxu0 %v1006
    %1054 = vmatpush1.msra.mxu0 %v1005
    %1055 = vmatprep.subr.mxu0 %v1008
    %1056 = vmatpush1.msra.mxu0 %v1007
    %1057 = vmatprep.subr.mxu0 %v1010
    %1058 = vmatpush1.msra.mxu0 %v1009
    %1059 = vmatprep.subr.mxu0 %v1012
    %1060 = vmatpush1.msra.mxu0 %v1011
    %1061 = vmatprep.subr.mxu0 %v1014
    %1062 = vmatpush1.msra.mxu0 %v1013
    %1063 = vmatprep.subr.mxu0 %v1016
    %1064 = vmatpush1.msra.mxu0 %v1015
    %1065 = vmatprep.subr.mxu0 %v1018
    %1066 = vmatpush1.msra.mxu0 %v1017
    %1067 = vmatprep.subr.mxu0 %v1020
    %1068 = vmatpush1.msra.mxu0 %v1019
    %1069 = vmatprep.subr.mxu0 %v1022
    %1070 = vmatpush1.msra.mxu0 %v1021
    %1071 = vmatprep.subr.mxu0 %v1024
    %1072 = vmatpush1.msra.mxu0 %v1023
    %1073 = vmatprep.subr.mxu0 %v1026
    %1074 = vmatpush1.msra.mxu0 %v1025
    %1075 = vmatprep.subr.mxu0 %v1028
    %1076 = vmatpush1.msra.mxu0 %v1027
    %1077 = vmatprep.subr.mxu0 %v1030
    %1078 = vmatpush1.msra.mxu0 %v1029
    %1079 = vmatprep.subr.mxu0 %v1032
    %1080 = vmatpush1.msra.mxu0 %v1031
    %1081 = vmatprep.subr.mxu0 %v1034
    %1082 = vmatpush1.msra.mxu0 %v1033
    %1083 = vmatprep.subr.mxu0 %v1036
    %1084 = vmatpush1.msra.mxu0 %v1035
    %1085 = vmatprep.subr.mxu0 %v1038
    %1086 = vmatpush1.msra.mxu0 %v1037
    %1087 = vmatprep.subr.mxu0 %v1040
    %1088 = vmatpush1.msra.mxu0 %v1039
    %1089 = vmatprep.subr.mxu0 0.0
    %1090 = vmatpush1.msra.mxu0 0.0
    %1091 = vmatprep.subr.mxu0 0.0
    %1092 = vmatpush1.msra.mxu0 0.0
    %1093 = vmatprep.subr.mxu0 0.0
    %1094 = vmatpush1.msra.mxu0 0.0
    %1095 = vmatprep.subr.mxu0 0.0
    %1096 = vmatpush1.msra.mxu0 0.0
    %1097 = vmatprep.subr.mxu0 0.0
    %1098 = vmatpush1.msra.mxu0 0.0
    %1099 = vmatprep.subr.mxu0 0.0
    %1100 = vmatpush1.msra.mxu0 0.0
    %1101 = vmatprep.subr.mxu0 0.0
    %1102 = vmatpush1.msra.mxu0 0.0
    %1103 = vmatprep.subr.mxu0 0.0
    %1104 = vmatpush1.msra.mxu0 0.0
    %1105 = vmatprep.mubr.f32.mxu0 %v614
    %1106 = vmatmul.mubr.f32.gmra.mrb[0].mxu0 %v562
    %v1107 = vpop.f32.mrb[0].mxu0
    %v1108 = vadd.f32 0.0, %v1107
    %v1109 = vpop.f32.mrb[0].mxu0
    %v1110 = vadd.f32 0.0, %v1109
    %1111 = vdwg.mxu0
    %s1112 = scalar_lea.vmem %s5, 32
    %v1113 = vld [vmem:[%s1112] sm:$0xff]
    %v1114 = vld [vmem:[%s1112 + $0x8] sm:$0xf]
    %v1116 = vsel %vm812, %v1113, 0
    %v1119 = vsel %vm812, %v1114, 0
    %v1122 = vsel %vm819, %v1108, 0
    %v1125 = vsel %vm819, %v1110, 0
    %1127 = vmatprep.subr.mxu0 %v1125
    %1128 = vmatpush1.msra.mxu0 %v1122
    %1129 = vmatprep.subr.mxu0 0.0
    %1130 = vmatpush1.msra.mxu0 0.0
    %1131 = vmatprep.subr.mxu0 0.0
    %1132 = vmatpush1.msra.mxu0 0.0
    %1133 = vmatprep.subr.mxu0 0.0
    %1134 = vmatpush1.msra.mxu0 0.0
    %1135 = vmatprep.subr.mxu0 0.0
    %1136 = vmatpush1.msra.mxu0 0.0
    %1137 = vmatprep.subr.mxu0 0.0
    %1138 = vmatpush1.msra.mxu0 0.0
    %1139 = vmatprep.subr.mxu0 0.0
    %1140 = vmatpush1.msra.mxu0 0.0
    %1141 = vmatprep.subr.mxu0 0.0
    %1142 = vmatpush1.msra.mxu0 0.0
    %1143 = vmatprep.subr.mxu0 0.0
    %1144 = vmatpush1.msra.mxu0 0.0
    %1145 = vmatprep.subr.mxu0 0.0
    %1146 = vmatpush1.msra.mxu0 0.0
    %1147 = vmatprep.subr.mxu0 0.0
    %1148 = vmatpush1.msra.mxu0 0.0
    %1149 = vmatprep.subr.mxu0 0.0
    %1150 = vmatpush1.msra.mxu0 0.0
    %1151 = vmatprep.subr.mxu0 0.0
    %1152 = vmatpush1.msra.mxu0 0.0
    %1153 = vmatprep.subr.mxu0 0.0
    %1154 = vmatpush1.msra.mxu0 0.0
    %1155 = vmatprep.subr.mxu0 0.0
    %1156 = vmatpush1.msra.mxu0 0.0
    %1157 = vmatprep.subr.mxu0 0.0
    %1158 = vmatpush1.msra.mxu0 0.0
    %1159 = vmatprep.subr.mxu0 0.0
    %1160 = vmatpush1.msra.mxu0 0.0
    %1161 = vmatprep.subr.mxu0 0.0
    %1162 = vmatpush1.msra.mxu0 0.0
    %1163 = vmatprep.subr.mxu0 0.0
    %1164 = vmatpush1.msra.mxu0 0.0
    %1165 = vmatprep.subr.mxu0 0.0
    %1166 = vmatpush1.msra.mxu0 0.0
    %1167 = vmatprep.subr.mxu0 0.0
    %1168 = vmatpush1.msra.mxu0 0.0
    %1169 = vmatprep.subr.mxu0 0.0
    %1170 = vmatpush1.msra.mxu0 0.0
    %1171 = vmatprep.subr.mxu0 0.0
    %1172 = vmatpush1.msra.mxu0 0.0
    %1173 = vmatprep.subr.mxu0 0.0
    %1174 = vmatpush1.msra.mxu0 0.0
    %1175 = vmatprep.subr.mxu0 0.0
    %1176 = vmatpush1.msra.mxu0 0.0
    %1177 = vmatprep.subr.mxu0 0.0
    %1178 = vmatpush1.msra.mxu0 0.0
    %1179 = vmatprep.subr.mxu0 0.0
    %1180 = vmatpush1.msra.mxu0 0.0
    %1181 = vmatprep.subr.mxu0 0.0
    %1182 = vmatpush1.msra.mxu0 0.0
    %1183 = vmatprep.subr.mxu0 0.0
    %1184 = vmatpush1.msra.mxu0 0.0
    %1185 = vmatprep.subr.mxu0 0.0
    %1186 = vmatpush1.msra.mxu0 0.0
    %1187 = vmatprep.subr.mxu0 0.0
    %1188 = vmatpush1.msra.mxu0 0.0
    %1189 = vmatprep.subr.mxu0 0.0
    %1190 = vmatpush1.msra.mxu0 0.0
    %1191 = vmatprep.mubr.f32.mxu0 0.0
    %1192 = vmatmul.mubr.f32.gmra.mrb[0].mxu0 %v1116
    %v1193 = vpop.f32.mrb[0].mxu0
    %v1194 = vadd.f32 0.0, %v1193
    %v1195 = vpop.f32.mrb[0].mxu0
    %v1196 = vadd.f32 0.0, %v1195
    %1197 = vmatprep.mubr.f32.mxu0 0.0
    %1198 = vmatmul.mubr.f32.gmra.mrb[0].mxu0 %v1119
    %v1199 = vpop.f32.mrb[0].mxu0
    %v1200 = vadd.f32 0.0, %v1199
    %v1201 = vpop.f32.mrb[0].mxu0
    %v1202 = vadd.f32 0.0, %v1201
    %1203 = vdwg.mxu0
    %v1204 = vadd.f32 %v982, %v1194
    %v1205 = vadd.f32 %v984, %v1196
    %v1206 = vadd.f32 %v988, %v1200
    %v1207 = vadd.f32 %v990, %v1202
    %s1208 = scalar_lea.vmem %s4, 1152
    %v1209 = vld [vmem:[%s1208] sm:$0xff]
    %v1210 = vld [vmem:[%s1208 + $0x8] sm:$0xff]
    %v1211 = vld [vmem:[%s1208 + $0x10] sm:$0xff]
    %v1212 = vld [vmem:[%s1208 + $0x18] sm:$0xff]
    %v1213 = vld [vmem:[%s1208 + $0x20] sm:$0xff]
    %v1214 = vld [vmem:[%s1208 + $0x28] sm:$0xff]
    %v1215 = vld [vmem:[%s1208 + $0x30] sm:$0xff]
    %v1216 = vld [vmem:[%s1208 + $0x38] sm:$0xff]
    %v1217 = vld [vmem:[%s1208 + $0x40] sm:$0xff]
    %v1218 = vld [vmem:[%s1208 + $0x48] sm:$0xff]
    %v1219 = vld [vmem:[%s1208 + $0x50] sm:$0xff]
    %v1220 = vld [vmem:[%s1208 + $0x58] sm:$0xff]
    %v1221 = vld [vmem:[%s1208 + $0x60] sm:$0xff]
    %v1222 = vld [vmem:[%s1208 + $0x68] sm:$0xff]
    %v1223 = vld [vmem:[%s1208 + $0x70] sm:$0xff]
    %v1224 = vld [vmem:[%s1208 + $0x78] sm:$0xff]
    %v1225 = vld [vmem:[%s1208 + $0x80] sm:$0xff]
    %v1226 = vld [vmem:[%s1208 + $0x88] sm:$0xff]
    %v1227 = vld [vmem:[%s1208 + $0x90] sm:$0xff]
    %v1228 = vld [vmem:[%s1208 + $0x98] sm:$0xff]
    %v1229 = vld [vmem:[%s1208 + $0xa0] sm:$0xff]
    %v1230 = vld [vmem:[%s1208 + $0xa8] sm:$0xff]
    %v1231 = vld [vmem:[%s1208 + $0xb0] sm:$0xff]
    %v1232 = vld [vmem:[%s1208 + $0xb8] sm:$0xff]
    %v1233 = vld [vmem:[%s1208 + $0xc0] sm:$0xff]
    %v1234 = vld [vmem:[%s1208 + $0xc8] sm:$0xff]
    %v1235 = vld [vmem:[%s1208 + $0xd0] sm:$0xff]
    %v1236 = vld [vmem:[%s1208 + $0xd8] sm:$0xff]
    %v1237 = vld [vmem:[%s1208 + $0xe0] sm:$0xff]
    %v1238 = vld [vmem:[%s1208 + $0xe8] sm:$0xff]
    %v1239 = vld [vmem:[%s1208 + $0xf0] sm:$0xff]
    %v1240 = vld [vmem:[%s1208 + $0xf8] sm:$0xff]
    %v1241 = vld [vmem:[%s1208 + $0x100] sm:$0xff]
    %v1242 = vld [vmem:[%s1208 + $0x108] sm:$0xff]
    %v1243 = vld [vmem:[%s1208 + $0x110] sm:$0xff]
    %v1244 = vld [vmem:[%s1208 + $0x118] sm:$0xff]
    %v1245 = vld [vmem:[%s1208 + $0x120] sm:$0xff]
    %v1246 = vld [vmem:[%s1208 + $0x128] sm:$0xff]
    %v1247 = vld [vmem:[%s1208 + $0x130] sm:$0xff]
    %v1248 = vld [vmem:[%s1208 + $0x138] sm:$0xff]
    %v1249 = vld [vmem:[%s1208 + $0x140] sm:$0xff]
    %v1250 = vld [vmem:[%s1208 + $0x148] sm:$0xff]
    %v1251 = vld [vmem:[%s1208 + $0x150] sm:$0xff]
    %v1252 = vld [vmem:[%s1208 + $0x158] sm:$0xff]
    %v1253 = vld [vmem:[%s1208 + $0x160] sm:$0xff]
    %v1254 = vld [vmem:[%s1208 + $0x168] sm:$0xff]
    %v1255 = vld [vmem:[%s1208 + $0x170] sm:$0xff]
    %v1256 = vld [vmem:[%s1208 + $0x178] sm:$0xff]
    %1257 = vmatprep.subr.mxu0 %v1210
    %1258 = vmatpush1.msra.mxu0 %v1209
    %1259 = vmatprep.subr.mxu0 %v1212
    %1260 = vmatpush1.msra.mxu0 %v1211
    %1261 = vmatprep.subr.mxu0 %v1214
    %1262 = vmatpush1.msra.mxu0 %v1213
    %1263 = vmatprep.subr.mxu0 %v1216
    %1264 = vmatpush1.msra.mxu0 %v1215
    %1265 = vmatprep.subr.mxu0 %v1218
    %1266 = vmatpush1.msra.mxu0 %v1217
    %1267 = vmatprep.subr.mxu0 %v1220
    %1268 = vmatpush1.msra.mxu0 %v1219
    %1269 = vmatprep.subr.mxu0 %v1222
    %1270 = vmatpush1.msra.mxu0 %v1221
    %1271 = vmatprep.subr.mxu0 %v1224
    %1272 = vmatpush1.msra.mxu0 %v1223
    %1273 = vmatprep.subr.mxu0 %v1226
    %1274 = vmatpush1.msra.mxu0 %v1225
    %1275 = vmatprep.subr.mxu0 %v1228
    %1276 = vmatpush1.msra.mxu0 %v1227
    %1277 = vmatprep.subr.mxu0 %v1230
    %1278 = vmatpush1.msra.mxu0 %v1229
    %1279 = vmatprep.subr.mxu0 %v1232
    %1280 = vmatpush1.msra.mxu0 %v1231
    %1281 = vmatprep.subr.mxu0 %v1234
    %1282 = vmatpush1.msra.mxu0 %v1233
    %1283 = vmatprep.subr.mxu0 %v1236
    %1284 = vmatpush1.msra.mxu0 %v1235
    %1285 = vmatprep.subr.mxu0 %v1238
    %1286 = vmatpush1.msra.mxu0 %v1237
    %1287 = vmatprep.subr.mxu0 %v1240
    %1288 = vmatpush1.msra.mxu0 %v1239
    %1289 = vmatprep.subr.mxu0 %v1242
    %1290 = vmatpush1.msra.mxu0 %v1241
    %1291 = vmatprep.subr.mxu0 %v1244
    %1292 = vmatpush1.msra.mxu0 %v1243
    %1293 = vmatprep.subr.mxu0 %v1246
    %1294 = vmatpush1.msra.mxu0 %v1245
    %1295 = vmatprep.subr.mxu0 %v1248
    %1296 = vmatpush1.msra.mxu0 %v1247
    %1297 = vmatprep.subr.mxu0 %v1250
    %1298 = vmatpush1.msra.mxu0 %v1249
    %1299 = vmatprep.subr.mxu0 %v1252
    %1300 = vmatpush1.msra.mxu0 %v1251
    %1301 = vmatprep.subr.mxu0 %v1254
    %1302 = vmatpush1.msra.mxu0 %v1253
    %1303 = vmatprep.subr.mxu0 %v1256
    %1304 = vmatpush1.msra.mxu0 %v1255
    %1305 = vmatprep.subr.mxu0 0.0
    %1306 = vmatpush1.msra.mxu0 0.0
    %1307 = vmatprep.subr.mxu0 0.0
    %1308 = vmatpush1.msra.mxu0 0.0
    %1309 = vmatprep.subr.mxu0 0.0
    %1310 = vmatpush1.msra.mxu0 0.0
    %1311 = vmatprep.subr.mxu0 0.0
    %1312 = vmatpush1.msra.mxu0 0.0
    %1313 = vmatprep.subr.mxu0 0.0
    %1314 = vmatpush1.msra.mxu0 0.0
    %1315 = vmatprep.subr.mxu0 0.0
    %1316 = vmatpush1.msra.mxu0 0.0
    %1317 = vmatprep.subr.mxu0 0.0
    %1318 = vmatpush1.msra.mxu0 0.0
    %1319 = vmatprep.subr.mxu0 0.0
    %1320 = vmatpush1.msra.mxu0 0.0
    %1321 = vmatprep.mubr.f32.mxu0 %v614
    %1322 = vmatmul.mubr.f32.gmra.mrb[0].mxu0 %v562
    %v1323 = vpop.f32.mrb[0].mxu0
    %v1324 = vadd.f32 0.0, %v1323
    %v1325 = vpop.f32.mrb[0].mxu0
    %v1326 = vadd.f32 0.0, %v1325
    %1327 = vdwg.mxu0
    %s1328 = scalar_lea.vmem %s5, 48
    %v1329 = vld [vmem:[%s1328] sm:$0xff]
    %v1330 = vld [vmem:[%s1328 + $0x8] sm:$0xf]
    %v1332 = vsel %vm812, %v1329, 0
    %v1335 = vsel %vm812, %v1330, 0
    %v1338 = vsel %vm819, %v1324, 0
    %v1341 = vsel %vm819, %v1326, 0
    %1343 = vmatprep.subr.mxu0 %v1341
    %1344 = vmatpush1.msra.mxu0 %v1338
    %1345 = vmatprep.subr.mxu0 0.0
    %1346 = vmatpush1.msra.mxu0 0.0
    %1347 = vmatprep.subr.mxu0 0.0
    %1348 = vmatpush1.msra.mxu0 0.0
    %1349 = vmatprep.subr.mxu0 0.0
    %1350 = vmatpush1.msra.mxu0 0.0
    %1351 = vmatprep.subr.mxu0 0.0
    %1352 = vmatpush1.msra.mxu0 0.0
    %1353 = vmatprep.subr.mxu0 0.0
    %1354 = vmatpush1.msra.mxu0 0.0
    %1355 = vmatprep.subr.mxu0 0.0
    %1356 = vmatpush1.msra.mxu0 0.0
    %1357 = vmatprep.subr.mxu0 0.0
    %1358 = vmatpush1.msra.mxu0 0.0
    %1359 = vmatprep.subr.mxu0 0.0
    %1360 = vmatpush1.msra.mxu0 0.0
    %1361 = vmatprep.subr.mxu0 0.0
    %1362 = vmatpush1.msra.mxu0 0.0
    %1363 = vmatprep.subr.mxu0 0.0
    %1364 = vmatpush1.msra.mxu0 0.0
    %1365 = vmatprep.subr.mxu0 0.0
    %1366 = vmatpush1.msra.mxu0 0.0
    %1367 = vmatprep.subr.mxu0 0.0
    %1368 = vmatpush1.msra.mxu0 0.0
    %1369 = vmatprep.subr.mxu0 0.0
    %1370 = vmatpush1.msra.mxu0 0.0
    %1371 = vmatprep.subr.mxu0 0.0
    %1372 = vmatpush1.msra.mxu0 0.0
    %1373 = vmatprep.subr.mxu0 0.0
    %1374 = vmatpush1.msra.mxu0 0.0
    %1375 = vmatprep.subr.mxu0 0.0
    %1376 = vmatpush1.msra.mxu0 0.0
    %1377 = vmatprep.subr.mxu0 0.0
    %1378 = vmatpush1.msra.mxu0 0.0
    %1379 = vmatprep.subr.mxu0 0.0
    %1380 = vmatpush1.msra.mxu0 0.0
    %1381 = vmatprep.subr.mxu0 0.0
    %1382 = vmatpush1.msra.mxu0 0.0
    %1383 = vmatprep.subr.mxu0 0.0
    %1384 = vmatpush1.msra.mxu0 0.0
    %1385 = vmatprep.subr.mxu0 0.0
    %1386 = vmatpush1.msra.mxu0 0.0
    %1387 = vmatprep.subr.mxu0 0.0
    %1388 = vmatpush1.msra.mxu0 0.0
    %1389 = vmatprep.subr.mxu0 0.0
    %1390 = vmatpush1.msra.mxu0 0.0
    %1391 = vmatprep.subr.mxu0 0.0
    %1392 = vmatpush1.msra.mxu0 0.0
    %1393 = vmatprep.subr.mxu0 0.0
    %1394 = vmatpush1.msra.mxu0 0.0
    %1395 = vmatprep.subr.mxu0 0.0
    %1396 = vmatpush1.msra.mxu0 0.0
    %1397 = vmatprep.subr.mxu0 0.0
    %1398 = vmatpush1.msra.mxu0 0.0
    %1399 = vmatprep.subr.mxu0 0.0
    %1400 = vmatpush1.msra.mxu0 0.0
    %1401 = vmatprep.subr.mxu0 0.0
    %1402 = vmatpush1.msra.mxu0 0.0
    %1403 = vmatprep.subr.mxu0 0.0
    %1404 = vmatpush1.msra.mxu0 0.0
    %1405 = vmatprep.subr.mxu0 0.0
    %1406 = vmatpush1.msra.mxu0 0.0
    %1407 = vmatprep.mubr.f32.mxu0 0.0
    %1408 = vmatmul.mubr.f32.gmra.mrb[0].mxu0 %v1332
    %v1409 = vpop.f32.mrb[0].mxu0
    %v1410 = vadd.f32 0.0, %v1409
    %v1411 = vpop.f32.mrb[0].mxu0
    %v1412 = vadd.f32 0.0, %v1411
    %1413 = vmatprep.mubr.f32.mxu0 0.0
    %1414 = vmatmul.mubr.f32.gmra.mrb[0].mxu0 %v1335
    %v1415 = vpop.f32.mrb[0].mxu0
    %v1416 = vadd.f32 0.0, %v1415
    %v1417 = vpop.f32.mrb[0].mxu0
    %v1418 = vadd.f32 0.0, %v1417
    %1419 = vdwg.mxu0
    %v1420 = vadd.f32 %v1204, %v1410
    %v1421 = vadd.f32 %v1205, %v1412
    %v1422 = vadd.f32 %v1206, %v1416
    %v1423 = vadd.f32 %v1207, %v1418
    %v1424 = vld [vmem:[%s6] sm:$0x3]
    %v1426 = vlaneseq
    %v1427 = vshrl.u32 %v1426, 7
    %v1428 = vsub.s32 0, %v1427
    %v1429 = vrot.slane %v1424, %v1428
    %v1430 = vlaneseq
    %v1431 = vshrl.u32 %v1430, 7
    %v1432 = vsub.s32 1, %v1431
    %v1433 = vrot.slane %v1424, %v1432
    %v1436 = vadd.f32 %v1420, %v1429
    %v1437 = vadd.f32 %v1421, %v1433
    %v1438 = vadd.f32 %v1422, %v1429
    %v1439 = vadd.f32 %v1423, %v1433
    %v1440 = vmax.f32 %v1436, 0.0
    %v1441 = vmax.f32 %v1437, 0.0
    %v1442 = vmax.f32 %v1438, 0.0
    %v1443 = vmax.f32 %v1439, 0.0
    %v1444 = vld [vmem:[%s7] sm:$0xff]
    %v1445 = vld [vmem:[%s7 + $0x8] sm:$0xff]
    %v1446 = vld [vmem:[%s7 + $0x10] sm:$0xff]
    %v1447 = vld [vmem:[%s7 + $0x18] sm:$0xff]
    %v1448 = vld [vmem:[%s7 + $0x20] sm:$0xff]
    %v1449 = vld [vmem:[%s7 + $0x28] sm:$0xff]
    %v1450 = vld [vmem:[%s7 + $0x30] sm:$0xff]
    %v1451 = vld [vmem:[%s7 + $0x38] sm:$0xff]
    %v1452 = vld [vmem:[%s7 + $0x40] sm:$0xff]
    %v1453 = vld [vmem:[%s7 + $0x48] sm:$0xff]
    %v1454 = vld [vmem:[%s7 + $0x50] sm:$0xff]
    %v1455 = vld [vmem:[%s7 + $0x58] sm:$0xff]
    %v1456 = vld [vmem:[%s7 + $0x60] sm:$0xff]
    %v1457 = vld [vmem:[%s7 + $0x68] sm:$0xff]
    %v1458 = vld [vmem:[%s7 + $0x70] sm:$0xff]
    %v1459 = vld [vmem:[%s7 + $0x78] sm:$0xff]
    %v1460 = vld [vmem:[%s7 + $0x80] sm:$0xff]
    %v1461 = vld [vmem:[%s7 + $0x88] sm:$0xff]
    %v1462 = vld [vmem:[%s7 + $0x90] sm:$0xff]
    %v1463 = vld [vmem:[%s7 + $0x98] sm:$0xff]
    %v1464 = vld [vmem:[%s7 + $0xa0] sm:$0xff]
    %v1465 = vld [vmem:[%s7 + $0xa8] sm:$0xff]
    %v1466 = vld [vmem:[%s7 + $0xb0] sm:$0xff]
    %v1467 = vld [vmem:[%s7 + $0xb8] sm:$0xff]
    %v1468 = vld [vmem:[%s7 + $0xc0] sm:$0xff]
    %v1469 = vld [vmem:[%s7 + $0xc8] sm:$0xff]
    %v1470 = vld [vmem:[%s7 + $0xd0] sm:$0xff]
    %v1471 = vld [vmem:[%s7 + $0xd8] sm:$0xff]
    %v1472 = vld [vmem:[%s7 + $0xe0] sm:$0xff]
    %v1473 = vld [vmem:[%s7 + $0xe8] sm:$0xff]
    %v1474 = vld [vmem:[%s7 + $0xf0] sm:$0xff]
    %v1475 = vld [vmem:[%s7 + $0xf8] sm:$0xff]
    %v1476 = vld [vmem:[%s7 + $0x100] sm:$0xff]
    %v1477 = vld [vmem:[%s7 + $0x108] sm:$0xff]
    %v1478 = vld [vmem:[%s7 + $0x110] sm:$0xff]
    %v1479 = vld [vmem:[%s7 + $0x118] sm:$0xff]
    %v1480 = vld [vmem:[%s7 + $0x120] sm:$0xff]
    %v1481 = vld [vmem:[%s7 + $0x128] sm:$0xff]
    %v1482 = vld [vmem:[%s7 + $0x130] sm:$0xff]
    %v1483 = vld [vmem:[%s7 + $0x138] sm:$0xff]
    %v1484 = vld [vmem:[%s7 + $0x140] sm:$0xff]
    %v1485 = vld [vmem:[%s7 + $0x148] sm:$0xff]
    %v1486 = vld [vmem:[%s7 + $0x150] sm:$0xff]
    %v1487 = vld [vmem:[%s7 + $0x158] sm:$0xff]
    %v1488 = vld [vmem:[%s7 + $0x160] sm:$0xff]
    %v1489 = vld [vmem:[%s7 + $0x168] sm:$0xff]
    %v1490 = vld [vmem:[%s7 + $0x170] sm:$0xff]
    %v1491 = vld [vmem:[%s7 + $0x178] sm:$0xff]
    %v1493 = vsel %vm612, %v1441, 0
    %v1496 = vsel %vm612, %v1443, 0
    %1498 = vmatprep.subr.mxu0 %v1445
    %1499 = vmatpush1.msra.mxu0 %v1444
    %1500 = vmatprep.subr.mxu0 %v1447
    %1501 = vmatpush1.msra.mxu0 %v1446
    %1502 = vmatprep.subr.mxu0 %v1449
    %1503 = vmatpush1.msra.mxu0 %v1448
    %1504 = vmatprep.subr.mxu0 %v1451
    %1505 = vmatpush1.msra.mxu0 %v1450
    %1506 = vmatprep.subr.mxu0 %v1453
    %1507 = vmatpush1.msra.mxu0 %v1452
    %1508 = vmatprep.subr.mxu0 %v1455
    %1509 = vmatpush1.msra.mxu0 %v1454
    %1510 = vmatprep.subr.mxu0 %v1457
    %1511 = vmatpush1.msra.mxu0 %v1456
    %1512 = vmatprep.subr.mxu0 %v1459
    %1513 = vmatpush1.msra.mxu0 %v1458
    %1514 = vmatprep.subr.mxu0 %v1461
    %1515 = vmatpush1.msra.mxu0 %v1460
    %1516 = vmatprep.subr.mxu0 %v1463
    %1517 = vmatpush1.msra.mxu0 %v1462
    %1518 = vmatprep.subr.mxu0 %v1465
    %1519 = vmatpush1.msra.mxu0 %v1464
    %1520 = vmatprep.subr.mxu0 %v1467
    %1521 = vmatpush1.msra.mxu0 %v1466
    %1522 = vmatprep.subr.mxu0 %v1469
    %1523 = vmatpush1.msra.mxu0 %v1468
    %1524 = vmatprep.subr.mxu0 %v1471
    %1525 = vmatpush1.msra.mxu0 %v1470
    %1526 = vmatprep.subr.mxu0 %v1473
    %1527 = vmatpush1.msra.mxu0 %v1472
    %1528 = vmatprep.subr.mxu0 %v1475
    %1529 = vmatpush1.msra.mxu0 %v1474
    %1530 = vmatprep.subr.mxu0 %v1477
    %1531 = vmatpush1.msra.mxu0 %v1476
    %1532 = vmatprep.subr.mxu0 %v1479
    %1533 = vmatpush1.msra.mxu0 %v1478
    %1534 = vmatprep.subr.mxu0 %v1481
    %1535 = vmatpush1.msra.mxu0 %v1480
    %1536 = vmatprep.subr.mxu0 %v1483
    %1537 = vmatpush1.msra.mxu0 %v1482
    %1538 = vmatprep.subr.mxu0 %v1485
    %1539 = vmatpush1.msra.mxu0 %v1484
    %1540 = vmatprep.subr.mxu0 %v1487
    %1541 = vmatpush1.msra.mxu0 %v1486
    %1542 = vmatprep.subr.mxu0 %v1489
    %1543 = vmatpush1.msra.mxu0 %v1488
    %1544 = vmatprep.subr.mxu0 %v1491
    %1545 = vmatpush1.msra.mxu0 %v1490
    %1546 = vmatprep.subr.mxu0 0.0
    %1547 = vmatpush1.msra.mxu0 0.0
    %1548 = vmatprep.subr.mxu0 0.0
    %1549 = vmatpush1.msra.mxu0 0.0
    %1550 = vmatprep.subr.mxu0 0.0
    %1551 = vmatpush1.msra.mxu0 0.0
    %1552 = vmatprep.subr.mxu0 0.0
    %1553 = vmatpush1.msra.mxu0 0.0
    %1554 = vmatprep.subr.mxu0 0.0
    %1555 = vmatpush1.msra.mxu0 0.0
    %1556 = vmatprep.subr.mxu0 0.0
    %1557 = vmatpush1.msra.mxu0 0.0
    %1558 = vmatprep.subr.mxu0 0.0
    %1559 = vmatpush1.msra.mxu0 0.0
    %1560 = vmatprep.subr.mxu0 0.0
    %1561 = vmatpush1.msra.mxu0 0.0
    %1562 = vmatprep.mubr.f32.mxu0 %v1493
    %1563 = vmatmul.mubr.f32.gmra.mrb[0].mxu0 %v1440
    %v1564 = vpop.f32.mrb[0].mxu0
    %v1565 = vadd.f32 0.0, %v1564
    %v1566 = vpop.f32.mrb[0].mxu0
    %v1567 = vadd.f32 0.0, %v1566
    %1568 = vmatprep.mubr.f32.mxu0 %v1496
    %1569 = vmatmul.mubr.f32.gmra.mrb[0].mxu0 %v1442
    %v1570 = vpop.f32.mrb[0].mxu0
    %v1571 = vadd.f32 0.0, %v1570
    %v1572 = vpop.f32.mrb[0].mxu0
    %v1573 = vadd.f32 0.0, %v1572
    %1574 = vdwg.mxu0
    %v1575 = vld [vmem:[%s8] sm:$0xff]
    %v1576 = vld [vmem:[%s8 + $0x8] sm:$0xff]
    %v1577 = vld [vmem:[%s8 + $0x10] sm:$0xff]
    %s1578 = scalar_lea.vmem %s7, 384
    %v1579 = vld [vmem:[%s1578] sm:$0xff]
    %v1580 = vld [vmem:[%s1578 + $0x8] sm:$0xff]
    %v1581 = vld [vmem:[%s1578 + $0x10] sm:$0xff]
    %v1582 = vld [vmem:[%s1578 + $0x18] sm:$0xff]
    %v1583 = vld [vmem:[%s1578 + $0x20] sm:$0xff]
    %v1584 = vld [vmem:[%s1578 + $0x28] sm:$0xff]
    %v1585 = vld [vmem:[%s1578 + $0x30] sm:$0xff]
    %v1586 = vld [vmem:[%s1578 + $0x38] sm:$0xff]
    %v1587 = vld [vmem:[%s1578 + $0x40] sm:$0xff]
    %v1588 = vld [vmem:[%s1578 + $0x48] sm:$0xff]
    %v1589 = vld [vmem:[%s1578 + $0x50] sm:$0xff]
    %v1590 = vld [vmem:[%s1578 + $0x58] sm:$0xff]
    %v1591 = vld [vmem:[%s1578 + $0x60] sm:$0xff]
    %v1592 = vld [vmem:[%s1578 + $0x68] sm:$0xff]
    %v1593 = vld [vmem:[%s1578 + $0x70] sm:$0xff]
    %v1594 = vld [vmem:[%s1578 + $0x78] sm:$0xff]
    %v1595 = vld [vmem:[%s1578 + $0x80] sm:$0xff]
    %v1596 = vld [vmem:[%s1578 + $0x88] sm:$0xff]
    %v1597 = vld [vmem:[%s1578 + $0x90] sm:$0xff]
    %v1598 = vld [vmem:[%s1578 + $0x98] sm:$0xff]
    %v1599 = vld [vmem:[%s1578 + $0xa0] sm:$0xff]
    %v1600 = vld [vmem:[%s1578 + $0xa8] sm:$0xff]
    %v1601 = vld [vmem:[%s1578 + $0xb0] sm:$0xff]
    %v1602 = vld [vmem:[%s1578 + $0xb8] sm:$0xff]
    %v1603 = vld [vmem:[%s1578 + $0xc0] sm:$0xff]
    %v1604 = vld [vmem:[%s1578 + $0xc8] sm:$0xff]
    %v1605 = vld [vmem:[%s1578 + $0xd0] sm:$0xff]
    %v1606 = vld [vmem:[%s1578 + $0xd8] sm:$0xff]
    %v1607 = vld [vmem:[%s1578 + $0xe0] sm:$0xff]
    %v1608 = vld [vmem:[%s1578 + $0xe8] sm:$0xff]
    %v1609 = vld [vmem:[%s1578 + $0xf0] sm:$0xff]
    %v1610 = vld [vmem:[%s1578 + $0xf8] sm:$0xff]
    %v1611 = vld [vmem:[%s1578 + $0x100] sm:$0xff]
    %v1612 = vld [vmem:[%s1578 + $0x108] sm:$0xff]
    %v1613 = vld [vmem:[%s1578 + $0x110] sm:$0xff]
    %v1614 = vld [vmem:[%s1578 + $0x118] sm:$0xff]
    %v1615 = vld [vmem:[%s1578 + $0x120] sm:$0xff]
    %v1616 = vld [vmem:[%s1578 + $0x128] sm:$0xff]
    %v1617 = vld [vmem:[%s1578 + $0x130] sm:$0xff]
    %v1618 = vld [vmem:[%s1578 + $0x138] sm:$0xff]
    %v1619 = vld [vmem:[%s1578 + $0x140] sm:$0xff]
    %v1620 = vld [vmem:[%s1578 + $0x148] sm:$0xff]
    %v1621 = vld [vmem:[%s1578 + $0x150] sm:$0xff]
    %v1622 = vld [vmem:[%s1578 + $0x158] sm:$0xff]
    %v1623 = vld [vmem:[%s1578 + $0x160] sm:$0xff]
    %v1624 = vld [vmem:[%s1578 + $0x168] sm:$0xff]
    %v1625 = vld [vmem:[%s1578 + $0x170] sm:$0xff]
    %v1626 = vld [vmem:[%s1578 + $0x178] sm:$0xff]
    %1627 = vmatprep.subr.mxu0 %v1580
    %1628 = vmatpush1.msra.mxu0 %v1579
    %1629 = vmatprep.subr.mxu0 %v1582
    %1630 = vmatpush1.msra.mxu0 %v1581
    %1631 = vmatprep.subr.mxu0 %v1584
    %1632 = vmatpush1.msra.mxu0 %v1583
    %1633 = vmatprep.subr.mxu0 %v1586
    %1634 = vmatpush1.msra.mxu0 %v1585
    %1635 = vmatprep.subr.mxu0 %v1588
    %1636 = vmatpush1.msra.mxu0 %v1587
    %1637 = vmatprep.subr.mxu0 %v1590
    %1638 = vmatpush1.msra.mxu0 %v1589
    %1639 = vmatprep.subr.mxu0 %v1592
    %1640 = vmatpush1.msra.mxu0 %v1591
    %1641 = vmatprep.subr.mxu0 %v1594
    %1642 = vmatpush1.msra.mxu0 %v1593
    %1643 = vmatprep.subr.mxu0 %v1596
    %1644 = vmatpush1.msra.mxu0 %v1595
    %1645 = vmatprep.subr.mxu0 %v1598
    %1646 = vmatpush1.msra.mxu0 %v1597
    %1647 = vmatprep.subr.mxu0 %v1600
    %1648 = vmatpush1.msra.mxu0 %v1599
    %1649 = vmatprep.subr.mxu0 %v1602
    %1650 = vmatpush1.msra.mxu0 %v1601
    %1651 = vmatprep.subr.mxu0 %v1604
    %1652 = vmatpush1.msra.mxu0 %v1603
    %1653 = vmatprep.subr.mxu0 %v1606
    %1654 = vmatpush1.msra.mxu0 %v1605
    %1655 = vmatprep.subr.mxu0 %v1608
    %1656 = vmatpush1.msra.mxu0 %v1607
    %1657 = vmatprep.subr.mxu0 %v1610
    %1658 = vmatpush1.msra.mxu0 %v1609
    %1659 = vmatprep.subr.mxu0 %v1612
    %1660 = vmatpush1.msra.mxu0 %v1611
    %1661 = vmatprep.subr.mxu0 %v1614
    %1662 = vmatpush1.msra.mxu0 %v1613
    %1663 = vmatprep.subr.mxu0 %v1616
    %1664 = vmatpush1.msra.mxu0 %v1615
    %1665 = vmatprep.subr.mxu0 %v1618
    %1666 = vmatpush1.msra.mxu0 %v1617
    %1667 = vmatprep.subr.mxu0 %v1620
    %1668 = vmatpush1.msra.mxu0 %v1619
    %1669 = vmatprep.subr.mxu0 %v1622
    %1670 = vmatpush1.msra.mxu0 %v1621
    %1671 = vmatprep.subr.mxu0 %v1624
    %1672 = vmatpush1.msra.mxu0 %v1623
    %1673 = vmatprep.subr.mxu0 %v1626
    %1674 = vmatpush1.msra.mxu0 %v1625
    %1675 = vmatprep.subr.mxu0 0.0
    %1676 = vmatpush1.msra.mxu0 0.0
    %1677 = vmatprep.subr.mxu0 0.0
    %1678 = vmatpush1.msra.mxu0 0.0
    %1679 = vmatprep.subr.mxu0 0.0
    %1680 = vmatpush1.msra.mxu0 0.0
    %1681 = vmatprep.subr.mxu0 0.0
    %1682 = vmatpush1.msra.mxu0 0.0
    %1683 = vmatprep.subr.mxu0 0.0
    %1684 = vmatpush1.msra.mxu0 0.0
    %1685 = vmatprep.subr.mxu0 0.0
    %1686 = vmatpush1.msra.mxu0 0.0
    %1687 = vmatprep.subr.mxu0 0.0
    %1688 = vmatpush1.msra.mxu0 0.0
    %1689 = vmatprep.subr.mxu0 0.0
    %1690 = vmatpush1.msra.mxu0 0.0
    %1691 = vmatprep.mubr.f32.mxu0 %v1493
    %1692 = vmatmul.mubr.f32.gmra.mrb[0].mxu0 %v1440
    %v1693 = vpop.f32.mrb[0].mxu0
    %v1694 = vadd.f32 0.0, %v1693
    %v1695 = vpop.f32.mrb[0].mxu0
    %v1696 = vadd.f32 0.0, %v1695
    %1697 = vmatprep.mubr.f32.mxu0 %v1496
    %1698 = vmatmul.mubr.f32.gmra.mrb[0].mxu0 %v1442
    %v1699 = vpop.f32.mrb[0].mxu0
    %v1700 = vadd.f32 0.0, %v1699
    %v1701 = vpop.f32.mrb[0].mxu0
    %v1702 = vadd.f32 0.0, %v1701
    %1703 = vdwg.mxu0
    %s1704 = scalar_lea.vmem %s8, 24
    %v1705 = vld [vmem:[%s1704] sm:$0xff]
    %v1706 = vld [vmem:[%s1704 + $0x8] sm:$0xff]
    %v1707 = vld [vmem:[%s1704 + $0x10] sm:$0xff]
    %vm1708 = vcmask 97280
    %v1710 = vsel %vm1708, %v1705, 0
    %v1713 = vsel %vm1708, %v1706, 0
    %v1716 = vsel %vm1708, %v1707, 0
    %vm1718 = vcmask 1043456
    %v1720 = vsel %vm1718, %v1700, 0
    %v1723 = vsel %vm1718, %v1702, 0
    %1725 = vmatprep.subr.mxu0 %v1696
    %1726 = vmatpush1.msra.mxu0 %v1694
    %1727 = vmatprep.subr.mxu0 %v1723
    %1728 = vmatpush1.msra.mxu0 %v1720
    %1729 = vmatprep.subr.mxu0 0.0
    %1730 = vmatpush1.msra.mxu0 0.0
    %1731 = vmatprep.subr.mxu0 0.0
    %1732 = vmatpush1.msra.mxu0 0.0
    %1733 = vmatprep.subr.mxu0 0.0
    %1734 = vmatpush1.msra.mxu0 0.0
    %1735 = vmatprep.subr.mxu0 0.0
    %1736 = vmatpush1.msra.mxu0 0.0
    %1737 = vmatprep.subr.mxu0 0.0
    %1738 = vmatpush1.msra.mxu0 0.0
    %1739 = vmatprep.subr.mxu0 0.0
    %1740 = vmatpush1.msra.mxu0 0.0
    %1741 = vmatprep.subr.mxu0 0.0
    %1742 = vmatpush1.msra.mxu0 0.0
    %1743 = vmatprep.subr.mxu0 0.0
    %1744 = vmatpush1.msra.mxu0 0.0
    %1745 = vmatprep.subr.mxu0 0.0
    %1746 = vmatpush1.msra.mxu0 0.0
    %1747 = vmatprep.subr.mxu0 0.0
    %1748 = vmatpush1.msra.mxu0 0.0
    %1749 = vmatprep.subr.mxu0 0.0
    %1750 = vmatpush1.msra.mxu0 0.0
    %1751 = vmatprep.subr.mxu0 0.0
    %1752 = vmatpush1.msra.mxu0 0.0
    %1753 = vmatprep.subr.mxu0 0.0
    %1754 = vmatpush1.msra.mxu0 0.0
    %1755 = vmatprep.subr.mxu0 0.0
    %1756 = vmatpush1.msra.mxu0 0.0
    %1757 = vmatprep.subr.mxu0 0.0
    %1758 = vmatpush1.msra.mxu0 0.0
    %1759 = vmatprep.subr.mxu0 0.0
    %1760 = vmatpush1.msra.mxu0 0.0
    %1761 = vmatprep.subr.mxu0 0.0
    %1762 = vmatpush1.msra.mxu0 0.0
    %1763 = vmatprep.subr.mxu0 0.0
    %1764 = vmatpush1.msra.mxu0 0.0
    %1765 = vmatprep.subr.mxu0 0.0
    %1766 = vmatpush1.msra.mxu0 0.0
    %1767 = vmatprep.subr.mxu0 0.0
    %1768 = vmatpush1.msra.mxu0 0.0
    %1769 = vmatprep.subr.mxu0 0.0
    %1770 = vmatpush1.msra.mxu0 0.0
    %1771 = vmatprep.subr.mxu0 0.0
    %1772 = vmatpush1.msra.mxu0 0.0
    %1773 = vmatprep.subr.mxu0 0.0
    %1774 = vmatpush1.msra.mxu0 0.0
    %1775 = vmatprep.subr.mxu0 0.0
    %1776 = vmatpush1.msra.mxu0 0.0
    %1777 = vmatprep.subr.mxu0 0.0
    %1778 = vmatpush1.msra.mxu0 0.0
    %1779 = vmatprep.subr.mxu0 0.0
    %1780 = vmatpush1.msra.mxu0 0.0
    %1781 = vmatprep.subr.mxu0 0.0
    %1782 = vmatpush1.msra.mxu0 0.0
    %1783 = vmatprep.subr.mxu0 0.0
    %1784 = vmatpush1.msra.mxu0 0.0
    %1785 = vmatprep.subr.mxu0 0.0
    %1786 = vmatpush1.msra.mxu0 0.0
    %1787 = vmatprep.subr.mxu0 0.0
    %1788 = vmatpush1.msra.mxu0 0.0
    %1789 = vmatprep.mubr.f32.mxu0 0.0
    %1790 = vmatmul.mubr.f32.gmra.mrb[0].mxu0 %v1710
    %v1791 = vpop.f32.mrb[0].mxu0
    %v1792 = vadd.f32 0.0, %v1791
    %v1793 = vpop.f32.mrb[0].mxu0
    %v1794 = vadd.f32 0.0, %v1793
    %1795 = vmatprep.mubr.f32.mxu0 0.0
    %1796 = vmatmul.mubr.f32.gmra.mrb[0].mxu0 %v1713
    %v1797 = vpop.f32.mrb[0].mxu0
    %v1798 = vadd.f32 0.0, %v1797
    %v1799 = vpop.f32.mrb[0].mxu0
    %v1800 = vadd.f32 0.0, %v1799
    %1801 = vmatprep.mubr.f32.mxu0 0.0
    %1802 = vmatmul.mubr.f32.gmra.mrb[0].mxu0 %v1716
    %v1803 = vpop.f32.mrb[0].mxu0
    %v1804 = vadd.f32 0.0, %v1803
    %v1805 = vpop.f32.mrb[0].mxu0
    %v1806 = vadd.f32 0.0, %v1805
    %1807 = vdwg.mxu0
    %v1809 = vsel %vm1708, %v1575, 0
    %v1812 = vsel %vm1708, %v1576, 0
    %v1815 = vsel %vm1708, %v1577, 0
    %v1818 = vsel %vm1718, %v1571, 0
    %v1821 = vsel %vm1718, %v1573, 0
    %1823 = vmatprep.subr.mxu0 %v1567
    %1824 = vmatpush1.msra.mxu0 %v1565
    %1825 = vmatprep.subr.mxu0 %v1821
    %1826 = vmatpush1.msra.mxu0 %v1818
    %1827 = vmatprep.subr.mxu0 0.0
    %1828 = vmatpush1.msra.mxu0 0.0
    %1829 = vmatprep.subr.mxu0 0.0
    %1830 = vmatpush1.msra.mxu0 0.0
    %1831 = vmatprep.subr.mxu0 0.0
    %1832 = vmatpush1.msra.mxu0 0.0
    %1833 = vmatprep.subr.mxu0 0.0
    %1834 = vmatpush1.msra.mxu0 0.0
    %1835 = vmatprep.subr.mxu0 0.0
    %1836 = vmatpush1.msra.mxu0 0.0
    %1837 = vmatprep.subr.mxu0 0.0
    %1838 = vmatpush1.msra.mxu0 0.0
    %1839 = vmatprep.subr.mxu0 0.0
    %1840 = vmatpush1.msra.mxu0 0.0
    %1841 = vmatprep.subr.mxu0 0.0
    %1842 = vmatpush1.msra.mxu0 0.0
    %1843 = vmatprep.subr.mxu0 0.0
    %1844 = vmatpush1.msra.mxu0 0.0
    %1845 = vmatprep.subr.mxu0 0.0
    %1846 = vmatpush1.msra.mxu0 0.0
    %1847 = vmatprep.subr.mxu0 0.0
    %1848 = vmatpush1.msra.mxu0 0.0
    %1849 = vmatprep.subr.mxu0 0.0
    %1850 = vmatpush1.msra.mxu0 0.0
    %1851 = vmatprep.subr.mxu0 0.0
    %1852 = vmatpush1.msra.mxu0 0.0
    %1853 = vmatprep.subr.mxu0 0.0
    %1854 = vmatpush1.msra.mxu0 0.0
    %1855 = vmatprep.subr.mxu0 0.0
    %1856 = vmatpush1.msra.mxu0 0.0
    %1857 = vmatprep.subr.mxu0 0.0
    %1858 = vmatpush1.msra.mxu0 0.0
    %1859 = vmatprep.subr.mxu0 0.0
    %1860 = vmatpush1.msra.mxu0 0.0
    %1861 = vmatprep.subr.mxu0 0.0
    %1862 = vmatpush1.msra.mxu0 0.0
    %1863 = vmatprep.subr.mxu0 0.0
    %1864 = vmatpush1.msra.mxu0 0.0
    %1865 = vmatprep.subr.mxu0 0.0
    %1866 = vmatpush1.msra.mxu0 0.0
    %1867 = vmatprep.subr.mxu0 0.0
    %1868 = vmatpush1.msra.mxu0 0.0
    %1869 = vmatprep.subr.mxu0 0.0
    %1870 = vmatpush1.msra.mxu0 0.0
    %1871 = vmatprep.subr.mxu0 0.0
    %1872 = vmatpush1.msra.mxu0 0.0
    %1873 = vmatprep.subr.mxu0 0.0
    %1874 = vmatpush1.msra.mxu0 0.0
    %1875 = vmatprep.subr.mxu0 0.0
    %1876 = vmatpush1.msra.mxu0 0.0
    %1877 = vmatprep.subr.mxu0 0.0
    %1878 = vmatpush1.msra.mxu0 0.0
    %1879 = vmatprep.subr.mxu0 0.0
    %1880 = vmatpush1.msra.mxu0 0.0
    %1881 = vmatprep.subr.mxu0 0.0
    %1882 = vmatpush1.msra.mxu0 0.0
    %1883 = vmatprep.subr.mxu0 0.0
    %1884 = vmatpush1.msra.mxu0 0.0
    %1885 = vmatprep.subr.mxu0 0.0
    %1886 = vmatpush1.msra.mxu0 0.0
    %1887 = vmatprep.mubr.f32.mxu0 0.0
    %1888 = vmatmul.mubr.f32.gmra.mrb[0].mxu0 %v1809
    %v1889 = vpop.f32.mrb[0].mxu0
    %v1890 = vadd.f32 %v1792, %v1889
    %v1891 = vpop.f32.mrb[0].mxu0
    %v1892 = vadd.f32 %v1794, %v1891
    %1893 = vmatprep.mubr.f32.mxu0 0.0
    %1894 = vmatmul.mubr.f32.gmra.mrb[0].mxu0 %v1812
    %v1895 = vpop.f32.mrb[0].mxu0
    %v1896 = vadd.f32 %v1798, %v1895
    %v1897 = vpop.f32.mrb[0].mxu0
    %v1898 = vadd.f32 %v1800, %v1897
    %1899 = vmatprep.mubr.f32.mxu0 0.0
    %1900 = vmatmul.mubr.f32.gmra.mrb[0].mxu0 %v1815
    %v1901 = vpop.f32.mrb[0].mxu0
    %v1902 = vadd.f32 %v1804, %v1901
    %v1903 = vpop.f32.mrb[0].mxu0
    %v1904 = vadd.f32 %v1806, %v1903
    %1905 = vdwg.mxu0
    %s1906 = scalar_lea.vmem %s7, 768
    %v1907 = vld [vmem:[%s1906] sm:$0xff]
    %v1908 = vld [vmem:[%s1906 + $0x8] sm:$0xff]
    %v1909 = vld [vmem:[%s1906 + $0x10] sm:$0xff]
    %v1910 = vld [vmem:[%s1906 + $0x18] sm:$0xff]
    %v1911 = vld [vmem:[%s1906 + $0x20] sm:$0xff]
    %v1912 = vld [vmem:[%s1906 + $0x28] sm:$0xff]
    %v1913 = vld [vmem:[%s1906 + $0x30] sm:$0xff]
    %v1914 = vld [vmem:[%s1906 + $0x38] sm:$0xff]
    %v1915 = vld [vmem:[%s1906 + $0x40] sm:$0xff]
    %v1916 = vld [vmem:[%s1906 + $0x48] sm:$0xff]
    %v1917 = vld [vmem:[%s1906 + $0x50] sm:$0xff]
    %v1918 = vld [vmem:[%s1906 + $0x58] sm:$0xff]
    %v1919 = vld [vmem:[%s1906 + $0x60] sm:$0xff]
    %v1920 = vld [vmem:[%s1906 + $0x68] sm:$0xff]
    %v1921 = vld [vmem:[%s1906 + $0x70] sm:$0xff]
    %v1922 = vld [vmem:[%s1906 + $0x78] sm:$0xff]
    %v1923 = vld [vmem:[%s1906 + $0x80] sm:$0xff]
    %v1924 = vld [vmem:[%s1906 + $0x88] sm:$0xff]
    %v1925 = vld [vmem:[%s1906 + $0x90] sm:$0xff]
    %v1926 = vld [vmem:[%s1906 + $0x98] sm:$0xff]
    %v1927 = vld [vmem:[%s1906 + $0xa0] sm:$0xff]
    %v1928 = vld [vmem:[%s1906 + $0xa8] sm:$0xff]
    %v1929 = vld [vmem:[%s1906 + $0xb0] sm:$0xff]
    %v1930 = vld [vmem:[%s1906 + $0xb8] sm:$0xff]
    %v1931 = vld [vmem:[%s1906 + $0xc0] sm:$0xff]
    %v1932 = vld [vmem:[%s1906 + $0xc8] sm:$0xff]
    %v1933 = vld [vmem:[%s1906 + $0xd0] sm:$0xff]
    %v1934 = vld [vmem:[%s1906 + $0xd8] sm:$0xff]
    %v1935 = vld [vmem:[%s1906 + $0xe0] sm:$0xff]
    %v1936 = vld [vmem:[%s1906 + $0xe8] sm:$0xff]
    %v1937 = vld [vmem:[%s1906 + $0xf0] sm:$0xff]
    %v1938 = vld [vmem:[%s1906 + $0xf8] sm:$0xff]
    %v1939 = vld [vmem:[%s1906 + $0x100] sm:$0xff]
    %v1940 = vld [vmem:[%s1906 + $0x108] sm:$0xff]
    %v1941 = vld [vmem:[%s1906 + $0x110] sm:$0xff]
    %v1942 = vld [vmem:[%s1906 + $0x118] sm:$0xff]
    %v1943 = vld [vmem:[%s1906 + $0x120] sm:$0xff]
    %v1944 = vld [vmem:[%s1906 + $0x128] sm:$0xff]
    %v1945 = vld [vmem:[%s1906 + $0x130] sm:$0xff]
    %v1946 = vld [vmem:[%s1906 + $0x138] sm:$0xff]
    %v1947 = vld [vmem:[%s1906 + $0x140] sm:$0xff]
    %v1948 = vld [vmem:[%s1906 + $0x148] sm:$0xff]
    %v1949 = vld [vmem:[%s1906 + $0x150] sm:$0xff]
    %v1950 = vld [vmem:[%s1906 + $0x158] sm:$0xff]
    %v1951 = vld [vmem:[%s1906 + $0x160] sm:$0xff]
    %v1952 = vld [vmem:[%s1906 + $0x168] sm:$0xff]
    %v1953 = vld [vmem:[%s1906 + $0x170] sm:$0xff]
    %v1954 = vld [vmem:[%s1906 + $0x178] sm:$0xff]
    %1955 = vmatprep.subr.mxu0 %v1908
    %1956 = vmatpush1.msra.mxu0 %v1907
    %1957 = vmatprep.subr.mxu0 %v1910
    %1958 = vmatpush1.msra.mxu0 %v1909
    %1959 = vmatprep.subr.mxu0 %v1912
    %1960 = vmatpush1.msra.mxu0 %v1911
    %1961 = vmatprep.subr.mxu0 %v1914
    %1962 = vmatpush1.msra.mxu0 %v1913
    %1963 = vmatprep.subr.mxu0 %v1916
    %1964 = vmatpush1.msra.mxu0 %v1915
    %1965 = vmatprep.subr.mxu0 %v1918
    %1966 = vmatpush1.msra.mxu0 %v1917
    %1967 = vmatprep.subr.mxu0 %v1920
    %1968 = vmatpush1.msra.mxu0 %v1919
    %1969 = vmatprep.subr.mxu0 %v1922
    %1970 = vmatpush1.msra.mxu0 %v1921
    %1971 = vmatprep.subr.mxu0 %v1924
    %1972 = vmatpush1.msra.mxu0 %v1923
    %1973 = vmatprep.subr.mxu0 %v1926
    %1974 = vmatpush1.msra.mxu0 %v1925
    %1975 = vmatprep.subr.mxu0 %v1928
    %1976 = vmatpush1.msra.mxu0 %v1927
    %1977 = vmatprep.subr.mxu0 %v1930
    %1978 = vmatpush1.msra.mxu0 %v1929
    %1979 = vmatprep.subr.mxu0 %v1932
    %1980 = vmatpush1.msra.mxu0 %v1931
    %1981 = vmatprep.subr.mxu0 %v1934
    %1982 = vmatpush1.msra.mxu0 %v1933
    %1983 = vmatprep.subr.mxu0 %v1936
    %1984 = vmatpush1.msra.mxu0 %v1935
    %1985 = vmatprep.subr.mxu0 %v1938
    %1986 = vmatpush1.msra.mxu0 %v1937
    %1987 = vmatprep.subr.mxu0 %v1940
    %1988 = vmatpush1.msra.mxu0 %v1939
    %1989 = vmatprep.subr.mxu0 %v1942
    %1990 = vmatpush1.msra.mxu0 %v1941
    %1991 = vmatprep.subr.mxu0 %v1944
    %1992 = vmatpush1.msra.mxu0 %v1943
    %1993 = vmatprep.subr.mxu0 %v1946
    %1994 = vmatpush1.msra.mxu0 %v1945
    %1995 = vmatprep.subr.mxu0 %v1948
    %1996 = vmatpush1.msra.mxu0 %v1947
    %1997 = vmatprep.subr.mxu0 %v1950
    %1998 = vmatpush1.msra.mxu0 %v1949
    %1999 = vmatprep.subr.mxu0 %v1952
    %2000 = vmatpush1.msra.mxu0 %v1951
    %2001 = vmatprep.subr.mxu0 %v1954
    %2002 = vmatpush1.msra.mxu0 %v1953
    %2003 = vmatprep.subr.mxu0 0.0
    %2004 = vmatpush1.msra.mxu0 0.0
    %2005 = vmatprep.subr.mxu0 0.0
    %2006 = vmatpush1.msra.mxu0 0.0
    %2007 = vmatprep.subr.mxu0 0.0
    %2008 = vmatpush1.msra.mxu0 0.0
    %2009 = vmatprep.subr.mxu0 0.0
    %2010 = vmatpush1.msra.mxu0 0.0
    %2011 = vmatprep.subr.mxu0 0.0
    %2012 = vmatpush1.msra.mxu0 0.0
    %2013 = vmatprep.subr.mxu0 0.0
    %2014 = vmatpush1.msra.mxu0 0.0
    %2015 = vmatprep.subr.mxu0 0.0
    %2016 = vmatpush1.msra.mxu0 0.0
    %2017 = vmatprep.subr.mxu0 0.0
    %2018 = vmatpush1.msra.mxu0 0.0
    %2019 = vmatprep.mubr.f32.mxu0 %v1493
    %2020 = vmatmul.mubr.f32.gmra.mrb[0].mxu0 %v1440
    %v2021 = vpop.f32.mrb[0].mxu0
    %v2022 = vadd.f32 0.0, %v2021
    %v2023 = vpop.f32.mrb[0].mxu0
    %v2024 = vadd.f32 0.0, %v2023
    %2025 = vmatprep.mubr.f32.mxu0 %v1496
    %2026 = vmatmul.mubr.f32.gmra.mrb[0].mxu0 %v1442
    %v2027 = vpop.f32.mrb[0].mxu0
    %v2028 = vadd.f32 0.0, %v2027
    %v2029 = vpop.f32.mrb[0].mxu0
    %v2030 = vadd.f32 0.0, %v2029
    %2031 = vdwg.mxu0
    %s2032 = scalar_lea.vmem %s8, 48
    %v2033 = vld [vmem:[%s2032] sm:$0xff]
    %v2034 = vld [vmem:[%s2032 + $0x8] sm:$0xff]
    %v2035 = vld [vmem:[%s2032 + $0x10] sm:$0xff]
    %v2037 = vsel %vm1708, %v2033, 0
    %v2040 = vsel %vm1708, %v2034, 0
    %v2043 = vsel %vm1708, %v2035, 0
    %v2046 = vsel %vm1718, %v2028, 0
    %v2049 = vsel %vm1718, %v2030, 0
    %2051 = vmatprep.subr.mxu0 %v2024
    %2052 = vmatpush1.msra.mxu0 %v2022
    %2053 = vmatprep.subr.mxu0 %v2049
    %2054 = vmatpush1.msra.mxu0 %v2046
    %2055 = vmatprep.subr.mxu0 0.0
    %2056 = vmatpush1.msra.mxu0 0.0
    %2057 = vmatprep.subr.mxu0 0.0
    %2058 = vmatpush1.msra.mxu0 0.0
    %2059 = vmatprep.subr.mxu0 0.0
    %2060 = vmatpush1.msra.mxu0 0.0
    %2061 = vmatprep.subr.mxu0 0.0
    %2062 = vmatpush1.msra.mxu0 0.0
    %2063 = vmatprep.subr.mxu0 0.0
    %2064 = vmatpush1.msra.mxu0 0.0
    %2065 = vmatprep.subr.mxu0 0.0
    %2066 = vmatpush1.msra.mxu0 0.0
    %2067 = vmatprep.subr.mxu0 0.0
    %2068 = vmatpush1.msra.mxu0 0.0
    %2069 = vmatprep.subr.mxu0 0.0
    %2070 = vmatpush1.msra.mxu0 0.0
    %2071 = vmatprep.subr.mxu0 0.0
    %2072 = vmatpush1.msra.mxu0 0.0
    %2073 = vmatprep.subr.mxu0 0.0
    %2074 = vmatpush1.msra.mxu0 0.0
    %2075 = vmatprep.subr.mxu0 0.0
    %2076 = vmatpush1.msra.mxu0 0.0
    %2077 = vmatprep.subr.mxu0 0.0
    %2078 = vmatpush1.msra.mxu0 0.0
    %2079 = vmatprep.subr.mxu0 0.0
    %2080 = vmatpush1.msra.mxu0 0.0
    %2081 = vmatprep.subr.mxu0 0.0
    %2082 = vmatpush1.msra.mxu0 0.0
    %2083 = vmatprep.subr.mxu0 0.0
    %2084 = vmatpush1.msra.mxu0 0.0
    %2085 = vmatprep.subr.mxu0 0.0
    %2086 = vmatpush1.msra.mxu0 0.0
    %2087 = vmatprep.subr.mxu0 0.0
    %2088 = vmatpush1.msra.mxu0 0.0
    %2089 = vmatprep.subr.mxu0 0.0
    %2090 = vmatpush1.msra.mxu0 0.0
    %2091 = vmatprep.subr.mxu0 0.0
    %2092 = vmatpush1.msra.mxu0 0.0
    %2093 = vmatprep.subr.mxu0 0.0
    %2094 = vmatpush1.msra.mxu0 0.0
    %2095 = vmatprep.subr.mxu0 0.0
    %2096 = vmatpush1.msra.mxu0 0.0
    %2097 = vmatprep.subr.mxu0 0.0
    %2098 = vmatpush1.msra.mxu0 0.0
    %2099 = vmatprep.subr.mxu0 0.0
    %2100 = vmatpush1.msra.mxu0 0.0
    %2101 = vmatprep.subr.mxu0 0.0
    %2102 = vmatpush1.msra.mxu0 0.0
    %2103 = vmatprep.subr.mxu0 0.0
    %2104 = vmatpush1.msra.mxu0 0.0
    %2105 = vmatprep.subr.mxu0 0.0
    %2106 = vmatpush1.msra.mxu0 0.0
    %2107 = vmatprep.subr.mxu0 0.0
    %2108 = vmatpush1.msra.mxu0 0.0
    %2109 = vmatprep.subr.mxu0 0.0
    %2110 = vmatpush1.msra.mxu0 0.0
    %2111 = vmatprep.subr.mxu0 0.0
    %2112 = vmatpush1.msra.mxu0 0.0
    %2113 = vmatprep.subr.mxu0 0.0
    %2114 = vmatpush1.msra.mxu0 0.0
    %2115 = vmatprep.mubr.f32.mxu0 0.0
    %2116 = vmatmul.mubr.f32.gmra.mrb[0].mxu0 %v2037
    %v2117 = vpop.f32.mrb[0].mxu0
    %v2118 = vadd.f32 0.0, %v2117
    %v2119 = vpop.f32.mrb[0].mxu0
    %v2120 = vadd.f32 0.0, %v2119
    %2121 = vmatprep.mubr.f32.mxu0 0.0
    %2122 = vmatmul.mubr.f32.gmra.mrb[0].mxu0 %v2040
    %v2123 = vpop.f32.mrb[0].mxu0
    %v2124 = vadd.f32 0.0, %v2123
    %v2125 = vpop.f32.mrb[0].mxu0
    %v2126 = vadd.f32 0.0, %v2125
    %2127 = vmatprep.mubr.f32.mxu0 0.0
    %2128 = vmatmul.mubr.f32.gmra.mrb[0].mxu0 %v2043
    %v2129 = vpop.f32.mrb[0].mxu0
    %v2130 = vadd.f32 0.0, %v2129
    %v2131 = vpop.f32.mrb[0].mxu0
    %v2132 = vadd.f32 0.0, %v2131
    %2133 = vdwg.mxu0
    %v2134 = vadd.f32 %v1890, %v2118
    %v2135 = vadd.f32 %v1892, %v2120
    %v2136 = vadd.f32 %v1896, %v2124
    %v2137 = vadd.f32 %v1898, %v2126
    %v2138 = vadd.f32 %v1902, %v2130
    %v2139 = vadd.f32 %v1904, %v2132
    %s2140 = scalar_lea.vmem %s7, 1152
    %v2141 = vld [vmem:[%s2140] sm:$0xff]
    %v2142 = vld [vmem:[%s2140 + $0x8] sm:$0xff]
    %v2143 = vld [vmem:[%s2140 + $0x10] sm:$0xff]
    %v2144 = vld [vmem:[%s2140 + $0x18] sm:$0xff]
    %v2145 = vld [vmem:[%s2140 + $0x20] sm:$0xff]
    %v2146 = vld [vmem:[%s2140 + $0x28] sm:$0xff]
    %v2147 = vld [vmem:[%s2140 + $0x30] sm:$0xff]
    %v2148 = vld [vmem:[%s2140 + $0x38] sm:$0xff]
    %v2149 = vld [vmem:[%s2140 + $0x40] sm:$0xff]
    %v2150 = vld [vmem:[%s2140 + $0x48] sm:$0xff]
    %v2151 = vld [vmem:[%s2140 + $0x50] sm:$0xff]
    %v2152 = vld [vmem:[%s2140 + $0x58] sm:$0xff]
    %v2153 = vld [vmem:[%s2140 + $0x60] sm:$0xff]
    %v2154 = vld [vmem:[%s2140 + $0x68] sm:$0xff]
    %v2155 = vld [vmem:[%s2140 + $0x70] sm:$0xff]
    %v2156 = vld [vmem:[%s2140 + $0x78] sm:$0xff]
    %v2157 = vld [vmem:[%s2140 + $0x80] sm:$0xff]
    %v2158 = vld [vmem:[%s2140 + $0x88] sm:$0xff]
    %v2159 = vld [vmem:[%s2140 + $0x90] sm:$0xff]
    %v2160 = vld [vmem:[%s2140 + $0x98] sm:$0xff]
    %v2161 = vld [vmem:[%s2140 + $0xa0] sm:$0xff]
    %v2162 = vld [vmem:[%s2140 + $0xa8] sm:$0xff]
    %v2163 = vld [vmem:[%s2140 + $0xb0] sm:$0xff]
    %v2164 = vld [vmem:[%s2140 + $0xb8] sm:$0xff]
    %v2165 = vld [vmem:[%s2140 + $0xc0] sm:$0xff]
    %v2166 = vld [vmem:[%s2140 + $0xc8] sm:$0xff]
    %v2167 = vld [vmem:[%s2140 + $0xd0] sm:$0xff]
    %v2168 = vld [vmem:[%s2140 + $0xd8] sm:$0xff]
    %v2169 = vld [vmem:[%s2140 + $0xe0] sm:$0xff]
    %v2170 = vld [vmem:[%s2140 + $0xe8] sm:$0xff]
    %v2171 = vld [vmem:[%s2140 + $0xf0] sm:$0xff]
    %v2172 = vld [vmem:[%s2140 + $0xf8] sm:$0xff]
    %v2173 = vld [vmem:[%s2140 + $0x100] sm:$0xff]
    %v2174 = vld [vmem:[%s2140 + $0x108] sm:$0xff]
    %v2175 = vld [vmem:[%s2140 + $0x110] sm:$0xff]
    %v2176 = vld [vmem:[%s2140 + $0x118] sm:$0xff]
    %v2177 = vld [vmem:[%s2140 + $0x120] sm:$0xff]
    %v2178 = vld [vmem:[%s2140 + $0x128] sm:$0xff]
    %v2179 = vld [vmem:[%s2140 + $0x130] sm:$0xff]
    %v2180 = vld [vmem:[%s2140 + $0x138] sm:$0xff]
    %v2181 = vld [vmem:[%s2140 + $0x140] sm:$0xff]
    %v2182 = vld [vmem:[%s2140 + $0x148] sm:$0xff]
    %v2183 = vld [vmem:[%s2140 + $0x150] sm:$0xff]
    %v2184 = vld [vmem:[%s2140 + $0x158] sm:$0xff]
    %v2185 = vld [vmem:[%s2140 + $0x160] sm:$0xff]
    %v2186 = vld [vmem:[%s2140 + $0x168] sm:$0xff]
    %v2187 = vld [vmem:[%s2140 + $0x170] sm:$0xff]
    %v2188 = vld [vmem:[%s2140 + $0x178] sm:$0xff]
    %2189 = vmatprep.subr.mxu0 %v2142
    %2190 = vmatpush1.msra.mxu0 %v2141
    %2191 = vmatprep.subr.mxu0 %v2144
    %2192 = vmatpush1.msra.mxu0 %v2143
    %2193 = vmatprep.subr.mxu0 %v2146
    %2194 = vmatpush1.msra.mxu0 %v2145
    %2195 = vmatprep.subr.mxu0 %v2148
    %2196 = vmatpush1.msra.mxu0 %v2147
    %2197 = vmatprep.subr.mxu0 %v2150
    %2198 = vmatpush1.msra.mxu0 %v2149
    %2199 = vmatprep.subr.mxu0 %v2152
    %2200 = vmatpush1.msra.mxu0 %v2151
    %2201 = vmatprep.subr.mxu0 %v2154
    %2202 = vmatpush1.msra.mxu0 %v2153
    %2203 = vmatprep.subr.mxu0 %v2156
    %2204 = vmatpush1.msra.mxu0 %v2155
    %2205 = vmatprep.subr.mxu0 %v2158
    %2206 = vmatpush1.msra.mxu0 %v2157
    %2207 = vmatprep.subr.mxu0 %v2160
    %2208 = vmatpush1.msra.mxu0 %v2159
    %2209 = vmatprep.subr.mxu0 %v2162
    %2210 = vmatpush1.msra.mxu0 %v2161
    %2211 = vmatprep.subr.mxu0 %v2164
    %2212 = vmatpush1.msra.mxu0 %v2163
    %2213 = vmatprep.subr.mxu0 %v2166
    %2214 = vmatpush1.msra.mxu0 %v2165
    %2215 = vmatprep.subr.mxu0 %v2168
    %2216 = vmatpush1.msra.mxu0 %v2167
    %2217 = vmatprep.subr.mxu0 %v2170
    %2218 = vmatpush1.msra.mxu0 %v2169
    %2219 = vmatprep.subr.mxu0 %v2172
    %2220 = vmatpush1.msra.mxu0 %v2171
    %2221 = vmatprep.subr.mxu0 %v2174
    %2222 = vmatpush1.msra.mxu0 %v2173
    %2223 = vmatprep.subr.mxu0 %v2176
    %2224 = vmatpush1.msra.mxu0 %v2175
    %2225 = vmatprep.subr.mxu0 %v2178
    %2226 = vmatpush1.msra.mxu0 %v2177
    %2227 = vmatprep.subr.mxu0 %v2180
    %2228 = vmatpush1.msra.mxu0 %v2179
    %2229 = vmatprep.subr.mxu0 %v2182
    %2230 = vmatpush1.msra.mxu0 %v2181
    %2231 = vmatprep.subr.mxu0 %v2184
    %2232 = vmatpush1.msra.mxu0 %v2183
    %2233 = vmatprep.subr.mxu0 %v2186
    %2234 = vmatpush1.msra.mxu0 %v2185
    %2235 = vmatprep.subr.mxu0 %v2188
    %2236 = vmatpush1.msra.mxu0 %v2187
    %2237 = vmatprep.subr.mxu0 0.0
    %2238 = vmatpush1.msra.mxu0 0.0
    %2239 = vmatprep.subr.mxu0 0.0
    %2240 = vmatpush1.msra.mxu0 0.0
    %2241 = vmatprep.subr.mxu0 0.0
    %2242 = vmatpush1.msra.mxu0 0.0
    %2243 = vmatprep.subr.mxu0 0.0
    %2244 = vmatpush1.msra.mxu0 0.0
    %2245 = vmatprep.subr.mxu0 0.0
    %2246 = vmatpush1.msra.mxu0 0.0
    %2247 = vmatprep.subr.mxu0 0.0
    %2248 = vmatpush1.msra.mxu0 0.0
    %2249 = vmatprep.subr.mxu0 0.0
    %2250 = vmatpush1.msra.mxu0 0.0
    %2251 = vmatprep.subr.mxu0 0.0
    %2252 = vmatpush1.msra.mxu0 0.0
    %2253 = vmatprep.mubr.f32.mxu0 %v1493
    %2254 = vmatmul.mubr.f32.gmra.mrb[0].mxu0 %v1440
    %v2255 = vpop.f32.mrb[0].mxu0
    %v2256 = vadd.f32 0.0, %v2255
    %v2257 = vpop.f32.mrb[0].mxu0
    %v2258 = vadd.f32 0.0, %v2257
    %2259 = vmatprep.mubr.f32.mxu0 %v1496
    %2260 = vmatmul.mubr.f32.gmra.mrb[0].mxu0 %v1442
    %v2261 = vpop.f32.mrb[0].mxu0
    %v2262 = vadd.f32 0.0, %v2261
    %v2263 = vpop.f32.mrb[0].mxu0
    %v2264 = vadd.f32 0.0, %v2263
    %2265 = vdwg.mxu0
    %s2266 = scalar_lea.vmem %s8, 72
    %v2267 = vld [vmem:[%s2266] sm:$0xff]
    %v2268 = vld [vmem:[%s2266 + $0x8] sm:$0xff]
    %v2269 = vld [vmem:[%s2266 + $0x10] sm:$0xff]
    %v2271 = vsel %vm1708, %v2267, 0
    %v2274 = vsel %vm1708, %v2268, 0
    %v2277 = vsel %vm1708, %v2269, 0
    %v2280 = vsel %vm1718, %v2262, 0
    %v2283 = vsel %vm1718, %v2264, 0
    %2285 = vmatprep.subr.mxu0 %v2258
    %2286 = vmatpush1.msra.mxu0 %v2256
    %2287 = vmatprep.subr.mxu0 %v2283
    %2288 = vmatpush1.msra.mxu0 %v2280
    %2289 = vmatprep.subr.mxu0 0.0
    %2290 = vmatpush1.msra.mxu0 0.0
    %2291 = vmatprep.subr.mxu0 0.0
    %2292 = vmatpush1.msra.mxu0 0.0
    %2293 = vmatprep.subr.mxu0 0.0
    %2294 = vmatpush1.msra.mxu0 0.0
    %2295 = vmatprep.subr.mxu0 0.0
    %2296 = vmatpush1.msra.mxu0 0.0
    %2297 = vmatprep.subr.mxu0 0.0
    %2298 = vmatpush1.msra.mxu0 0.0
    %2299 = vmatprep.subr.mxu0 0.0
    %2300 = vmatpush1.msra.mxu0 0.0
    %2301 = vmatprep.subr.mxu0 0.0
    %2302 = vmatpush1.msra.mxu0 0.0
    %2303 = vmatprep.subr.mxu0 0.0
    %2304 = vmatpush1.msra.mxu0 0.0
    %2305 = vmatprep.subr.mxu0 0.0
    %2306 = vmatpush1.msra.mxu0 0.0
    %2307 = vmatprep.subr.mxu0 0.0
    %2308 = vmatpush1.msra.mxu0 0.0
    %2309 = vmatprep.subr.mxu0 0.0
    %2310 = vmatpush1.msra.mxu0 0.0
    %2311 = vmatprep.subr.mxu0 0.0
    %2312 = vmatpush1.msra.mxu0 0.0
    %2313 = vmatprep.subr.mxu0 0.0
    %2314 = vmatpush1.msra.mxu0 0.0
    %2315 = vmatprep.subr.mxu0 0.0
    %2316 = vmatpush1.msra.mxu0 0.0
    %2317 = vmatprep.subr.mxu0 0.0
    %2318 = vmatpush1.msra.mxu0 0.0
    %2319 = vmatprep.subr.mxu0 0.0
    %2320 = vmatpush1.msra.mxu0 0.0
    %2321 = vmatprep.subr.mxu0 0.0
    %2322 = vmatpush1.msra.mxu0 0.0
    %2323 = vmatprep.subr.mxu0 0.0
    %2324 = vmatpush1.msra.mxu0 0.0
    %2325 = vmatprep.subr.mxu0 0.0
    %2326 = vmatpush1.msra.mxu0 0.0
    %2327 = vmatprep.subr.mxu0 0.0
    %2328 = vmatpush1.msra.mxu0 0.0
    %2329 = vmatprep.subr.mxu0 0.0
    %2330 = vmatpush1.msra.mxu0 0.0
    %2331 = vmatprep.subr.mxu0 0.0
    %2332 = vmatpush1.msra.mxu0 0.0
    %2333 = vmatprep.subr.mxu0 0.0
    %2334 = vmatpush1.msra.mxu0 0.0
    %2335 = vmatprep.subr.mxu0 0.0
    %2336 = vmatpush1.msra.mxu0 0.0
    %2337 = vmatprep.subr.mxu0 0.0
    %2338 = vmatpush1.msra.mxu0 0.0
    %2339 = vmatprep.subr.mxu0 0.0
    %2340 = vmatpush1.msra.mxu0 0.0
    %2341 = vmatprep.subr.mxu0 0.0
    %2342 = vmatpush1.msra.mxu0 0.0
    %2343 = vmatprep.subr.mxu0 0.0
    %2344 = vmatpush1.msra.mxu0 0.0
    %2345 = vmatprep.subr.mxu0 0.0
    %2346 = vmatpush1.msra.mxu0 0.0
    %2347 = vmatprep.subr.mxu0 0.0
    %2348 = vmatpush1.msra.mxu0 0.0
    %2349 = vmatprep.mubr.f32.mxu0 0.0
    %2350 = vmatmul.mubr.f32.gmra.mrb[0].mxu0 %v2271
    %v2351 = vpop.f32.mrb[0].mxu0
    %v2352 = vadd.f32 0.0, %v2351
    %v2353 = vpop.f32.mrb[0].mxu0
    %v2354 = vadd.f32 0.0, %v2353
    %2355 = vmatprep.mubr.f32.mxu0 0.0
    %2356 = vmatmul.mubr.f32.gmra.mrb[0].mxu0 %v2274
    %v2357 = vpop.f32.mrb[0].mxu0
    %v2358 = vadd.f32 0.0, %v2357
    %v2359 = vpop.f32.mrb[0].mxu0
    %v2360 = vadd.f32 0.0, %v2359
    %2361 = vmatprep.mubr.f32.mxu0 0.0
    %2362 = vmatmul.mubr.f32.gmra.mrb[0].mxu0 %v2277
    %v2363 = vpop.f32.mrb[0].mxu0
    %v2364 = vadd.f32 0.0, %v2363
    %v2365 = vpop.f32.mrb[0].mxu0
    %v2366 = vadd.f32 0.0, %v2365
    %2367 = vdwg.mxu0
    %v2368 = vadd.f32 %v2134, %v2352
    %v2369 = vadd.f32 %v2135, %v2354
    %v2370 = vadd.f32 %v2136, %v2358
    %v2371 = vadd.f32 %v2137, %v2360
    %v2372 = vadd.f32 %v2138, %v2364
    %v2373 = vadd.f32 %v2139, %v2366
    %v2374 = vld [vmem:[%s9] sm:$0x3]
    %v2376 = vlaneseq
    %v2377 = vshrl.u32 %v2376, 7
    %v2378 = vsub.s32 0, %v2377
    %v2379 = vrot.slane %v2374, %v2378
    %v2380 = vlaneseq
    %v2381 = vshrl.u32 %v2380, 7
    %v2382 = vsub.s32 1, %v2381
    %v2383 = vrot.slane %v2374, %v2382
    %v2386 = vadd.f32 %v2368, %v2379
    %v2387 = vadd.f32 %v2369, %v2383
    %v2388 = vadd.f32 %v2370, %v2379
    %v2389 = vadd.f32 %v2371, %v2383
    %v2390 = vadd.f32 %v2372, %v2379
    %v2391 = vadd.f32 %v2373, %v2383
    %v2392 = vmax.f32 %v2386, 0.0
    %v2393 = vmax.f32 %v2387, 0.0
    %v2394 = vmax.f32 %v2388, 0.0
    %v2395 = vmax.f32 %v2389, 0.0
    %v2396 = vmax.f32 %v2390, 0.0
    %v2397 = vmax.f32 %v2391, 0.0
    %v2398 = vld [vmem:[#allocation2] sm:$0xff]
    %v2399 = vld [vmem:[#allocation2 + $0x8] sm:$0xff]
    %v2400 = vld [vmem:[#allocation2 + $0x10] sm:$0xff]
    %v2401 = vld [vmem:[#allocation2 + $0x18] sm:$0xff]
    %v2402 = vld [vmem:[#allocation2 + $0x20] sm:$0xff]
    %v2403 = vld [vmem:[#allocation2 + $0x28] sm:$0xff]
    %v2404 = vld [vmem:[#allocation2 + $0x30] sm:$0xff]
    %v2405 = vld [vmem:[#allocation2 + $0x38] sm:$0xff]
    %v2406 = vld [vmem:[#allocation2 + $0x40] sm:$0xff]
    %v2407 = vld [vmem:[#allocation2 + $0x48] sm:$0xff]
    %v2408 = vld [vmem:[#allocation2 + $0x50] sm:$0xff]
    %v2409 = vld [vmem:[#allocation2 + $0x58] sm:$0xff]
    %v2410 = vld [vmem:[#allocation2 + $0x60] sm:$0xff]
    %v2411 = vld [vmem:[#allocation2 + $0x68] sm:$0xff]
    %v2412 = vld [vmem:[#allocation2 + $0x70] sm:$0xff]
    %v2413 = vld [vmem:[#allocation2 + $0x78] sm:$0xff]
    %v2414 = vld [vmem:[#allocation2 + $0x80] sm:$0xff]
    %v2415 = vld [vmem:[#allocation2 + $0x88] sm:$0xff]
    %v2416 = vld [vmem:[#allocation2 + $0x90] sm:$0xff]
    %v2417 = vld [vmem:[#allocation2 + $0x98] sm:$0xff]
    %v2418 = vld [vmem:[#allocation2 + $0xa0] sm:$0xff]
    %v2419 = vld [vmem:[#allocation2 + $0xa8] sm:$0xff]
    %v2420 = vld [vmem:[#allocation2 + $0xb0] sm:$0xff]
    %v2421 = vld [vmem:[#allocation2 + $0xb8] sm:$0xff]
    %v2422 = vld [vmem:[#allocation2 + $0xc0] sm:$0xff]
    %v2423 = vld [vmem:[#allocation2 + $0xc8] sm:$0xff]
    %v2424 = vld [vmem:[#allocation2 + $0xd0] sm:$0xff]
    %v2425 = vld [vmem:[#allocation2 + $0xd8] sm:$0xff]
    %v2426 = vld [vmem:[#allocation2 + $0xe0] sm:$0xff]
    %v2427 = vld [vmem:[#allocation2 + $0xe8] sm:$0xff]
    %v2428 = vld [vmem:[#allocation2 + $0xf0] sm:$0xff]
    %v2429 = vld [vmem:[#allocation2 + $0xf8] sm:$0xff]
    %v2430 = vld [vmem:[#allocation2 + $0x100] sm:$0xff]
    %v2431 = vld [vmem:[#allocation2 + $0x108] sm:$0xff]
    %v2432 = vld [vmem:[#allocation2 + $0x110] sm:$0xff]
    %v2433 = vld [vmem:[#allocation2 + $0x118] sm:$0xff]
    %v2434 = vld [vmem:[#allocation2 + $0x120] sm:$0xff]
    %v2435 = vld [vmem:[#allocation2 + $0x128] sm:$0xff]
    %v2436 = vld [vmem:[#allocation2 + $0x130] sm:$0xff]
    %v2437 = vld [vmem:[#allocation2 + $0x138] sm:$0xff]
    %v2438 = vld [vmem:[#allocation2 + $0x140] sm:$0xff]
    %v2439 = vld [vmem:[#allocation2 + $0x148] sm:$0xff]
    %v2440 = vld [vmem:[#allocation2 + $0x150] sm:$0xff]
    %v2441 = vld [vmem:[#allocation2 + $0x158] sm:$0xff]
    %v2442 = vld [vmem:[#allocation2 + $0x160] sm:$0xff]
    %v2443 = vld [vmem:[#allocation2 + $0x168] sm:$0xff]
    %v2444 = vld [vmem:[#allocation2 + $0x170] sm:$0xff]
    %v2445 = vld [vmem:[#allocation2 + $0x178] sm:$0xff]
    %v2447 = vsel %vm612, %v2393, 0
    %v2450 = vsel %vm612, %v2395, 0
    %v2453 = vsel %vm612, %v2397, 0
    %2455 = vmatprep.subr.mxu0 %v2399
    %2456 = vmatpush1.msra.mxu0 %v2398
    %2457 = vmatprep.subr.mxu0 %v2401
    %2458 = vmatpush1.msra.mxu0 %v2400
    %2459 = vmatprep.subr.mxu0 %v2403
    %2460 = vmatpush1.msra.mxu0 %v2402
    %2461 = vmatprep.subr.mxu0 %v2405
    %2462 = vmatpush1.msra.mxu0 %v2404
    %2463 = vmatprep.subr.mxu0 %v2407
    %2464 = vmatpush1.msra.mxu0 %v2406
    %2465 = vmatprep.subr.mxu0 %v2409
    %2466 = vmatpush1.msra.mxu0 %v2408
    %2467 = vmatprep.subr.mxu0 %v2411
    %2468 = vmatpush1.msra.mxu0 %v2410
    %2469 = vmatprep.subr.mxu0 %v2413
    %2470 = vmatpush1.msra.mxu0 %v2412
    %2471 = vmatprep.subr.mxu0 %v2415
    %2472 = vmatpush1.msra.mxu0 %v2414
    %2473 = vmatprep.subr.mxu0 %v2417
    %2474 = vmatpush1.msra.mxu0 %v2416
    %2475 = vmatprep.subr.mxu0 %v2419
    %2476 = vmatpush1.msra.mxu0 %v2418
    %2477 = vmatprep.subr.mxu0 %v2421
    %2478 = vmatpush1.msra.mxu0 %v2420
    %2479 = vmatprep.subr.mxu0 %v2423
    %2480 = vmatpush1.msra.mxu0 %v2422
    %2481 = vmatprep.subr.mxu0 %v2425
    %2482 = vmatpush1.msra.mxu0 %v2424
    %2483 = vmatprep.subr.mxu0 %v2427
    %2484 = vmatpush1.msra.mxu0 %v2426
    %2485 = vmatprep.subr.mxu0 %v2429
    %2486 = vmatpush1.msra.mxu0 %v2428
    %2487 = vmatprep.subr.mxu0 %v2431
    %2488 = vmatpush1.msra.mxu0 %v2430
    %2489 = vmatprep.subr.mxu0 %v2433
    %2490 = vmatpush1.msra.mxu0 %v2432
    %2491 = vmatprep.subr.mxu0 %v2435
    %2492 = vmatpush1.msra.mxu0 %v2434
    %2493 = vmatprep.subr.mxu0 %v2437
    %2494 = vmatpush1.msra.mxu0 %v2436
    %2495 = vmatprep.subr.mxu0 %v2439
    %2496 = vmatpush1.msra.mxu0 %v2438
    %2497 = vmatprep.subr.mxu0 %v2441
    %2498 = vmatpush1.msra.mxu0 %v2440
    %2499 = vmatprep.subr.mxu0 %v2443
    %2500 = vmatpush1.msra.mxu0 %v2442
    %2501 = vmatprep.subr.mxu0 %v2445
    %2502 = vmatpush1.msra.mxu0 %v2444
    %2503 = vmatprep.subr.mxu0 0.0
    %2504 = vmatpush1.msra.mxu0 0.0
    %2505 = vmatprep.subr.mxu0 0.0
    %2506 = vmatpush1.msra.mxu0 0.0
    %2507 = vmatprep.subr.mxu0 0.0
    %2508 = vmatpush1.msra.mxu0 0.0
    %2509 = vmatprep.subr.mxu0 0.0
    %2510 = vmatpush1.msra.mxu0 0.0
    %2511 = vmatprep.subr.mxu0 0.0
    %2512 = vmatpush1.msra.mxu0 0.0
    %2513 = vmatprep.subr.mxu0 0.0
    %2514 = vmatpush1.msra.mxu0 0.0
    %2515 = vmatprep.subr.mxu0 0.0
    %2516 = vmatpush1.msra.mxu0 0.0
    %2517 = vmatprep.subr.mxu0 0.0
    %2518 = vmatpush1.msra.mxu0 0.0
    %2519 = vmatprep.mubr.f32.mxu0 %v2447
    %2520 = vmatmul.mubr.f32.gmra.mrb[0].mxu0 %v2392
    %v2521 = vpop.f32.mrb[0].mxu0
    %v2522 = vadd.f32 0.0, %v2521
    %v2523 = vpop.f32.mrb[0].mxu0
    %v2524 = vadd.f32 0.0, %v2523
    %2525 = vmatprep.mubr.f32.mxu0 %v2450
    %2526 = vmatmul.mubr.f32.gmra.mrb[0].mxu0 %v2394
    %v2527 = vpop.f32.mrb[0].mxu0
    %v2528 = vadd.f32 0.0, %v2527
    %v2529 = vpop.f32.mrb[0].mxu0
    %v2530 = vadd.f32 0.0, %v2529
    %2531 = vmatprep.mubr.f32.mxu0 %v2453
    %2532 = vmatmul.mubr.f32.gmra.mrb[0].mxu0 %v2396
    %v2533 = vpop.f32.mrb[0].mxu0
    %v2534 = vadd.f32 0.0, %v2533
    %v2535 = vpop.f32.mrb[0].mxu0
    %v2536 = vadd.f32 0.0, %v2535
    %2537 = vdwg.mxu0
    %v2538 = vld [vmem:[%s11] sm:$0xff]
    %v2539 = vld [vmem:[%s11 + $0x8] sm:$0xff]
    %v2540 = vld [vmem:[%s11 + $0x10] sm:$0xff]
    %v2541 = vld [vmem:[%s11 + $0x18] sm:$0xff]
    %v2542 = vld [vmem:[%s11 + $0x20] sm:$0xff]
    %v2543 = vld [vmem:[%s11 + $0x28] sm:$0xff]
    %s2544 = scalar_lea.vmem [#allocation2], 384
    %v2545 = vld [vmem:[%s2544] sm:$0xff]
    %v2546 = vld [vmem:[%s2544 + $0x8] sm:$0xff]
    %v2547 = vld [vmem:[%s2544 + $0x10] sm:$0xff]
    %v2548 = vld [vmem:[%s2544 + $0x18] sm:$0xff]
    %v2549 = vld [vmem:[%s2544 + $0x20] sm:$0xff]
    %v2550 = vld [vmem:[%s2544 + $0x28] sm:$0xff]
    %v2551 = vld [vmem:[%s2544 + $0x30] sm:$0xff]
    %v2552 = vld [vmem:[%s2544 + $0x38] sm:$0xff]
    %v2553 = vld [vmem:[%s2544 + $0x40] sm:$0xff]
    %v2554 = vld [vmem:[%s2544 + $0x48] sm:$0xff]
    %v2555 = vld [vmem:[%s2544 + $0x50] sm:$0xff]
    %v2556 = vld [vmem:[%s2544 + $0x58] sm:$0xff]
    %v2557 = vld [vmem:[%s2544 + $0x60] sm:$0xff]
    %v2558 = vld [vmem:[%s2544 + $0x68] sm:$0xff]
    %v2559 = vld [vmem:[%s2544 + $0x70] sm:$0xff]
    %v2560 = vld [vmem:[%s2544 + $0x78] sm:$0xff]
    %v2561 = vld [vmem:[%s2544 + $0x80] sm:$0xff]
    %v2562 = vld [vmem:[%s2544 + $0x88] sm:$0xff]
    %v2563 = vld [vmem:[%s2544 + $0x90] sm:$0xff]
    %v2564 = vld [vmem:[%s2544 + $0x98] sm:$0xff]
    %v2565 = vld [vmem:[%s2544 + $0xa0] sm:$0xff]
    %v2566 = vld [vmem:[%s2544 + $0xa8] sm:$0xff]
    %v2567 = vld [vmem:[%s2544 + $0xb0] sm:$0xff]
    %v2568 = vld [vmem:[%s2544 + $0xb8] sm:$0xff]
    %v2569 = vld [vmem:[%s2544 + $0xc0] sm:$0xff]
    %v2570 = vld [vmem:[%s2544 + $0xc8] sm:$0xff]
    %v2571 = vld [vmem:[%s2544 + $0xd0] sm:$0xff]
    %v2572 = vld [vmem:[%s2544 + $0xd8] sm:$0xff]
    %v2573 = vld [vmem:[%s2544 + $0xe0] sm:$0xff]
    %v2574 = vld [vmem:[%s2544 + $0xe8] sm:$0xff]
    %v2575 = vld [vmem:[%s2544 + $0xf0] sm:$0xff]
    %v2576 = vld [vmem:[%s2544 + $0xf8] sm:$0xff]
    %v2577 = vld [vmem:[%s2544 + $0x100] sm:$0xff]
    %v2578 = vld [vmem:[%s2544 + $0x108] sm:$0xff]
    %v2579 = vld [vmem:[%s2544 + $0x110] sm:$0xff]
    %v2580 = vld [vmem:[%s2544 + $0x118] sm:$0xff]
    %v2581 = vld [vmem:[%s2544 + $0x120] sm:$0xff]
    %v2582 = vld [vmem:[%s2544 + $0x128] sm:$0xff]
    %v2583 = vld [vmem:[%s2544 + $0x130] sm:$0xff]
    %v2584 = vld [vmem:[%s2544 + $0x138] sm:$0xff]
    %v2585 = vld [vmem:[%s2544 + $0x140] sm:$0xff]
    %v2586 = vld [vmem:[%s2544 + $0x148] sm:$0xff]
    %v2587 = vld [vmem:[%s2544 + $0x150] sm:$0xff]
    %v2588 = vld [vmem:[%s2544 + $0x158] sm:$0xff]
    %v2589 = vld [vmem:[%s2544 + $0x160] sm:$0xff]
    %v2590 = vld [vmem:[%s2544 + $0x168] sm:$0xff]
    %v2591 = vld [vmem:[%s2544 + $0x170] sm:$0xff]
    %v2592 = vld [vmem:[%s2544 + $0x178] sm:$0xff]
    %2593 = vmatprep.subr.mxu0 %v2546
    %2594 = vmatpush1.msra.mxu0 %v2545
    %2595 = vmatprep.subr.mxu0 %v2548
    %2596 = vmatpush1.msra.mxu0 %v2547
    %2597 = vmatprep.subr.mxu0 %v2550
    %2598 = vmatpush1.msra.mxu0 %v2549
    %2599 = vmatprep.subr.mxu0 %v2552
    %2600 = vmatpush1.msra.mxu0 %v2551
    %2601 = vmatprep.subr.mxu0 %v2554
    %2602 = vmatpush1.msra.mxu0 %v2553
    %2603 = vmatprep.subr.mxu0 %v2556
    %2604 = vmatpush1.msra.mxu0 %v2555
    %2605 = vmatprep.subr.mxu0 %v2558
    %2606 = vmatpush1.msra.mxu0 %v2557
    %2607 = vmatprep.subr.mxu0 %v2560
    %2608 = vmatpush1.msra.mxu0 %v2559
    %2609 = vmatprep.subr.mxu0 %v2562
    %2610 = vmatpush1.msra.mxu0 %v2561
    %2611 = vmatprep.subr.mxu0 %v2564
    %2612 = vmatpush1.msra.mxu0 %v2563
    %2613 = vmatprep.subr.mxu0 %v2566
    %2614 = vmatpush1.msra.mxu0 %v2565
    %2615 = vmatprep.subr.mxu0 %v2568
    %2616 = vmatpush1.msra.mxu0 %v2567
    %2617 = vmatprep.subr.mxu0 %v2570
    %2618 = vmatpush1.msra.mxu0 %v2569
    %2619 = vmatprep.subr.mxu0 %v2572
    %2620 = vmatpush1.msra.mxu0 %v2571
    %2621 = vmatprep.subr.mxu0 %v2574
    %2622 = vmatpush1.msra.mxu0 %v2573
    %2623 = vmatprep.subr.mxu0 %v2576
    %2624 = vmatpush1.msra.mxu0 %v2575
    %2625 = vmatprep.subr.mxu0 %v2578
    %2626 = vmatpush1.msra.mxu0 %v2577
    %2627 = vmatprep.subr.mxu0 %v2580
    %2628 = vmatpush1.msra.mxu0 %v2579
    %2629 = vmatprep.subr.mxu0 %v2582
    %2630 = vmatpush1.msra.mxu0 %v2581
    %2631 = vmatprep.subr.mxu0 %v2584
    %2632 = vmatpush1.msra.mxu0 %v2583
    %2633 = vmatprep.subr.mxu0 %v2586
    %2634 = vmatpush1.msra.mxu0 %v2585
    %2635 = vmatprep.subr.mxu0 %v2588
    %2636 = vmatpush1.msra.mxu0 %v2587
    %2637 = vmatprep.subr.mxu0 %v2590
    %2638 = vmatpush1.msra.mxu0 %v2589
    %2639 = vmatprep.subr.mxu0 %v2592
    %2640 = vmatpush1.msra.mxu0 %v2591
    %2641 = vmatprep.subr.mxu0 0.0
    %2642 = vmatpush1.msra.mxu0 0.0
    %2643 = vmatprep.subr.mxu0 0.0
    %2644 = vmatpush1.msra.mxu0 0.0
    %2645 = vmatprep.subr.mxu0 0.0
    %2646 = vmatpush1.msra.mxu0 0.0
    %2647 = vmatprep.subr.mxu0 0.0
    %2648 = vmatpush1.msra.mxu0 0.0
    %2649 = vmatprep.subr.mxu0 0.0
    %2650 = vmatpush1.msra.mxu0 0.0
    %2651 = vmatprep.subr.mxu0 0.0
    %2652 = vmatpush1.msra.mxu0 0.0
    %2653 = vmatprep.subr.mxu0 0.0
    %2654 = vmatpush1.msra.mxu0 0.0
    %2655 = vmatprep.subr.mxu0 0.0
    %2656 = vmatpush1.msra.mxu0 0.0
    %2657 = vmatprep.mubr.f32.mxu0 %v2447
    %2658 = vmatmul.mubr.f32.gmra.mrb[0].mxu0 %v2392
    %v2659 = vpop.f32.mrb[0].mxu0
    %v2660 = vadd.f32 0.0, %v2659
    %v2661 = vpop.f32.mrb[0].mxu0
    %v2662 = vadd.f32 0.0, %v2661
    %2663 = vmatprep.mubr.f32.mxu0 %v2450
    %2664 = vmatmul.mubr.f32.gmra.mrb[0].mxu0 %v2394
    %v2665 = vpop.f32.mrb[0].mxu0
    %v2666 = vadd.f32 0.0, %v2665
    %v2667 = vpop.f32.mrb[0].mxu0
    %v2668 = vadd.f32 0.0, %v2667
    %2669 = vmatprep.mubr.f32.mxu0 %v2453
    %2670 = vmatmul.mubr.f32.gmra.mrb[0].mxu0 %v2396
    %v2671 = vpop.f32.mrb[0].mxu0
    %v2672 = vadd.f32 0.0, %v2671
    %v2673 = vpop.f32.mrb[0].mxu0
    %v2674 = vadd.f32 0.0, %v2673
    %2675 = vdwg.mxu0
    %s2676 = scalar_lea.vmem %s11, 48
    %v2677 = vld [vmem:[%s2676] sm:$0xff]
    %v2678 = vld [vmem:[%s2676 + $0x8] sm:$0xff]
    %v2679 = vld [vmem:[%s2676 + $0x10] sm:$0xff]
    %v2680 = vld [vmem:[%s2676 + $0x18] sm:$0xff]
    %v2681 = vld [vmem:[%s2676 + $0x20] sm:$0xff]
    %v2682 = vld [vmem:[%s2676 + $0x28] sm:$0xff]
    %vm2683 = vcmask 195584
    %v2685 = vsel %vm2683, %v2677, 0
    %v2688 = vsel %vm2683, %v2678, 0
    %v2691 = vsel %vm2683, %v2679, 0
    %v2694 = vsel %vm2683, %v2680, 0
    %v2697 = vsel %vm2683, %v2681, 0
    %v2700 = vsel %vm2683, %v2682, 0
    %2702 = vmatprep.subr.mxu0 %v2662
    %2703 = vmatpush1.msra.mxu0 %v2660
    %2704 = vmatprep.subr.mxu0 %v2668
    %2705 = vmatpush1.msra.mxu0 %v2666
    %2706 = vmatprep.subr.mxu0 %v2674
    %2707 = vmatpush1.msra.mxu0 %v2672
    %2708 = vmatprep.subr.mxu0 0.0
    %2709 = vmatpush1.msra.mxu0 0.0
    %2710 = vmatprep.subr.mxu0 0.0
    %2711 = vmatpush1.msra.mxu0 0.0
    %2712 = vmatprep.subr.mxu0 0.0
    %2713 = vmatpush1.msra.mxu0 0.0
    %2714 = vmatprep.subr.mxu0 0.0
    %2715 = vmatpush1.msra.mxu0 0.0
    %2716 = vmatprep.subr.mxu0 0.0
    %2717 = vmatpush1.msra.mxu0 0.0
    %2718 = vmatprep.subr.mxu0 0.0
    %2719 = vmatpush1.msra.mxu0 0.0
    %2720 = vmatprep.subr.mxu0 0.0
    %2721 = vmatpush1.msra.mxu0 0.0
    %2722 = vmatprep.subr.mxu0 0.0
    %2723 = vmatpush1.msra.mxu0 0.0
    %2724 = vmatprep.subr.mxu0 0.0
    %2725 = vmatpush1.msra.mxu0 0.0
    %2726 = vmatprep.subr.mxu0 0.0
    %2727 = vmatpush1.msra.mxu0 0.0
    %2728 = vmatprep.subr.mxu0 0.0
    %2729 = vmatpush1.msra.mxu0 0.0
    %2730 = vmatprep.subr.mxu0 0.0
    %2731 = vmatpush1.msra.mxu0 0.0
    %2732 = vmatprep.subr.mxu0 0.0
    %2733 = vmatpush1.msra.mxu0 0.0
    %2734 = vmatprep.subr.mxu0 0.0
    %2735 = vmatpush1.msra.mxu0 0.0
    %2736 = vmatprep.subr.mxu0 0.0
    %2737 = vmatpush1.msra.mxu0 0.0
    %2738 = vmatprep.subr.mxu0 0.0
    %2739 = vmatpush1.msra.mxu0 0.0
    %2740 = vmatprep.subr.mxu0 0.0
    %2741 = vmatpush1.msra.mxu0 0.0
    %2742 = vmatprep.subr.mxu0 0.0
    %2743 = vmatpush1.msra.mxu0 0.0
    %2744 = vmatprep.subr.mxu0 0.0
    %2745 = vmatpush1.msra.mxu0 0.0
    %2746 = vmatprep.subr.mxu0 0.0
    %2747 = vmatpush1.msra.mxu0 0.0
    %2748 = vmatprep.subr.mxu0 0.0
    %2749 = vmatpush1.msra.mxu0 0.0
    %2750 = vmatprep.subr.mxu0 0.0
    %2751 = vmatpush1.msra.mxu0 0.0
    %2752 = vmatprep.subr.mxu0 0.0
    %2753 = vmatpush1.msra.mxu0 0.0
    %2754 = vmatprep.subr.mxu0 0.0
    %2755 = vmatpush1.msra.mxu0 0.0
    %2756 = vmatprep.subr.mxu0 0.0
    %2757 = vmatpush1.msra.mxu0 0.0
    %2758 = vmatprep.subr.mxu0 0.0
    %2759 = vmatpush1.msra.mxu0 0.0
    %2760 = vmatprep.subr.mxu0 0.0
    %2761 = vmatpush1.msra.mxu0 0.0
    %2762 = vmatprep.subr.mxu0 0.0
    %2763 = vmatpush1.msra.mxu0 0.0
    %2764 = vmatprep.subr.mxu0 0.0
    %2765 = vmatpush1.msra.mxu0 0.0
    %2766 = vmatprep.mubr.f32.mxu0 0.0
    %2767 = vmatmul.mubr.f32.gmra.mrb[0].mxu0 %v2685
    %v2768 = vpop.f32.mrb[0].mxu0
    %v2769 = vadd.f32 0.0, %v2768
    %v2770 = vpop.f32.mrb[0].mxu0
    %v2771 = vadd.f32 0.0, %v2770
    %2772 = vmatprep.mubr.f32.mxu0 0.0
    %2773 = vmatmul.mubr.f32.gmra.mrb[0].mxu0 %v2688
    %v2774 = vpop.f32.mrb[0].mxu0
    %v2775 = vadd.f32 0.0, %v2774
    %v2776 = vpop.f32.mrb[0].mxu0
    %v2777 = vadd.f32 0.0, %v2776
    %2778 = vmatprep.mubr.f32.mxu0 0.0
    %2779 = vmatmul.mubr.f32.gmra.mrb[0].mxu0 %v2691
    %v2780 = vpop.f32.mrb[0].mxu0
    %v2781 = vadd.f32 0.0, %v2780
    %v2782 = vpop.f32.mrb[0].mxu0
    %v2783 = vadd.f32 0.0, %v2782
    %2784 = vmatprep.mubr.f32.mxu0 0.0
    %2785 = vmatmul.mubr.f32.gmra.mrb[0].mxu0 %v2694
    %v2786 = vpop.f32.mrb[0].mxu0
    %v2787 = vadd.f32 0.0, %v2786
    %v2788 = vpop.f32.mrb[0].mxu0
    %v2789 = vadd.f32 0.0, %v2788
    %2790 = vmatprep.mubr.f32.mxu0 0.0
    %2791 = vmatmul.mubr.f32.gmra.mrb[0].mxu0 %v2697
    %v2792 = vpop.f32.mrb[0].mxu0
    %v2793 = vadd.f32 0.0, %v2792
    %v2794 = vpop.f32.mrb[0].mxu0
    %v2795 = vadd.f32 0.0, %v2794
    %2796 = vmatprep.mubr.f32.mxu0 0.0
    %2797 = vmatmul.mubr.f32.gmra.mrb[0].mxu0 %v2700
    %v2798 = vpop.f32.mrb[0].mxu0
    %v2799 = vadd.f32 0.0, %v2798
    %v2800 = vpop.f32.mrb[0].mxu0
    %v2801 = vadd.f32 0.0, %v2800
    %2802 = vdwg.mxu0
    %v2804 = vsel %vm2683, %v2538, 0
    %v2807 = vsel %vm2683, %v2539, 0
    %v2810 = vsel %vm2683, %v2540, 0
    %v2813 = vsel %vm2683, %v2541, 0
    %v2816 = vsel %vm2683, %v2542, 0
    %v2819 = vsel %vm2683, %v2543, 0
    %2821 = vmatprep.subr.mxu0 %v2524
    %2822 = vmatpush1.msra.mxu0 %v2522
    %2823 = vmatprep.subr.mxu0 %v2530
    %2824 = vmatpush1.msra.mxu0 %v2528
    %2825 = vmatprep.subr.mxu0 %v2536
    %2826 = vmatpush1.msra.mxu0 %v2534
    %2827 = vmatprep.subr.mxu0 0.0
    %2828 = vmatpush1.msra.mxu0 0.0
    %2829 = vmatprep.subr.mxu0 0.0
    %2830 = vmatpush1.msra.mxu0 0.0
    %2831 = vmatprep.subr.mxu0 0.0
    %2832 = vmatpush1.msra.mxu0 0.0
    %2833 = vmatprep.subr.mxu0 0.0
    %2834 = vmatpush1.msra.mxu0 0.0
    %2835 = vmatprep.subr.mxu0 0.0
    %2836 = vmatpush1.msra.mxu0 0.0
    %2837 = vmatprep.subr.mxu0 0.0
    %2838 = vmatpush1.msra.mxu0 0.0
    %2839 = vmatprep.subr.mxu0 0.0
    %2840 = vmatpush1.msra.mxu0 0.0
    %2841 = vmatprep.subr.mxu0 0.0
    %2842 = vmatpush1.msra.mxu0 0.0
    %2843 = vmatprep.subr.mxu0 0.0
    %2844 = vmatpush1.msra.mxu0 0.0
    %2845 = vmatprep.subr.mxu0 0.0
    %2846 = vmatpush1.msra.mxu0 0.0
    %2847 = vmatprep.subr.mxu0 0.0
    %2848 = vmatpush1.msra.mxu0 0.0
    %2849 = vmatprep.subr.mxu0 0.0
    %2850 = vmatpush1.msra.mxu0 0.0
    %2851 = vmatprep.subr.mxu0 0.0
    %2852 = vmatpush1.msra.mxu0 0.0
    %2853 = vmatprep.subr.mxu0 0.0
    %2854 = vmatpush1.msra.mxu0 0.0
    %2855 = vmatprep.subr.mxu0 0.0
    %2856 = vmatpush1.msra.mxu0 0.0
    %2857 = vmatprep.subr.mxu0 0.0
    %2858 = vmatpush1.msra.mxu0 0.0
    %2859 = vmatprep.subr.mxu0 0.0
    %2860 = vmatpush1.msra.mxu0 0.0
    %2861 = vmatprep.subr.mxu0 0.0
    %2862 = vmatpush1.msra.mxu0 0.0
    %2863 = vmatprep.subr.mxu0 0.0
    %2864 = vmatpush1.msra.mxu0 0.0
    %2865 = vmatprep.subr.mxu0 0.0
    %2866 = vmatpush1.msra.mxu0 0.0
    %2867 = vmatprep.subr.mxu0 0.0
    %2868 = vmatpush1.msra.mxu0 0.0
    %2869 = vmatprep.subr.mxu0 0.0
    %2870 = vmatpush1.msra.mxu0 0.0
    %2871 = vmatprep.subr.mxu0 0.0
    %2872 = vmatpush1.msra.mxu0 0.0
    %2873 = vmatprep.subr.mxu0 0.0
    %2874 = vmatpush1.msra.mxu0 0.0
    %2875 = vmatprep.subr.mxu0 0.0
    %2876 = vmatpush1.msra.mxu0 0.0
    %2877 = vmatprep.subr.mxu0 0.0
    %2878 = vmatpush1.msra.mxu0 0.0
    %2879 = vmatprep.subr.mxu0 0.0
    %2880 = vmatpush1.msra.mxu0 0.0
    %2881 = vmatprep.subr.mxu0 0.0
    %2882 = vmatpush1.msra.mxu0 0.0
    %2883 = vmatprep.subr.mxu0 0.0
    %2884 = vmatpush1.msra.mxu0 0.0
    %2885 = vmatprep.mubr.f32.mxu0 0.0
    %2886 = vmatmul.mubr.f32.gmra.mrb[0].mxu0 %v2804
    %v2887 = vpop.f32.mrb[0].mxu0
    %v2888 = vadd.f32 %v2769, %v2887
    %v2889 = vpop.f32.mrb[0].mxu0
    %v2890 = vadd.f32 %v2771, %v2889
    %2891 = vmatprep.mubr.f32.mxu0 0.0
    %2892 = vmatmul.mubr.f32.gmra.mrb[0].mxu0 %v2807
    %v2893 = vpop.f32.mrb[0].mxu0
    %v2894 = vadd.f32 %v2775, %v2893
    %v2895 = vpop.f32.mrb[0].mxu0
    %v2896 = vadd.f32 %v2777, %v2895
    %2897 = vmatprep.mubr.f32.mxu0 0.0
    %2898 = vmatmul.mubr.f32.gmra.mrb[0].mxu0 %v2810
    %v2899 = vpop.f32.mrb[0].mxu0
    %v2900 = vadd.f32 %v2781, %v2899
    %v2901 = vpop.f32.mrb[0].mxu0
    %v2902 = vadd.f32 %v2783, %v2901
    %2903 = vmatprep.mubr.f32.mxu0 0.0
    %2904 = vmatmul.mubr.f32.gmra.mrb[0].mxu0 %v2813
    %v2905 = vpop.f32.mrb[0].mxu0
    %v2906 = vadd.f32 %v2787, %v2905
    %v2907 = vpop.f32.mrb[0].mxu0
    %v2908 = vadd.f32 %v2789, %v2907
    %2909 = vmatprep.mubr.f32.mxu0 0.0
    %2910 = vmatmul.mubr.f32.gmra.mrb[0].mxu0 %v2816
    %v2911 = vpop.f32.mrb[0].mxu0
    %v2912 = vadd.f32 %v2793, %v2911
    %v2913 = vpop.f32.mrb[0].mxu0
    %v2914 = vadd.f32 %v2795, %v2913
    %2915 = vmatprep.mubr.f32.mxu0 0.0
    %2916 = vmatmul.mubr.f32.gmra.mrb[0].mxu0 %v2819
    %v2917 = vpop.f32.mrb[0].mxu0
    %v2918 = vadd.f32 %v2799, %v2917
    %v2919 = vpop.f32.mrb[0].mxu0
    %v2920 = vadd.f32 %v2801, %v2919
    %2921 = vdwg.mxu0
    %s2922 = scalar_lea.vmem [#allocation2], 768
    %v2923 = vld [vmem:[%s2922] sm:$0xff]
    %v2924 = vld [vmem:[%s2922 + $0x8] sm:$0xff]
    %v2925 = vld [vmem:[%s2922 + $0x10] sm:$0xff]
    %v2926 = vld [vmem:[%s2922 + $0x18] sm:$0xff]
    %v2927 = vld [vmem:[%s2922 + $0x20] sm:$0xff]
    %v2928 = vld [vmem:[%s2922 + $0x28] sm:$0xff]
    %v2929 = vld [vmem:[%s2922 + $0x30] sm:$0xff]
    %v2930 = vld [vmem:[%s2922 + $0x38] sm:$0xff]
    %v2931 = vld [vmem:[%s2922 + $0x40] sm:$0xff]
    %v2932 = vld [vmem:[%s2922 + $0x48] sm:$0xff]
    %v2933 = vld [vmem:[%s2922 + $0x50] sm:$0xff]
    %v2934 = vld [vmem:[%s2922 + $0x58] sm:$0xff]
    %v2935 = vld [vmem:[%s2922 + $0x60] sm:$0xff]
    %v2936 = vld [vmem:[%s2922 + $0x68] sm:$0xff]
    %v2937 = vld [vmem:[%s2922 + $0x70] sm:$0xff]
    %v2938 = vld [vmem:[%s2922 + $0x78] sm:$0xff]
    %v2939 = vld [vmem:[%s2922 + $0x80] sm:$0xff]
    %v2940 = vld [vmem:[%s2922 + $0x88] sm:$0xff]
    %v2941 = vld [vmem:[%s2922 + $0x90] sm:$0xff]
    %v2942 = vld [vmem:[%s2922 + $0x98] sm:$0xff]
    %v2943 = vld [vmem:[%s2922 + $0xa0] sm:$0xff]
    %v2944 = vld [vmem:[%s2922 + $0xa8] sm:$0xff]
    %v2945 = vld [vmem:[%s2922 + $0xb0] sm:$0xff]
    %v2946 = vld [vmem:[%s2922 + $0xb8] sm:$0xff]
    %v2947 = vld [vmem:[%s2922 + $0xc0] sm:$0xff]
    %v2948 = vld [vmem:[%s2922 + $0xc8] sm:$0xff]
    %v2949 = vld [vmem:[%s2922 + $0xd0] sm:$0xff]
    %v2950 = vld [vmem:[%s2922 + $0xd8] sm:$0xff]
    %v2951 = vld [vmem:[%s2922 + $0xe0] sm:$0xff]
    %v2952 = vld [vmem:[%s2922 + $0xe8] sm:$0xff]
    %v2953 = vld [vmem:[%s2922 + $0xf0] sm:$0xff]
    %v2954 = vld [vmem:[%s2922 + $0xf8] sm:$0xff]
    %v2955 = vld [vmem:[%s2922 + $0x100] sm:$0xff]
    %v2956 = vld [vmem:[%s2922 + $0x108] sm:$0xff]
    %v2957 = vld [vmem:[%s2922 + $0x110] sm:$0xff]
    %v2958 = vld [vmem:[%s2922 + $0x118] sm:$0xff]
    %v2959 = vld [vmem:[%s2922 + $0x120] sm:$0xff]
    %v2960 = vld [vmem:[%s2922 + $0x128] sm:$0xff]
    %v2961 = vld [vmem:[%s2922 + $0x130] sm:$0xff]
    %v2962 = vld [vmem:[%s2922 + $0x138] sm:$0xff]
    %v2963 = vld [vmem:[%s2922 + $0x140] sm:$0xff]
    %v2964 = vld [vmem:[%s2922 + $0x148] sm:$0xff]
    %v2965 = vld [vmem:[%s2922 + $0x150] sm:$0xff]
    %v2966 = vld [vmem:[%s2922 + $0x158] sm:$0xff]
    %v2967 = vld [vmem:[%s2922 + $0x160] sm:$0xff]
    %v2968 = vld [vmem:[%s2922 + $0x168] sm:$0xff]
    %v2969 = vld [vmem:[%s2922 + $0x170] sm:$0xff]
    %v2970 = vld [vmem:[%s2922 + $0x178] sm:$0xff]
    %2971 = vmatprep.subr.mxu0 %v2924
    %2972 = vmatpush1.msra.mxu0 %v2923
    %2973 = vmatprep.subr.mxu0 %v2926
    %2974 = vmatpush1.msra.mxu0 %v2925
    %2975 = vmatprep.subr.mxu0 %v2928
    %2976 = vmatpush1.msra.mxu0 %v2927
    %2977 = vmatprep.subr.mxu0 %v2930
    %2978 = vmatpush1.msra.mxu0 %v2929
    %2979 = vmatprep.subr.mxu0 %v2932
    %2980 = vmatpush1.msra.mxu0 %v2931
    %2981 = vmatprep.subr.mxu0 %v2934
    %2982 = vmatpush1.msra.mxu0 %v2933
    %2983 = vmatprep.subr.mxu0 %v2936
    %2984 = vmatpush1.msra.mxu0 %v2935
    %2985 = vmatprep.subr.mxu0 %v2938
    %2986 = vmatpush1.msra.mxu0 %v2937
    %2987 = vmatprep.subr.mxu0 %v2940
    %2988 = vmatpush1.msra.mxu0 %v2939
    %2989 = vmatprep.subr.mxu0 %v2942
    %2990 = vmatpush1.msra.mxu0 %v2941
    %2991 = vmatprep.subr.mxu0 %v2944
    %2992 = vmatpush1.msra.mxu0 %v2943
    %2993 = vmatprep.subr.mxu0 %v2946
    %2994 = vmatpush1.msra.mxu0 %v2945
    %2995 = vmatprep.subr.mxu0 %v2948
    %2996 = vmatpush1.msra.mxu0 %v2947
    %2997 = vmatprep.subr.mxu0 %v2950
    %2998 = vmatpush1.msra.mxu0 %v2949
    %2999 = vmatprep.subr.mxu0 %v2952
    %3000 = vmatpush1.msra.mxu0 %v2951
    %3001 = vmatprep.subr.mxu0 %v2954
    %3002 = vmatpush1.msra.mxu0 %v2953
    %3003 = vmatprep.subr.mxu0 %v2956
    %3004 = vmatpush1.msra.mxu0 %v2955
    %3005 = vmatprep.subr.mxu0 %v2958
    %3006 = vmatpush1.msra.mxu0 %v2957
    %3007 = vmatprep.subr.mxu0 %v2960
    %3008 = vmatpush1.msra.mxu0 %v2959
    %3009 = vmatprep.subr.mxu0 %v2962
    %3010 = vmatpush1.msra.mxu0 %v2961
    %3011 = vmatprep.subr.mxu0 %v2964
    %3012 = vmatpush1.msra.mxu0 %v2963
    %3013 = vmatprep.subr.mxu0 %v2966
    %3014 = vmatpush1.msra.mxu0 %v2965
    %3015 = vmatprep.subr.mxu0 %v2968
    %3016 = vmatpush1.msra.mxu0 %v2967
    %3017 = vmatprep.subr.mxu0 %v2970
    %3018 = vmatpush1.msra.mxu0 %v2969
    %3019 = vmatprep.subr.mxu0 0.0
    %3020 = vmatpush1.msra.mxu0 0.0
    %3021 = vmatprep.subr.mxu0 0.0
    %3022 = vmatpush1.msra.mxu0 0.0
    %3023 = vmatprep.subr.mxu0 0.0
    %3024 = vmatpush1.msra.mxu0 0.0
    %3025 = vmatprep.subr.mxu0 0.0
    %3026 = vmatpush1.msra.mxu0 0.0
    %3027 = vmatprep.subr.mxu0 0.0
    %3028 = vmatpush1.msra.mxu0 0.0
    %3029 = vmatprep.subr.mxu0 0.0
    %3030 = vmatpush1.msra.mxu0 0.0
    %3031 = vmatprep.subr.mxu0 0.0
    %3032 = vmatpush1.msra.mxu0 0.0
    %3033 = vmatprep.subr.mxu0 0.0
    %3034 = vmatpush1.msra.mxu0 0.0
    %3035 = vmatprep.mubr.f32.mxu0 %v2447
    %3036 = vmatmul.mubr.f32.gmra.mrb[0].mxu0 %v2392
    %v3037 = vpop.f32.mrb[0].mxu0
    %v3038 = vadd.f32 0.0, %v3037
    %v3039 = vpop.f32.mrb[0].mxu0
    %v3040 = vadd.f32 0.0, %v3039
    %3041 = vmatprep.mubr.f32.mxu0 %v2450
    %3042 = vmatmul.mubr.f32.gmra.mrb[0].mxu0 %v2394
    %v3043 = vpop.f32.mrb[0].mxu0
    %v3044 = vadd.f32 0.0, %v3043
    %v3045 = vpop.f32.mrb[0].mxu0
    %v3046 = vadd.f32 0.0, %v3045
    %3047 = vmatprep.mubr.f32.mxu0 %v2453
    %3048 = vmatmul.mubr.f32.gmra.mrb[0].mxu0 %v2396
    %v3049 = vpop.f32.mrb[0].mxu0
    %v3050 = vadd.f32 0.0, %v3049
    %v3051 = vpop.f32.mrb[0].mxu0
    %v3052 = vadd.f32 0.0, %v3051
    %3053 = vdwg.mxu0
    %s3054 = scalar_lea.vmem %s11, 96
    %v3055 = vld [vmem:[%s3054] sm:$0xff]
    %v3056 = vld [vmem:[%s3054 + $0x8] sm:$0xff]
    %v3057 = vld [vmem:[%s3054 + $0x10] sm:$0xff]
    %v3058 = vld [vmem:[%s3054 + $0x18] sm:$0xff]
    %v3059 = vld [vmem:[%s3054 + $0x20] sm:$0xff]
    %v3060 = vld [vmem:[%s3054 + $0x28] sm:$0xff]
    %v3062 = vsel %vm2683, %v3055, 0
    %v3065 = vsel %vm2683, %v3056, 0
    %v3068 = vsel %vm2683, %v3057, 0
    %v3071 = vsel %vm2683, %v3058, 0
    %v3074 = vsel %vm2683, %v3059, 0
    %v3077 = vsel %vm2683, %v3060, 0
    %3079 = vmatprep.subr.mxu0 %v3040
    %3080 = vmatpush1.msra.mxu0 %v3038
    %3081 = vmatprep.subr.mxu0 %v3046
    %3082 = vmatpush1.msra.mxu0 %v3044
    %3083 = vmatprep.subr.mxu0 %v3052
    %3084 = vmatpush1.msra.mxu0 %v3050
    %3085 = vmatprep.subr.mxu0 0.0
    %3086 = vmatpush1.msra.mxu0 0.0
    %3087 = vmatprep.subr.mxu0 0.0
    %3088 = vmatpush1.msra.mxu0 0.0
    %3089 = vmatprep.subr.mxu0 0.0
    %3090 = vmatpush1.msra.mxu0 0.0
    %3091 = vmatprep.subr.mxu0 0.0
    %3092 = vmatpush1.msra.mxu0 0.0
    %3093 = vmatprep.subr.mxu0 0.0
    %3094 = vmatpush1.msra.mxu0 0.0
    %3095 = vmatprep.subr.mxu0 0.0
    %3096 = vmatpush1.msra.mxu0 0.0
    %3097 = vmatprep.subr.mxu0 0.0
    %3098 = vmatpush1.msra.mxu0 0.0
    %3099 = vmatprep.subr.mxu0 0.0
    %3100 = vmatpush1.msra.mxu0 0.0
    %3101 = vmatprep.subr.mxu0 0.0
    %3102 = vmatpush1.msra.mxu0 0.0
    %3103 = vmatprep.subr.mxu0 0.0
    %3104 = vmatpush1.msra.mxu0 0.0
    %3105 = vmatprep.subr.mxu0 0.0
    %3106 = vmatpush1.msra.mxu0 0.0
    %3107 = vmatprep.subr.mxu0 0.0
    %3108 = vmatpush1.msra.mxu0 0.0
    %3109 = vmatprep.subr.mxu0 0.0
    %3110 = vmatpush1.msra.mxu0 0.0
    %3111 = vmatprep.subr.mxu0 0.0
    %3112 = vmatpush1.msra.mxu0 0.0
    %3113 = vmatprep.subr.mxu0 0.0
    %3114 = vmatpush1.msra.mxu0 0.0
    %3115 = vmatprep.subr.mxu0 0.0
    %3116 = vmatpush1.msra.mxu0 0.0
    %3117 = vmatprep.subr.mxu0 0.0
    %3118 = vmatpush1.msra.mxu0 0.0
    %3119 = vmatprep.subr.mxu0 0.0
    %3120 = vmatpush1.msra.mxu0 0.0
    %3121 = vmatprep.subr.mxu0 0.0
    %3122 = vmatpush1.msra.mxu0 0.0
    %3123 = vmatprep.subr.mxu0 0.0
    %3124 = vmatpush1.msra.mxu0 0.0
    %3125 = vmatprep.subr.mxu0 0.0
    %3126 = vmatpush1.msra.mxu0 0.0
    %3127 = vmatprep.subr.mxu0 0.0
    %3128 = vmatpush1.msra.mxu0 0.0
    %3129 = vmatprep.subr.mxu0 0.0
    %3130 = vmatpush1.msra.mxu0 0.0
    %3131 = vmatprep.subr.mxu0 0.0
    %3132 = vmatpush1.msra.mxu0 0.0
    %3133 = vmatprep.subr.mxu0 0.0
    %3134 = vmatpush1.msra.mxu0 0.0
    %3135 = vmatprep.subr.mxu0 0.0
    %3136 = vmatpush1.msra.mxu0 0.0
    %3137 = vmatprep.subr.mxu0 0.0
    %3138 = vmatpush1.msra.mxu0 0.0
    %3139 = vmatprep.subr.mxu0 0.0
    %3140 = vmatpush1.msra.mxu0 0.0
    %3141 = vmatprep.subr.mxu0 0.0
    %3142 = vmatpush1.msra.mxu0 0.0
    %3143 = vmatprep.mubr.f32.mxu0 0.0
    %3144 = vmatmul.mubr.f32.gmra.mrb[0].mxu0 %v3062
    %v3145 = vpop.f32.mrb[0].mxu0
    %v3146 = vadd.f32 0.0, %v3145
    %v3147 = vpop.f32.mrb[0].mxu0
    %v3148 = vadd.f32 0.0, %v3147
    %3149 = vmatprep.mubr.f32.mxu0 0.0
    %3150 = vmatmul.mubr.f32.gmra.mrb[0].mxu0 %v3065
    %v3151 = vpop.f32.mrb[0].mxu0
    %v3152 = vadd.f32 0.0, %v3151
    %v3153 = vpop.f32.mrb[0].mxu0
    %v3154 = vadd.f32 0.0, %v3153
    %3155 = vmatprep.mubr.f32.mxu0 0.0
    %3156 = vmatmul.mubr.f32.gmra.mrb[0].mxu0 %v3068
    %v3157 = vpop.f32.mrb[0].mxu0
    %v3158 = vadd.f32 0.0, %v3157
    %v3159 = vpop.f32.mrb[0].mxu0
    %v3160 = vadd.f32 0.0, %v3159
    %3161 = vmatprep.mubr.f32.mxu0 0.0
    %3162 = vmatmul.mubr.f32.gmra.mrb[0].mxu0 %v3071
    %v3163 = vpop.f32.mrb[0].mxu0
    %v3164 = vadd.f32 0.0, %v3163
    %v3165 = vpop.f32.mrb[0].mxu0
    %v3166 = vadd.f32 0.0, %v3165
    %3167 = vmatprep.mubr.f32.mxu0 0.0
    %3168 = vmatmul.mubr.f32.gmra.mrb[0].mxu0 %v3074
    %v3169 = vpop.f32.mrb[0].mxu0
    %v3170 = vadd.f32 0.0, %v3169
    %v3171 = vpop.f32.mrb[0].mxu0
    %v3172 = vadd.f32 0.0, %v3171
    %3173 = vmatprep.mubr.f32.mxu0 0.0
    %3174 = vmatmul.mubr.f32.gmra.mrb[0].mxu0 %v3077
    %v3175 = vpop.f32.mrb[0].mxu0
    %v3176 = vadd.f32 0.0, %v3175
    %v3177 = vpop.f32.mrb[0].mxu0
    %v3178 = vadd.f32 0.0, %v3177
    %3179 = vdwg.mxu0
    %v3180 = vadd.f32 %v2888, %v3146
    %v3181 = vadd.f32 %v2890, %v3148
    %v3182 = vadd.f32 %v2894, %v3152
    %v3183 = vadd.f32 %v2896, %v3154
    %v3184 = vadd.f32 %v2900, %v3158
    %v3185 = vadd.f32 %v2902, %v3160
    %v3186 = vadd.f32 %v2906, %v3164
    %v3187 = vadd.f32 %v2908, %v3166
    %v3188 = vadd.f32 %v2912, %v3170
    %v3189 = vadd.f32 %v2914, %v3172
    %v3190 = vadd.f32 %v2918, %v3176
    %v3191 = vadd.f32 %v2920, %v3178
    %s3192 = scalar_lea.vmem [#allocation2], 1152
    %v3193 = vld [vmem:[%s3192] sm:$0xff]
    %v3194 = vld [vmem:[%s3192 + $0x8] sm:$0xff]
    %v3195 = vld [vmem:[%s3192 + $0x10] sm:$0xff]
    %v3196 = vld [vmem:[%s3192 + $0x18] sm:$0xff]
    %v3197 = vld [vmem:[%s3192 + $0x20] sm:$0xff]
    %v3198 = vld [vmem:[%s3192 + $0x28] sm:$0xff]
    %v3199 = vld [vmem:[%s3192 + $0x30] sm:$0xff]
    %v3200 = vld [vmem:[%s3192 + $0x38] sm:$0xff]
    %v3201 = vld [vmem:[%s3192 + $0x40] sm:$0xff]
    %v3202 = vld [vmem:[%s3192 + $0x48] sm:$0xff]
    %v3203 = vld [vmem:[%s3192 + $0x50] sm:$0xff]
    %v3204 = vld [vmem:[%s3192 + $0x58] sm:$0xff]
    %v3205 = vld [vmem:[%s3192 + $0x60] sm:$0xff]
    %v3206 = vld [vmem:[%s3192 + $0x68] sm:$0xff]
    %v3207 = vld [vmem:[%s3192 + $0x70] sm:$0xff]
    %v3208 = vld [vmem:[%s3192 + $0x78] sm:$0xff]
    %v3209 = vld [vmem:[%s3192 + $0x80] sm:$0xff]
    %v3210 = vld [vmem:[%s3192 + $0x88] sm:$0xff]
    %v3211 = vld [vmem:[%s3192 + $0x90] sm:$0xff]
    %v3212 = vld [vmem:[%s3192 + $0x98] sm:$0xff]
    %v3213 = vld [vmem:[%s3192 + $0xa0] sm:$0xff]
    %v3214 = vld [vmem:[%s3192 + $0xa8] sm:$0xff]
    %v3215 = vld [vmem:[%s3192 + $0xb0] sm:$0xff]
    %v3216 = vld [vmem:[%s3192 + $0xb8] sm:$0xff]
    %v3217 = vld [vmem:[%s3192 + $0xc0] sm:$0xff]
    %v3218 = vld [vmem:[%s3192 + $0xc8] sm:$0xff]
    %v3219 = vld [vmem:[%s3192 + $0xd0] sm:$0xff]
    %v3220 = vld [vmem:[%s3192 + $0xd8] sm:$0xff]
    %v3221 = vld [vmem:[%s3192 + $0xe0] sm:$0xff]
    %v3222 = vld [vmem:[%s3192 + $0xe8] sm:$0xff]
    %v3223 = vld [vmem:[%s3192 + $0xf0] sm:$0xff]
    %v3224 = vld [vmem:[%s3192 + $0xf8] sm:$0xff]
    %v3225 = vld [vmem:[%s3192 + $0x100] sm:$0xff]
    %v3226 = vld [vmem:[%s3192 + $0x108] sm:$0xff]
    %v3227 = vld [vmem:[%s3192 + $0x110] sm:$0xff]
    %v3228 = vld [vmem:[%s3192 + $0x118] sm:$0xff]
    %v3229 = vld [vmem:[%s3192 + $0x120] sm:$0xff]
    %v3230 = vld [vmem:[%s3192 + $0x128] sm:$0xff]
    %v3231 = vld [vmem:[%s3192 + $0x130] sm:$0xff]
    %v3232 = vld [vmem:[%s3192 + $0x138] sm:$0xff]
    %v3233 = vld [vmem:[%s3192 + $0x140] sm:$0xff]
    %v3234 = vld [vmem:[%s3192 + $0x148] sm:$0xff]
    %v3235 = vld [vmem:[%s3192 + $0x150] sm:$0xff]
    %v3236 = vld [vmem:[%s3192 + $0x158] sm:$0xff]
    %v3237 = vld [vmem:[%s3192 + $0x160] sm:$0xff]
    %v3238 = vld [vmem:[%s3192 + $0x168] sm:$0xff]
    %v3239 = vld [vmem:[%s3192 + $0x170] sm:$0xff]
    %v3240 = vld [vmem:[%s3192 + $0x178] sm:$0xff]
    %3241 = vmatprep.subr.mxu0 %v3194
    %3242 = vmatpush1.msra.mxu0 %v3193
    %3243 = vmatprep.subr.mxu0 %v3196
    %3244 = vmatpush1.msra.mxu0 %v3195
    %3245 = vmatprep.subr.mxu0 %v3198
    %3246 = vmatpush1.msra.mxu0 %v3197
    %3247 = vmatprep.subr.mxu0 %v3200
    %3248 = vmatpush1.msra.mxu0 %v3199
    %3249 = vmatprep.subr.mxu0 %v3202
    %3250 = vmatpush1.msra.mxu0 %v3201
    %3251 = vmatprep.subr.mxu0 %v3204
    %3252 = vmatpush1.msra.mxu0 %v3203
    %3253 = vmatprep.subr.mxu0 %v3206
    %3254 = vmatpush1.msra.mxu0 %v3205
    %3255 = vmatprep.subr.mxu0 %v3208
    %3256 = vmatpush1.msra.mxu0 %v3207
    %3257 = vmatprep.subr.mxu0 %v3210
    %3258 = vmatpush1.msra.mxu0 %v3209
    %3259 = vmatprep.subr.mxu0 %v3212
    %3260 = vmatpush1.msra.mxu0 %v3211
    %3261 = vmatprep.subr.mxu0 %v3214
    %3262 = vmatpush1.msra.mxu0 %v3213
    %3263 = vmatprep.subr.mxu0 %v3216
    %3264 = vmatpush1.msra.mxu0 %v3215
    %3265 = vmatprep.subr.mxu0 %v3218
    %3266 = vmatpush1.msra.mxu0 %v3217
    %3267 = vmatprep.subr.mxu0 %v3220
    %3268 = vmatpush1.msra.mxu0 %v3219
    %3269 = vmatprep.subr.mxu0 %v3222
    %3270 = vmatpush1.msra.mxu0 %v3221
    %3271 = vmatprep.subr.mxu0 %v3224
    %3272 = vmatpush1.msra.mxu0 %v3223
    %3273 = vmatprep.subr.mxu0 %v3226
    %3274 = vmatpush1.msra.mxu0 %v3225
    %3275 = vmatprep.subr.mxu0 %v3228
    %3276 = vmatpush1.msra.mxu0 %v3227
    %3277 = vmatprep.subr.mxu0 %v3230
    %3278 = vmatpush1.msra.mxu0 %v3229
    %3279 = vmatprep.subr.mxu0 %v3232
    %3280 = vmatpush1.msra.mxu0 %v3231
    %3281 = vmatprep.subr.mxu0 %v3234
    %3282 = vmatpush1.msra.mxu0 %v3233
    %3283 = vmatprep.subr.mxu0 %v3236
    %3284 = vmatpush1.msra.mxu0 %v3235
    %3285 = vmatprep.subr.mxu0 %v3238
    %3286 = vmatpush1.msra.mxu0 %v3237
    %3287 = vmatprep.subr.mxu0 %v3240
    %3288 = vmatpush1.msra.mxu0 %v3239
    %3289 = vmatprep.subr.mxu0 0.0
    %3290 = vmatpush1.msra.mxu0 0.0
    %3291 = vmatprep.subr.mxu0 0.0
    %3292 = vmatpush1.msra.mxu0 0.0
    %3293 = vmatprep.subr.mxu0 0.0
    %3294 = vmatpush1.msra.mxu0 0.0
    %3295 = vmatprep.subr.mxu0 0.0
    %3296 = vmatpush1.msra.mxu0 0.0
    %3297 = vmatprep.subr.mxu0 0.0
    %3298 = vmatpush1.msra.mxu0 0.0
    %3299 = vmatprep.subr.mxu0 0.0
    %3300 = vmatpush1.msra.mxu0 0.0
    %3301 = vmatprep.subr.mxu0 0.0
    %3302 = vmatpush1.msra.mxu0 0.0
    %3303 = vmatprep.subr.mxu0 0.0
    %3304 = vmatpush1.msra.mxu0 0.0
    %3305 = vmatprep.mubr.f32.mxu0 %v2447
    %3306 = vmatmul.mubr.f32.gmra.mrb[0].mxu0 %v2392
    %v3307 = vpop.f32.mrb[0].mxu0
    %v3308 = vadd.f32 0.0, %v3307
    %v3309 = vpop.f32.mrb[0].mxu0
    %v3310 = vadd.f32 0.0, %v3309
    %3311 = vmatprep.mubr.f32.mxu0 %v2450
    %3312 = vmatmul.mubr.f32.gmra.mrb[0].mxu0 %v2394
    %v3313 = vpop.f32.mrb[0].mxu0
    %v3314 = vadd.f32 0.0, %v3313
    %v3315 = vpop.f32.mrb[0].mxu0
    %v3316 = vadd.f32 0.0, %v3315
    %3317 = vmatprep.mubr.f32.mxu0 %v2453
    %3318 = vmatmul.mubr.f32.gmra.mrb[0].mxu0 %v2396
    %v3319 = vpop.f32.mrb[0].mxu0
    %v3320 = vadd.f32 0.0, %v3319
    %v3321 = vpop.f32.mrb[0].mxu0
    %v3322 = vadd.f32 0.0, %v3321
    %3323 = vdwg.mxu0
    %s3324 = scalar_lea.vmem %s11, 144
    %v3325 = vld [vmem:[%s3324] sm:$0xff]
    %v3326 = vld [vmem:[%s3324 + $0x8] sm:$0xff]
    %v3327 = vld [vmem:[%s3324 + $0x10] sm:$0xff]
    %v3328 = vld [vmem:[%s3324 + $0x18] sm:$0xff]
    %v3329 = vld [vmem:[%s3324 + $0x20] sm:$0xff]
    %v3330 = vld [vmem:[%s3324 + $0x28] sm:$0xff]
    %v3332 = vsel %vm2683, %v3325, 0
    %v3335 = vsel %vm2683, %v3326, 0
    %v3338 = vsel %vm2683, %v3327, 0
    %v3341 = vsel %vm2683, %v3328, 0
    %v3344 = vsel %vm2683, %v3329, 0
    %v3347 = vsel %vm2683, %v3330, 0
    %3349 = vmatprep.subr.mxu0 %v3310
    %3350 = vmatpush1.msra.mxu0 %v3308
    %3351 = vmatprep.subr.mxu0 %v3316
    %3352 = vmatpush1.msra.mxu0 %v3314
    %3353 = vmatprep.subr.mxu0 %v3322
    %3354 = vmatpush1.msra.mxu0 %v3320
    %3355 = vmatprep.subr.mxu0 0.0
    %3356 = vmatpush1.msra.mxu0 0.0
    %3357 = vmatprep.subr.mxu0 0.0
    %3358 = vmatpush1.msra.mxu0 0.0
    %3359 = vmatprep.subr.mxu0 0.0
    %3360 = vmatpush1.msra.mxu0 0.0
    %3361 = vmatprep.subr.mxu0 0.0
    %3362 = vmatpush1.msra.mxu0 0.0
    %3363 = vmatprep.subr.mxu0 0.0
    %3364 = vmatpush1.msra.mxu0 0.0
    %3365 = vmatprep.subr.mxu0 0.0
    %3366 = vmatpush1.msra.mxu0 0.0
    %3367 = vmatprep.subr.mxu0 0.0
    %3368 = vmatpush1.msra.mxu0 0.0
    %3369 = vmatprep.subr.mxu0 0.0
    %3370 = vmatpush1.msra.mxu0 0.0
    %3371 = vmatprep.subr.mxu0 0.0
    %3372 = vmatpush1.msra.mxu0 0.0
    %3373 = vmatprep.subr.mxu0 0.0
    %3374 = vmatpush1.msra.mxu0 0.0
    %3375 = vmatprep.subr.mxu0 0.0
    %3376 = vmatpush1.msra.mxu0 0.0
    %3377 = vmatprep.subr.mxu0 0.0
    %3378 = vmatpush1.msra.mxu0 0.0
    %3379 = vmatprep.subr.mxu0 0.0
    %3380 = vmatpush1.msra.mxu0 0.0
    %3381 = vmatprep.subr.mxu0 0.0
    %3382 = vmatpush1.msra.mxu0 0.0
    %3383 = vmatprep.subr.mxu0 0.0
    %3384 = vmatpush1.msra.mxu0 0.0
    %3385 = vmatprep.subr.mxu0 0.0
    %3386 = vmatpush1.msra.mxu0 0.0
    %3387 = vmatprep.subr.mxu0 0.0
    %3388 = vmatpush1.msra.mxu0 0.0
    %3389 = vmatprep.subr.mxu0 0.0
    %3390 = vmatpush1.msra.mxu0 0.0
    %3391 = vmatprep.subr.mxu0 0.0
    %3392 = vmatpush1.msra.mxu0 0.0
    %3393 = vmatprep.subr.mxu0 0.0
    %3394 = vmatpush1.msra.mxu0 0.0
    %3395 = vmatprep.subr.mxu0 0.0
    %3396 = vmatpush1.msra.mxu0 0.0
    %3397 = vmatprep.subr.mxu0 0.0
    %3398 = vmatpush1.msra.mxu0 0.0
    %3399 = vmatprep.subr.mxu0 0.0
    %3400 = vmatpush1.msra.mxu0 0.0
    %3401 = vmatprep.subr.mxu0 0.0
    %3402 = vmatpush1.msra.mxu0 0.0
    %3403 = vmatprep.subr.mxu0 0.0
    %3404 = vmatpush1.msra.mxu0 0.0
    %3405 = vmatprep.subr.mxu0 0.0
    %3406 = vmatpush1.msra.mxu0 0.0
    %3407 = vmatprep.subr.mxu0 0.0
    %3408 = vmatpush1.msra.mxu0 0.0
    %3409 = vmatprep.subr.mxu0 0.0
    %3410 = vmatpush1.msra.mxu0 0.0
    %3411 = vmatprep.subr.mxu0 0.0
    %3412 = vmatpush1.msra.mxu0 0.0
    %3413 = vmatprep.mubr.f32.mxu0 0.0
    %3414 = vmatmul.mubr.f32.gmra.mrb[0].mxu0 %v3332
    %v3415 = vpop.f32.mrb[0].mxu0
    %v3416 = vadd.f32 0.0, %v3415
    %v3417 = vpop.f32.mrb[0].mxu0
    %v3418 = vadd.f32 0.0, %v3417
    %3419 = vmatprep.mubr.f32.mxu0 0.0
    %3420 = vmatmul.mubr.f32.gmra.mrb[0].mxu0 %v3335
    %v3421 = vpop.f32.mrb[0].mxu0
    %v3422 = vadd.f32 0.0, %v3421
    %v3423 = vpop.f32.mrb[0].mxu0
    %v3424 = vadd.f32 0.0, %v3423
    %3425 = vmatprep.mubr.f32.mxu0 0.0
    %3426 = vmatmul.mubr.f32.gmra.mrb[0].mxu0 %v3338
    %v3427 = vpop.f32.mrb[0].mxu0
    %v3428 = vadd.f32 0.0, %v3427
    %v3429 = vpop.f32.mrb[0].mxu0
    %v3430 = vadd.f32 0.0, %v3429
    %3431 = vmatprep.mubr.f32.mxu0 0.0
    %3432 = vmatmul.mubr.f32.gmra.mrb[0].mxu0 %v3341
    %v3433 = vpop.f32.mrb[0].mxu0
    %v3434 = vadd.f32 0.0, %v3433
    %v3435 = vpop.f32.mrb[0].mxu0
    %v3436 = vadd.f32 0.0, %v3435
    %3437 = vmatprep.mubr.f32.mxu0 0.0
    %3438 = vmatmul.mubr.f32.gmra.mrb[0].mxu0 %v3344
    %v3439 = vpop.f32.mrb[0].mxu0
    %v3440 = vadd.f32 0.0, %v3439
    %v3441 = vpop.f32.mrb[0].mxu0
    %v3442 = vadd.f32 0.0, %v3441
    %3443 = vmatprep.mubr.f32.mxu0 0.0
    %3444 = vmatmul.mubr.f32.gmra.mrb[0].mxu0 %v3347
    %v3445 = vpop.f32.mrb[0].mxu0
    %v3446 = vadd.f32 0.0, %v3445
    %v3447 = vpop.f32.mrb[0].mxu0
    %v3448 = vadd.f32 0.0, %v3447
    %3449 = vdwg.mxu0
    %v3450 = vadd.f32 %v3180, %v3416
    %v3451 = vadd.f32 %v3181, %v3418
    %v3452 = vadd.f32 %v3182, %v3422
    %v3453 = vadd.f32 %v3183, %v3424
    %v3454 = vadd.f32 %v3184, %v3428
    %v3455 = vadd.f32 %v3185, %v3430
    %v3456 = vadd.f32 %v3186, %v3434
    %v3457 = vadd.f32 %v3187, %v3436
    %v3458 = vadd.f32 %v3188, %v3440
    %v3459 = vadd.f32 %v3189, %v3442
    %v3460 = vadd.f32 %v3190, %v3446
    %v3461 = vadd.f32 %v3191, %v3448
    %v3462 = vld [vmem:[%s12] sm:$0x3]
    %v3464 = vlaneseq
    %v3465 = vshrl.u32 %v3464, 7
    %v3466 = vsub.s32 0, %v3465
    %v3467 = vrot.slane %v3462, %v3466
    %v3468 = vlaneseq
    %v3469 = vshrl.u32 %v3468, 7
    %v3470 = vsub.s32 1, %v3469
    %v3471 = vrot.slane %v3462, %v3470
    %v3474 = vadd.f32 %v3450, %v3467
    %v3475 = vadd.f32 %v3451, %v3471
    %v3476 = vadd.f32 %v3452, %v3467
    %v3477 = vadd.f32 %v3453, %v3471
    %v3478 = vadd.f32 %v3454, %v3467
    %v3479 = vadd.f32 %v3455, %v3471
    %v3480 = vadd.f32 %v3456, %v3467
    %v3481 = vadd.f32 %v3457, %v3471
    %v3482 = vadd.f32 %v3458, %v3467
    %v3483 = vadd.f32 %v3459, %v3471
    %v3484 = vadd.f32 %v3460, %v3467
    %v3485 = vadd.f32 %v3461, %v3471
    %v3486 = vmax.f32 %v3474, 0.0
    %v3487 = vmax.f32 %v3475, 0.0
    %v3488 = vmax.f32 %v3476, 0.0
    %v3489 = vmax.f32 %v3477, 0.0
    %v3490 = vmax.f32 %v3478, 0.0
    %v3491 = vmax.f32 %v3479, 0.0
    %v3492 = vmax.f32 %v3480, 0.0
    %v3493 = vmax.f32 %v3481, 0.0
    %v3494 = vmax.f32 %v3482, 0.0
    %v3495 = vmax.f32 %v3483, 0.0
    %v3496 = vmax.f32 %v3484, 0.0
    %v3497 = vmax.f32 %v3485, 0.0
    %v3498 = vld [vmem:[%s13] sm:$0xff]
    %v3499 = vld [vmem:[%s13 + $0x8] sm:$0xff]
    %v3500 = vld [vmem:[%s13 + $0x10] sm:$0xff]
    %v3501 = vld [vmem:[%s13 + $0x18] sm:$0xff]
    %v3502 = vld [vmem:[%s13 + $0x20] sm:$0xff]
    %v3503 = vld [vmem:[%s13 + $0x28] sm:$0xff]
    %v3504 = vld [vmem:[%s13 + $0x30] sm:$0xff]
    %v3505 = vld [vmem:[%s13 + $0x38] sm:$0xff]
    %v3506 = vld [vmem:[%s13 + $0x40] sm:$0xff]
    %v3507 = vld [vmem:[%s13 + $0x48] sm:$0xff]
    %v3508 = vld [vmem:[%s13 + $0x50] sm:$0xff]
    %v3509 = vld [vmem:[%s13 + $0x58] sm:$0xff]
    %v3510 = vld [vmem:[%s13 + $0x60] sm:$0xff]
    %v3511 = vld [vmem:[%s13 + $0x68] sm:$0xff]
    %v3512 = vld [vmem:[%s13 + $0x70] sm:$0xff]
    %v3513 = vld [vmem:[%s13 + $0x78] sm:$0xff]
    %v3514 = vld [vmem:[%s13 + $0x80] sm:$0xff]
    %v3515 = vld [vmem:[%s13 + $0x88] sm:$0xff]
    %v3516 = vld [vmem:[%s13 + $0x90] sm:$0xff]
    %v3517 = vld [vmem:[%s13 + $0x98] sm:$0xff]
    %v3518 = vld [vmem:[%s13 + $0xa0] sm:$0xff]
    %v3519 = vld [vmem:[%s13 + $0xa8] sm:$0xff]
    %v3520 = vld [vmem:[%s13 + $0xb0] sm:$0xff]
    %v3521 = vld [vmem:[%s13 + $0xb8] sm:$0xff]
    %v3522 = vld [vmem:[%s13 + $0xc0] sm:$0xff]
    %v3523 = vld [vmem:[%s13 + $0xc8] sm:$0xff]
    %v3524 = vld [vmem:[%s13 + $0xd0] sm:$0xff]
    %v3525 = vld [vmem:[%s13 + $0xd8] sm:$0xff]
    %v3526 = vld [vmem:[%s13 + $0xe0] sm:$0xff]
    %v3527 = vld [vmem:[%s13 + $0xe8] sm:$0xff]
    %v3528 = vld [vmem:[%s13 + $0xf0] sm:$0xff]
    %v3529 = vld [vmem:[%s13 + $0xf8] sm:$0xff]
    %v3530 = vld [vmem:[%s13 + $0x100] sm:$0xff]
    %v3531 = vld [vmem:[%s13 + $0x108] sm:$0xff]
    %v3532 = vld [vmem:[%s13 + $0x110] sm:$0xff]
    %v3533 = vld [vmem:[%s13 + $0x118] sm:$0xff]
    %v3534 = vld [vmem:[%s13 + $0x120] sm:$0xff]
    %v3535 = vld [vmem:[%s13 + $0x128] sm:$0xff]
    %v3536 = vld [vmem:[%s13 + $0x130] sm:$0xff]
    %v3537 = vld [vmem:[%s13 + $0x138] sm:$0xff]
    %v3538 = vld [vmem:[%s13 + $0x140] sm:$0xff]
    %v3539 = vld [vmem:[%s13 + $0x148] sm:$0xff]
    %v3540 = vld [vmem:[%s13 + $0x150] sm:$0xff]
    %v3541 = vld [vmem:[%s13 + $0x158] sm:$0xff]
    %v3542 = vld [vmem:[%s13 + $0x160] sm:$0xff]
    %v3543 = vld [vmem:[%s13 + $0x168] sm:$0xff]
    %v3544 = vld [vmem:[%s13 + $0x170] sm:$0xff]
    %v3545 = vld [vmem:[%s13 + $0x178] sm:$0xff]
    %v3547 = vsel %vm612, %v3487, 0
    %v3550 = vsel %vm612, %v3489, 0
    %v3553 = vsel %vm612, %v3491, 0
    %v3556 = vsel %vm612, %v3493, 0
    %v3559 = vsel %vm612, %v3495, 0
    %v3562 = vsel %vm612, %v3497, 0
    %3564 = vmatprep.subr.mxu0 %v3499
    %3565 = vmatpush1.msra.mxu0 %v3498
    %3566 = vmatprep.subr.mxu0 %v3501
    %3567 = vmatpush1.msra.mxu0 %v3500
    %3568 = vmatprep.subr.mxu0 %v3503
    %3569 = vmatpush1.msra.mxu0 %v3502
    %3570 = vmatprep.subr.mxu0 %v3505
    %3571 = vmatpush1.msra.mxu0 %v3504
    %3572 = vmatprep.subr.mxu0 %v3507
    %3573 = vmatpush1.msra.mxu0 %v3506
    %3574 = vmatprep.subr.mxu0 %v3509
    %3575 = vmatpush1.msra.mxu0 %v3508
    %3576 = vmatprep.subr.mxu0 %v3511
    %3577 = vmatpush1.msra.mxu0 %v3510
    %3578 = vmatprep.subr.mxu0 %v3513
    %3579 = vmatpush1.msra.mxu0 %v3512
    %3580 = vmatprep.subr.mxu0 %v3515
    %3581 = vmatpush1.msra.mxu0 %v3514
    %3582 = vmatprep.subr.mxu0 %v3517
    %3583 = vmatpush1.msra.mxu0 %v3516
    %3584 = vmatprep.subr.mxu0 %v3519
    %3585 = vmatpush1.msra.mxu0 %v3518
    %3586 = vmatprep.subr.mxu0 %v3521
    %3587 = vmatpush1.msra.mxu0 %v3520
    %3588 = vmatprep.subr.mxu0 %v3523
    %3589 = vmatpush1.msra.mxu0 %v3522
    %3590 = vmatprep.subr.mxu0 %v3525
    %3591 = vmatpush1.msra.mxu0 %v3524
    %3592 = vmatprep.subr.mxu0 %v3527
    %3593 = vmatpush1.msra.mxu0 %v3526
    %3594 = vmatprep.subr.mxu0 %v3529
    %3595 = vmatpush1.msra.mxu0 %v3528
    %3596 = vmatprep.subr.mxu0 %v3531
    %3597 = vmatpush1.msra.mxu0 %v3530
    %3598 = vmatprep.subr.mxu0 %v3533
    %3599 = vmatpush1.msra.mxu0 %v3532
    %3600 = vmatprep.subr.mxu0 %v3535
    %3601 = vmatpush1.msra.mxu0 %v3534
    %3602 = vmatprep.subr.mxu0 %v3537
    %3603 = vmatpush1.msra.mxu0 %v3536
    %3604 = vmatprep.subr.mxu0 %v3539
    %3605 = vmatpush1.msra.mxu0 %v3538
    %3606 = vmatprep.subr.mxu0 %v3541
    %3607 = vmatpush1.msra.mxu0 %v3540
    %3608 = vmatprep.subr.mxu0 %v3543
    %3609 = vmatpush1.msra.mxu0 %v3542
    %3610 = vmatprep.subr.mxu0 %v3545
    %3611 = vmatpush1.msra.mxu0 %v3544
    %3612 = vmatprep.subr.mxu0 0.0
    %3613 = vmatpush1.msra.mxu0 0.0
    %3614 = vmatprep.subr.mxu0 0.0
    %3615 = vmatpush1.msra.mxu0 0.0
    %3616 = vmatprep.subr.mxu0 0.0
    %3617 = vmatpush1.msra.mxu0 0.0
    %3618 = vmatprep.subr.mxu0 0.0
    %3619 = vmatpush1.msra.mxu0 0.0
    %3620 = vmatprep.subr.mxu0 0.0
    %3621 = vmatpush1.msra.mxu0 0.0
    %3622 = vmatprep.subr.mxu0 0.0
    %3623 = vmatpush1.msra.mxu0 0.0
    %3624 = vmatprep.subr.mxu0 0.0
    %3625 = vmatpush1.msra.mxu0 0.0
    %3626 = vmatprep.subr.mxu0 0.0
    %3627 = vmatpush1.msra.mxu0 0.0
    %3628 = vmatprep.mubr.f32.mxu0 %v3547
    %3629 = vmatmul.mubr.f32.gmra.mrb[0].mxu0 %v3486
    %v3630 = vpop.f32.mrb[0].mxu0
    %v3631 = vadd.f32 0.0, %v3630
    %v3632 = vpop.f32.mrb[0].mxu0
    %v3633 = vadd.f32 0.0, %v3632
    %3634 = vmatprep.mubr.f32.mxu0 %v3550
    %3635 = vmatmul.mubr.f32.gmra.mrb[0].mxu0 %v3488
    %v3636 = vpop.f32.mrb[0].mxu0
    %v3637 = vadd.f32 0.0, %v3636
    %v3638 = vpop.f32.mrb[0].mxu0
    %v3639 = vadd.f32 0.0, %v3638
    %3640 = vmatprep.mubr.f32.mxu0 %v3553
    %3641 = vmatmul.mubr.f32.gmra.mrb[0].mxu0 %v3490
    %v3642 = vpop.f32.mrb[0].mxu0
    %v3643 = vadd.f32 0.0, %v3642
    %v3644 = vpop.f32.mrb[0].mxu0
    %v3645 = vadd.f32 0.0, %v3644
    %3646 = vmatprep.mubr.f32.mxu0 %v3556
    %3647 = vmatmul.mubr.f32.gmra.mrb[0].mxu0 %v3492
    %v3648 = vpop.f32.mrb[0].mxu0
    %v3649 = vadd.f32 0.0, %v3648
    %v3650 = vpop.f32.mrb[0].mxu0
    %v3651 = vadd.f32 0.0, %v3650
    %3652 = vmatprep.mubr.f32.mxu0 %v3559
    %3653 = vmatmul.mubr.f32.gmra.mrb[0].mxu0 %v3494
    %v3654 = vpop.f32.mrb[0].mxu0
    %v3655 = vadd.f32 0.0, %v3654
    %v3656 = vpop.f32.mrb[0].mxu0
    %v3657 = vadd.f32 0.0, %v3656
    %3658 = vmatprep.mubr.f32.mxu0 %v3562
    %3659 = vmatmul.mubr.f32.gmra.mrb[0].mxu0 %v3496
    %v3660 = vpop.f32.mrb[0].mxu0
    %v3661 = vadd.f32 0.0, %v3660
    %v3662 = vpop.f32.mrb[0].mxu0
    %v3663 = vadd.f32 0.0, %v3662
    %3664 = vdwg.mxu0
    %v3665 = vld [vmem:[%s14] sm:$0xff]
    %v3666 = vld [vmem:[%s14 + $0x8] sm:$0xff]
    %v3667 = vld [vmem:[%s14 + $0x10] sm:$0xff]
    %v3668 = vld [vmem:[%s14 + $0x18] sm:$0xff]
    %v3669 = vld [vmem:[%s14 + $0x20] sm:$0xff]
    %v3670 = vld [vmem:[%s14 + $0x28] sm:$0xff]
    %v3671 = vld [vmem:[%s14 + $0x30] sm:$0xff]
    %v3672 = vld [vmem:[%s14 + $0x38] sm:$0xff]
    %v3673 = vld [vmem:[%s14 + $0x40] sm:$0xff]
    %v3674 = vld [vmem:[%s14 + $0x48] sm:$0xff]
    %v3675 = vld [vmem:[%s14 + $0x50] sm:$0xff]
    %v3676 = vld [vmem:[%s14 + $0x58] sm:$0xff]
    %s3677 = scalar_lea.vmem %s13, 384
    %v3678 = vld [vmem:[%s3677] sm:$0xff]
    %v3679 = vld [vmem:[%s3677 + $0x8] sm:$0xff]
    %v3680 = vld [vmem:[%s3677 + $0x10] sm:$0xff]
    %v3681 = vld [vmem:[%s3677 + $0x18] sm:$0xff]
    %v3682 = vld [vmem:[%s3677 + $0x20] sm:$0xff]
    %v3683 = vld [vmem:[%s3677 + $0x28] sm:$0xff]
    %v3684 = vld [vmem:[%s3677 + $0x30] sm:$0xff]
    %v3685 = vld [vmem:[%s3677 + $0x38] sm:$0xff]
    %v3686 = vld [vmem:[%s3677 + $0x40] sm:$0xff]
    %v3687 = vld [vmem:[%s3677 + $0x48] sm:$0xff]
    %v3688 = vld [vmem:[%s3677 + $0x50] sm:$0xff]
    %v3689 = vld [vmem:[%s3677 + $0x58] sm:$0xff]
    %v3690 = vld [vmem:[%s3677 + $0x60] sm:$0xff]
    %v3691 = vld [vmem:[%s3677 + $0x68] sm:$0xff]
    %v3692 = vld [vmem:[%s3677 + $0x70] sm:$0xff]
    %v3693 = vld [vmem:[%s3677 + $0x78] sm:$0xff]
    %v3694 = vld [vmem:[%s3677 + $0x80] sm:$0xff]
    %v3695 = vld [vmem:[%s3677 + $0x88] sm:$0xff]
    %v3696 = vld [vmem:[%s3677 + $0x90] sm:$0xff]
    %v3697 = vld [vmem:[%s3677 + $0x98] sm:$0xff]
    %v3698 = vld [vmem:[%s3677 + $0xa0] sm:$0xff]
    %v3699 = vld [vmem:[%s3677 + $0xa8] sm:$0xff]
    %v3700 = vld [vmem:[%s3677 + $0xb0] sm:$0xff]
    %v3701 = vld [vmem:[%s3677 + $0xb8] sm:$0xff]
    %v3702 = vld [vmem:[%s3677 + $0xc0] sm:$0xff]
    %v3703 = vld [vmem:[%s3677 + $0xc8] sm:$0xff]
    %v3704 = vld [vmem:[%s3677 + $0xd0] sm:$0xff]
    %v3705 = vld [vmem:[%s3677 + $0xd8] sm:$0xff]
    %v3706 = vld [vmem:[%s3677 + $0xe0] sm:$0xff]
    %v3707 = vld [vmem:[%s3677 + $0xe8] sm:$0xff]
    %v3708 = vld [vmem:[%s3677 + $0xf0] sm:$0xff]
    %v3709 = vld [vmem:[%s3677 + $0xf8] sm:$0xff]
    %v3710 = vld [vmem:[%s3677 + $0x100] sm:$0xff]
    %v3711 = vld [vmem:[%s3677 + $0x108] sm:$0xff]
    %v3712 = vld [vmem:[%s3677 + $0x110] sm:$0xff]
    %v3713 = vld [vmem:[%s3677 + $0x118] sm:$0xff]
    %v3714 = vld [vmem:[%s3677 + $0x120] sm:$0xff]
    %v3715 = vld [vmem:[%s3677 + $0x128] sm:$0xff]
    %v3716 = vld [vmem:[%s3677 + $0x130] sm:$0xff]
    %v3717 = vld [vmem:[%s3677 + $0x138] sm:$0xff]
    %v3718 = vld [vmem:[%s3677 + $0x140] sm:$0xff]
    %v3719 = vld [vmem:[%s3677 + $0x148] sm:$0xff]
    %v3720 = vld [vmem:[%s3677 + $0x150] sm:$0xff]
    %v3721 = vld [vmem:[%s3677 + $0x158] sm:$0xff]
    %v3722 = vld [vmem:[%s3677 + $0x160] sm:$0xff]
    %v3723 = vld [vmem:[%s3677 + $0x168] sm:$0xff]
    %v3724 = vld [vmem:[%s3677 + $0x170] sm:$0xff]
    %v3725 = vld [vmem:[%s3677 + $0x178] sm:$0xff]
    %3726 = vmatprep.subr.mxu0 %v3679
    %3727 = vmatpush1.msra.mxu0 %v3678
    %3728 = vmatprep.subr.mxu0 %v3681
    %3729 = vmatpush1.msra.mxu0 %v3680
    %3730 = vmatprep.subr.mxu0 %v3683
    %3731 = vmatpush1.msra.mxu0 %v3682
    %3732 = vmatprep.subr.mxu0 %v3685
    %3733 = vmatpush1.msra.mxu0 %v3684
    %3734 = vmatprep.subr.mxu0 %v3687
    %3735 = vmatpush1.msra.mxu0 %v3686
    %3736 = vmatprep.subr.mxu0 %v3689
    %3737 = vmatpush1.msra.mxu0 %v3688
    %3738 = vmatprep.subr.mxu0 %v3691
    %3739 = vmatpush1.msra.mxu0 %v3690
    %3740 = vmatprep.subr.mxu0 %v3693
    %3741 = vmatpush1.msra.mxu0 %v3692
    %3742 = vmatprep.subr.mxu0 %v3695
    %3743 = vmatpush1.msra.mxu0 %v3694
    %3744 = vmatprep.subr.mxu0 %v3697
    %3745 = vmatpush1.msra.mxu0 %v3696
    %3746 = vmatprep.subr.mxu0 %v3699
    %3747 = vmatpush1.msra.mxu0 %v3698
    %3748 = vmatprep.subr.mxu0 %v3701
    %3749 = vmatpush1.msra.mxu0 %v3700
    %3750 = vmatprep.subr.mxu0 %v3703
    %3751 = vmatpush1.msra.mxu0 %v3702
    %3752 = vmatprep.subr.mxu0 %v3705
    %3753 = vmatpush1.msra.mxu0 %v3704
    %3754 = vmatprep.subr.mxu0 %v3707
    %3755 = vmatpush1.msra.mxu0 %v3706
    %3756 = vmatprep.subr.mxu0 %v3709
    %3757 = vmatpush1.msra.mxu0 %v3708
    %3758 = vmatprep.subr.mxu0 %v3711
    %3759 = vmatpush1.msra.mxu0 %v3710
    %3760 = vmatprep.subr.mxu0 %v3713
    %3761 = vmatpush1.msra.mxu0 %v3712
    %3762 = vmatprep.subr.mxu0 %v3715
    %3763 = vmatpush1.msra.mxu0 %v3714
    %3764 = vmatprep.subr.mxu0 %v3717
    %3765 = vmatpush1.msra.mxu0 %v3716
    %3766 = vmatprep.subr.mxu0 %v3719
    %3767 = vmatpush1.msra.mxu0 %v3718
    %3768 = vmatprep.subr.mxu0 %v3721
    %3769 = vmatpush1.msra.mxu0 %v3720
    %3770 = vmatprep.subr.mxu0 %v3723
    %3771 = vmatpush1.msra.mxu0 %v3722
    %3772 = vmatprep.subr.mxu0 %v3725
    %3773 = vmatpush1.msra.mxu0 %v3724
    %3774 = vmatprep.subr.mxu0 0.0
    %3775 = vmatpush1.msra.mxu0 0.0
    %3776 = vmatprep.subr.mxu0 0.0
    %3777 = vmatpush1.msra.mxu0 0.0
    %3778 = vmatprep.subr.mxu0 0.0
    %3779 = vmatpush1.msra.mxu0 0.0
    %3780 = vmatprep.subr.mxu0 0.0
    %3781 = vmatpush1.msra.mxu0 0.0
    %3782 = vmatprep.subr.mxu0 0.0
    %3783 = vmatpush1.msra.mxu0 0.0
    %3784 = vmatprep.subr.mxu0 0.0
    %3785 = vmatpush1.msra.mxu0 0.0
    %3786 = vmatprep.subr.mxu0 0.0
    %3787 = vmatpush1.msra.mxu0 0.0
    %3788 = vmatprep.subr.mxu0 0.0
    %3789 = vmatpush1.msra.mxu0 0.0
    %3790 = vmatprep.mubr.f32.mxu0 %v3547
    %3791 = vmatmul.mubr.f32.gmra.mrb[0].mxu0 %v3486
    %v3792 = vpop.f32.mrb[0].mxu0
    %v3793 = vadd.f32 0.0, %v3792
    %v3794 = vpop.f32.mrb[0].mxu0
    %v3795 = vadd.f32 0.0, %v3794
    %3796 = vmatprep.mubr.f32.mxu0 %v3550
    %3797 = vmatmul.mubr.f32.gmra.mrb[0].mxu0 %v3488
    %v3798 = vpop.f32.mrb[0].mxu0
    %v3799 = vadd.f32 0.0, %v3798
    %v3800 = vpop.f32.mrb[0].mxu0
    %v3801 = vadd.f32 0.0, %v3800
    %3802 = vmatprep.mubr.f32.mxu0 %v3553
    %3803 = vmatmul.mubr.f32.gmra.mrb[0].mxu0 %v3490
    %v3804 = vpop.f32.mrb[0].mxu0
    %v3805 = vadd.f32 0.0, %v3804
    %v3806 = vpop.f32.mrb[0].mxu0
    %v3807 = vadd.f32 0.0, %v3806
    %3808 = vmatprep.mubr.f32.mxu0 %v3556
    %3809 = vmatmul.mubr.f32.gmra.mrb[0].mxu0 %v3492
    %v3810 = vpop.f32.mrb[0].mxu0
    %v3811 = vadd.f32 0.0, %v3810
    %v3812 = vpop.f32.mrb[0].mxu0
    %v3813 = vadd.f32 0.0, %v3812
    %3814 = vmatprep.mubr.f32.mxu0 %v3559
    %3815 = vmatmul.mubr.f32.gmra.mrb[0].mxu0 %v3494
    %v3816 = vpop.f32.mrb[0].mxu0
    %v3817 = vadd.f32 0.0, %v3816
    %v3818 = vpop.f32.mrb[0].mxu0
    %v3819 = vadd.f32 0.0, %v3818
    %3820 = vmatprep.mubr.f32.mxu0 %v3562
    %3821 = vmatmul.mubr.f32.gmra.mrb[0].mxu0 %v3496
    %v3822 = vpop.f32.mrb[0].mxu0
    %v3823 = vadd.f32 0.0, %v3822
    %v3824 = vpop.f32.mrb[0].mxu0
    %v3825 = vadd.f32 0.0, %v3824
    %3826 = vdwg.mxu0
    %s3827 = scalar_lea.vmem %s14, 96
    %v3828 = vld [vmem:[%s3827] sm:$0xff]
    %v3829 = vld [vmem:[%s3827 + $0x8] sm:$0xff]
    %v3830 = vld [vmem:[%s3827 + $0x10] sm:$0xff]
    %v3831 = vld [vmem:[%s3827 + $0x18] sm:$0xff]
    %v3832 = vld [vmem:[%s3827 + $0x20] sm:$0xff]
    %v3833 = vld [vmem:[%s3827 + $0x28] sm:$0xff]
    %v3834 = vld [vmem:[%s3827 + $0x30] sm:$0xff]
    %v3835 = vld [vmem:[%s3827 + $0x38] sm:$0xff]
    %v3836 = vld [vmem:[%s3827 + $0x40] sm:$0xff]
    %v3837 = vld [vmem:[%s3827 + $0x48] sm:$0xff]
    %v3838 = vld [vmem:[%s3827 + $0x50] sm:$0xff]
    %v3839 = vld [vmem:[%s3827 + $0x58] sm:$0xff]
    %vm3840 = vcmask 392192
    %v3842 = vsel %vm3840, %v3828, 0
    %v3845 = vsel %vm3840, %v3829, 0
    %v3848 = vsel %vm3840, %v3830, 0
    %v3851 = vsel %vm3840, %v3831, 0
    %v3854 = vsel %vm3840, %v3832, 0
    %v3857 = vsel %vm3840, %v3833, 0
    %v3860 = vsel %vm3840, %v3834, 0
    %v3863 = vsel %vm3840, %v3835, 0
    %v3866 = vsel %vm3840, %v3836, 0
    %v3869 = vsel %vm3840, %v3837, 0
    %v3872 = vsel %vm3840, %v3838, 0
    %v3875 = vsel %vm3840, %v3839, 0
    %3877 = vmatprep.subr.mxu0 %v3795
    %3878 = vmatpush1.msra.mxu0 %v3793
    %3879 = vmatprep.subr.mxu0 %v3801
    %3880 = vmatpush1.msra.mxu0 %v3799
    %3881 = vmatprep.subr.mxu0 %v3807
    %3882 = vmatpush1.msra.mxu0 %v3805
    %3883 = vmatprep.subr.mxu0 %v3813
    %3884 = vmatpush1.msra.mxu0 %v3811
    %3885 = vmatprep.subr.mxu0 %v3819
    %3886 = vmatpush1.msra.mxu0 %v3817
    %3887 = vmatprep.subr.mxu0 %v3825
    %3888 = vmatpush1.msra.mxu0 %v3823
    %3889 = vmatprep.subr.mxu0 0.0
    %3890 = vmatpush1.msra.mxu0 0.0
    %3891 = vmatprep.subr.mxu0 0.0
    %3892 = vmatpush1.msra.mxu0 0.0
    %3893 = vmatprep.subr.mxu0 0.0
    %3894 = vmatpush1.msra.mxu0 0.0
    %3895 = vmatprep.subr.mxu0 0.0
    %3896 = vmatpush1.msra.mxu0 0.0
    %3897 = vmatprep.subr.mxu0 0.0
    %3898 = vmatpush1.msra.mxu0 0.0
    %3899 = vmatprep.subr.mxu0 0.0
    %3900 = vmatpush1.msra.mxu0 0.0
    %3901 = vmatprep.subr.mxu0 0.0
    %3902 = vmatpush1.msra.mxu0 0.0
    %3903 = vmatprep.subr.mxu0 0.0
    %3904 = vmatpush1.msra.mxu0 0.0
    %3905 = vmatprep.subr.mxu0 0.0
    %3906 = vmatpush1.msra.mxu0 0.0
    %3907 = vmatprep.subr.mxu0 0.0
    %3908 = vmatpush1.msra.mxu0 0.0
    %3909 = vmatprep.subr.mxu0 0.0
    %3910 = vmatpush1.msra.mxu0 0.0
    %3911 = vmatprep.subr.mxu0 0.0
    %3912 = vmatpush1.msra.mxu0 0.0
    %3913 = vmatprep.subr.mxu0 0.0
    %3914 = vmatpush1.msra.mxu0 0.0
    %3915 = vmatprep.subr.mxu0 0.0
    %3916 = vmatpush1.msra.mxu0 0.0
    %3917 = vmatprep.subr.mxu0 0.0
    %3918 = vmatpush1.msra.mxu0 0.0
    %3919 = vmatprep.subr.mxu0 0.0
    %3920 = vmatpush1.msra.mxu0 0.0
    %3921 = vmatprep.subr.mxu0 0.0
    %3922 = vmatpush1.msra.mxu0 0.0
    %3923 = vmatprep.subr.mxu0 0.0
    %3924 = vmatpush1.msra.mxu0 0.0
    %3925 = vmatprep.subr.mxu0 0.0
    %3926 = vmatpush1.msra.mxu0 0.0
    %3927 = vmatprep.subr.mxu0 0.0
    %3928 = vmatpush1.msra.mxu0 0.0
    %3929 = vmatprep.subr.mxu0 0.0
    %3930 = vmatpush1.msra.mxu0 0.0
    %3931 = vmatprep.subr.mxu0 0.0
    %3932 = vmatpush1.msra.mxu0 0.0
    %3933 = vmatprep.subr.mxu0 0.0
    %3934 = vmatpush1.msra.mxu0 0.0
    %3935 = vmatprep.subr.mxu0 0.0
    %3936 = vmatpush1.msra.mxu0 0.0
    %3937 = vmatprep.subr.mxu0 0.0
    %3938 = vmatpush1.msra.mxu0 0.0
    %3939 = vmatprep.subr.mxu0 0.0
    %3940 = vmatpush1.msra.mxu0 0.0
    %3941 = vmatprep.mubr.f32.mxu0 0.0
    %3942 = vmatmul.mubr.f32.gmra.mrb[0].mxu0 %v3842
    %v3943 = vpop.f32.mrb[0].mxu0
    %v3944 = vadd.f32 0.0, %v3943
    %v3945 = vpop.f32.mrb[0].mxu0
    %v3946 = vadd.f32 0.0, %v3945
    %3947 = vmatprep.mubr.f32.mxu0 0.0
    %3948 = vmatmul.mubr.f32.gmra.mrb[0].mxu0 %v3845
    %v3949 = vpop.f32.mrb[0].mxu0
    %v3950 = vadd.f32 0.0, %v3949
    %v3951 = vpop.f32.mrb[0].mxu0
    %v3952 = vadd.f32 0.0, %v3951
    %3953 = vmatprep.mubr.f32.mxu0 0.0
    %3954 = vmatmul.mubr.f32.gmra.mrb[0].mxu0 %v3848
    %v3955 = vpop.f32.mrb[0].mxu0
    %v3956 = vadd.f32 0.0, %v3955
    %v3957 = vpop.f32.mrb[0].mxu0
    %v3958 = vadd.f32 0.0, %v3957
    %3959 = vmatprep.mubr.f32.mxu0 0.0
    %3960 = vmatmul.mubr.f32.gmra.mrb[0].mxu0 %v3851
    %v3961 = vpop.f32.mrb[0].mxu0
    %v3962 = vadd.f32 0.0, %v3961
    %v3963 = vpop.f32.mrb[0].mxu0
    %v3964 = vadd.f32 0.0, %v3963
    %3965 = vmatprep.mubr.f32.mxu0 0.0
    %3966 = vmatmul.mubr.f32.gmra.mrb[0].mxu0 %v3854
    %v3967 = vpop.f32.mrb[0].mxu0
    %v3968 = vadd.f32 0.0, %v3967
    %v3969 = vpop.f32.mrb[0].mxu0
    %v3970 = vadd.f32 0.0, %v3969
    %3971 = vmatprep.mubr.f32.mxu0 0.0
    %3972 = vmatmul.mubr.f32.gmra.mrb[0].mxu0 %v3857
    %v3973 = vpop.f32.mrb[0].mxu0
    %v3974 = vadd.f32 0.0, %v3973
    %v3975 = vpop.f32.mrb[0].mxu0
    %v3976 = vadd.f32 0.0, %v3975
    %3977 = vmatprep.mubr.f32.mxu0 0.0
    %3978 = vmatmul.mubr.f32.gmra.mrb[0].mxu0 %v3860
    %v3979 = vpop.f32.mrb[0].mxu0
    %v3980 = vadd.f32 0.0, %v3979
    %v3981 = vpop.f32.mrb[0].mxu0
    %v3982 = vadd.f32 0.0, %v3981
    %3983 = vmatprep.mubr.f32.mxu0 0.0
    %3984 = vmatmul.mubr.f32.gmra.mrb[0].mxu0 %v3863
    %v3985 = vpop.f32.mrb[0].mxu0
    %v3986 = vadd.f32 0.0, %v3985
    %v3987 = vpop.f32.mrb[0].mxu0
    %v3988 = vadd.f32 0.0, %v3987
    %3989 = vmatprep.mubr.f32.mxu0 0.0
    %3990 = vmatmul.mubr.f32.gmra.mrb[0].mxu0 %v3866
    %v3991 = vpop.f32.mrb[0].mxu0
    %v3992 = vadd.f32 0.0, %v3991
    %v3993 = vpop.f32.mrb[0].mxu0
    %v3994 = vadd.f32 0.0, %v3993
    %3995 = vmatprep.mubr.f32.mxu0 0.0
    %3996 = vmatmul.mubr.f32.gmra.mrb[0].mxu0 %v3869
    %v3997 = vpop.f32.mrb[0].mxu0
    %v3998 = vadd.f32 0.0, %v3997
    %v3999 = vpop.f32.mrb[0].mxu0
    %v4000 = vadd.f32 0.0, %v3999
    %4001 = vmatprep.mubr.f32.mxu0 0.0
    %4002 = vmatmul.mubr.f32.gmra.mrb[0].mxu0 %v3872
    %v4003 = vpop.f32.mrb[0].mxu0
    %v4004 = vadd.f32 0.0, %v4003
    %v4005 = vpop.f32.mrb[0].mxu0
    %v4006 = vadd.f32 0.0, %v4005
    %4007 = vmatprep.mubr.f32.mxu0 0.0
    %4008 = vmatmul.mubr.f32.gmra.mrb[0].mxu0 %v3875
    %v4009 = vpop.f32.mrb[0].mxu0
    %v4010 = vadd.f32 0.0, %v4009
    %v4011 = vpop.f32.mrb[0].mxu0
    %v4012 = vadd.f32 0.0, %v4011
    %4013 = vdwg.mxu0
    %v4015 = vsel %vm3840, %v3665, 0
    %v4018 = vsel %vm3840, %v3666, 0
    %v4021 = vsel %vm3840, %v3667, 0
    %v4024 = vsel %vm3840, %v3668, 0
    %v4027 = vsel %vm3840, %v3669, 0
    %v4030 = vsel %vm3840, %v3670, 0
    %v4033 = vsel %vm3840, %v3671, 0
    %v4036 = vsel %vm3840, %v3672, 0
    %v4039 = vsel %vm3840, %v3673, 0
    %v4042 = vsel %vm3840, %v3674, 0
    %v4045 = vsel %vm3840, %v3675, 0
    %v4048 = vsel %vm3840, %v3676, 0
    %4050 = vmatprep.subr.mxu0 %v3633
    %4051 = vmatpush1.msra.mxu0 %v3631
    %4052 = vmatprep.subr.mxu0 %v3639
    %4053 = vmatpush1.msra.mxu0 %v3637
    %4054 = vmatprep.subr.mxu0 %v3645
    %4055 = vmatpush1.msra.mxu0 %v3643
    %4056 = vmatprep.subr.mxu0 %v3651
    %4057 = vmatpush1.msra.mxu0 %v3649
    %4058 = vmatprep.subr.mxu0 %v3657
    %4059 = vmatpush1.msra.mxu0 %v3655
    %4060 = vmatprep.subr.mxu0 %v3663
    %4061 = vmatpush1.msra.mxu0 %v3661
    %4062 = vmatprep.subr.mxu0 0.0
    %4063 = vmatpush1.msra.mxu0 0.0
    %4064 = vmatprep.subr.mxu0 0.0
    %4065 = vmatpush1.msra.mxu0 0.0
    %4066 = vmatprep.subr.mxu0 0.0
    %4067 = vmatpush1.msra.mxu0 0.0
    %4068 = vmatprep.subr.mxu0 0.0
    %4069 = vmatpush1.msra.mxu0 0.0
    %4070 = vmatprep.subr.mxu0 0.0
    %4071 = vmatpush1.msra.mxu0 0.0
    %4072 = vmatprep.subr.mxu0 0.0
    %4073 = vmatpush1.msra.mxu0 0.0
    %4074 = vmatprep.subr.mxu0 0.0
    %4075 = vmatpush1.msra.mxu0 0.0
    %4076 = vmatprep.subr.mxu0 0.0
    %4077 = vmatpush1.msra.mxu0 0.0
    %4078 = vmatprep.subr.mxu0 0.0
    %4079 = vmatpush1.msra.mxu0 0.0
    %4080 = vmatprep.subr.mxu0 0.0
    %4081 = vmatpush1.msra.mxu0 0.0
    %4082 = vmatprep.subr.mxu0 0.0
    %4083 = vmatpush1.msra.mxu0 0.0
    %4084 = vmatprep.subr.mxu0 0.0
    %4085 = vmatpush1.msra.mxu0 0.0
    %4086 = vmatprep.subr.mxu0 0.0
    %4087 = vmatpush1.msra.mxu0 0.0
    %4088 = vmatprep.subr.mxu0 0.0
    %4089 = vmatpush1.msra.mxu0 0.0
    %4090 = vmatprep.subr.mxu0 0.0
    %4091 = vmatpush1.msra.mxu0 0.0
    %4092 = vmatprep.subr.mxu0 0.0
    %4093 = vmatpush1.msra.mxu0 0.0
    %4094 = vmatprep.subr.mxu0 0.0
    %4095 = vmatpush1.msra.mxu0 0.0
    %4096 = vmatprep.subr.mxu0 0.0
    %4097 = vmatpush1.msra.mxu0 0.0
    %4098 = vmatprep.subr.mxu0 0.0
    %4099 = vmatpush1.msra.mxu0 0.0
    %4100 = vmatprep.subr.mxu0 0.0
    %4101 = vmatpush1.msra.mxu0 0.0
    %4102 = vmatprep.subr.mxu0 0.0
    %4103 = vmatpush1.msra.mxu0 0.0
    %4104 = vmatprep.subr.mxu0 0.0
    %4105 = vmatpush1.msra.mxu0 0.0
    %4106 = vmatprep.subr.mxu0 0.0
    %4107 = vmatpush1.msra.mxu0 0.0
    %4108 = vmatprep.subr.mxu0 0.0
    %4109 = vmatpush1.msra.mxu0 0.0
    %4110 = vmatprep.subr.mxu0 0.0
    %4111 = vmatpush1.msra.mxu0 0.0
    %4112 = vmatprep.subr.mxu0 0.0
    %4113 = vmatpush1.msra.mxu0 0.0
    %4114 = vmatprep.mubr.f32.mxu0 0.0
    %4115 = vmatmul.mubr.f32.gmra.mrb[0].mxu0 %v4015
    %v4116 = vpop.f32.mrb[0].mxu0
    %v4117 = vadd.f32 %v3944, %v4116
    %v4118 = vpop.f32.mrb[0].mxu0
    %v4119 = vadd.f32 %v3946, %v4118
    %4120 = vmatprep.mubr.f32.mxu0 0.0
    %4121 = vmatmul.mubr.f32.gmra.mrb[0].mxu0 %v4018
    %v4122 = vpop.f32.mrb[0].mxu0
    %v4123 = vadd.f32 %v3950, %v4122
    %v4124 = vpop.f32.mrb[0].mxu0
    %v4125 = vadd.f32 %v3952, %v4124
    %4126 = vmatprep.mubr.f32.mxu0 0.0
    %4127 = vmatmul.mubr.f32.gmra.mrb[0].mxu0 %v4021
    %v4128 = vpop.f32.mrb[0].mxu0
    %v4129 = vadd.f32 %v3956, %v4128
    %v4130 = vpop.f32.mrb[0].mxu0
    %v4131 = vadd.f32 %v3958, %v4130
    %4132 = vmatprep.mubr.f32.mxu0 0.0
    %4133 = vmatmul.mubr.f32.gmra.mrb[0].mxu0 %v4024
    %v4134 = vpop.f32.mrb[0].mxu0
    %v4135 = vadd.f32 %v3962, %v4134
    %v4136 = vpop.f32.mrb[0].mxu0
    %v4137 = vadd.f32 %v3964, %v4136
    %4138 = vmatprep.mubr.f32.mxu0 0.0
    %4139 = vmatmul.mubr.f32.gmra.mrb[0].mxu0 %v4027
    %v4140 = vpop.f32.mrb[0].mxu0
    %v4141 = vadd.f32 %v3968, %v4140
    %v4142 = vpop.f32.mrb[0].mxu0
    %v4143 = vadd.f32 %v3970, %v4142
    %4144 = vmatprep.mubr.f32.mxu0 0.0
    %4145 = vmatmul.mubr.f32.gmra.mrb[0].mxu0 %v4030
    %v4146 = vpop.f32.mrb[0].mxu0
    %v4147 = vadd.f32 %v3974, %v4146
    %v4148 = vpop.f32.mrb[0].mxu0
    %v4149 = vadd.f32 %v3976, %v4148
    %4150 = vmatprep.mubr.f32.mxu0 0.0
    %4151 = vmatmul.mubr.f32.gmra.mrb[0].mxu0 %v4033
    %v4152 = vpop.f32.mrb[0].mxu0
    %v4153 = vadd.f32 %v3980, %v4152
    %v4154 = vpop.f32.mrb[0].mxu0
    %v4155 = vadd.f32 %v3982, %v4154
    %4156 = vmatprep.mubr.f32.mxu0 0.0
    %4157 = vmatmul.mubr.f32.gmra.mrb[0].mxu0 %v4036
    %v4158 = vpop.f32.mrb[0].mxu0
    %v4159 = vadd.f32 %v3986, %v4158
    %v4160 = vpop.f32.mrb[0].mxu0
    %v4161 = vadd.f32 %v3988, %v4160
    %4162 = vmatprep.mubr.f32.mxu0 0.0
    %4163 = vmatmul.mubr.f32.gmra.mrb[0].mxu0 %v4039
    %v4164 = vpop.f32.mrb[0].mxu0
    %v4165 = vadd.f32 %v3992, %v4164
    %v4166 = vpop.f32.mrb[0].mxu0
    %v4167 = vadd.f32 %v3994, %v4166
    %4168 = vmatprep.mubr.f32.mxu0 0.0
    %4169 = vmatmul.mubr.f32.gmra.mrb[0].mxu0 %v4042
    %v4170 = vpop.f32.mrb[0].mxu0
    %v4171 = vadd.f32 %v3998, %v4170
    %v4172 = vpop.f32.mrb[0].mxu0
    %v4173 = vadd.f32 %v4000, %v4172
    %4174 = vmatprep.mubr.f32.mxu0 0.0
    %4175 = vmatmul.mubr.f32.gmra.mrb[0].mxu0 %v4045
    %v4176 = vpop.f32.mrb[0].mxu0
    %v4177 = vadd.f32 %v4004, %v4176
    %v4178 = vpop.f32.mrb[0].mxu0
    %v4179 = vadd.f32 %v4006, %v4178
    %4180 = vmatprep.mubr.f32.mxu0 0.0
    %4181 = vmatmul.mubr.f32.gmra.mrb[0].mxu0 %v4048
    %v4182 = vpop.f32.mrb[0].mxu0
    %v4183 = vadd.f32 %v4010, %v4182
    %v4184 = vpop.f32.mrb[0].mxu0
    %v4185 = vadd.f32 %v4012, %v4184
    %4186 = vdwg.mxu0
    %s4187 = scalar_lea.vmem %s13, 768
    %v4188 = vld [vmem:[%s4187] sm:$0xff]
    %v4189 = vld [vmem:[%s4187 + $0x8] sm:$0xff]
    %v4190 = vld [vmem:[%s4187 + $0x10] sm:$0xff]
    %v4191 = vld [vmem:[%s4187 + $0x18] sm:$0xff]
    %v4192 = vld [vmem:[%s4187 + $0x20] sm:$0xff]
    %v4193 = vld [vmem:[%s4187 + $0x28] sm:$0xff]
    %v4194 = vld [vmem:[%s4187 + $0x30] sm:$0xff]
    %v4195 = vld [vmem:[%s4187 + $0x38] sm:$0xff]
    %v4196 = vld [vmem:[%s4187 + $0x40] sm:$0xff]
    %v4197 = vld [vmem:[%s4187 + $0x48] sm:$0xff]
    %v4198 = vld [vmem:[%s4187 + $0x50] sm:$0xff]
    %v4199 = vld [vmem:[%s4187 + $0x58] sm:$0xff]
    %v4200 = vld [vmem:[%s4187 + $0x60] sm:$0xff]
    %v4201 = vld [vmem:[%s4187 + $0x68] sm:$0xff]
    %v4202 = vld [vmem:[%s4187 + $0x70] sm:$0xff]
    %v4203 = vld [vmem:[%s4187 + $0x78] sm:$0xff]
    %v4204 = vld [vmem:[%s4187 + $0x80] sm:$0xff]
    %v4205 = vld [vmem:[%s4187 + $0x88] sm:$0xff]
    %v4206 = vld [vmem:[%s4187 + $0x90] sm:$0xff]
    %v4207 = vld [vmem:[%s4187 + $0x98] sm:$0xff]
    %v4208 = vld [vmem:[%s4187 + $0xa0] sm:$0xff]
    %v4209 = vld [vmem:[%s4187 + $0xa8] sm:$0xff]
    %v4210 = vld [vmem:[%s4187 + $0xb0] sm:$0xff]
    %v4211 = vld [vmem:[%s4187 + $0xb8] sm:$0xff]
    %v4212 = vld [vmem:[%s4187 + $0xc0] sm:$0xff]
    %v4213 = vld [vmem:[%s4187 + $0xc8] sm:$0xff]
    %v4214 = vld [vmem:[%s4187 + $0xd0] sm:$0xff]
    %v4215 = vld [vmem:[%s4187 + $0xd8] sm:$0xff]
    %v4216 = vld [vmem:[%s4187 + $0xe0] sm:$0xff]
    %v4217 = vld [vmem:[%s4187 + $0xe8] sm:$0xff]
    %v4218 = vld [vmem:[%s4187 + $0xf0] sm:$0xff]
    %v4219 = vld [vmem:[%s4187 + $0xf8] sm:$0xff]
    %v4220 = vld [vmem:[%s4187 + $0x100] sm:$0xff]
    %v4221 = vld [vmem:[%s4187 + $0x108] sm:$0xff]
    %v4222 = vld [vmem:[%s4187 + $0x110] sm:$0xff]
    %v4223 = vld [vmem:[%s4187 + $0x118] sm:$0xff]
    %v4224 = vld [vmem:[%s4187 + $0x120] sm:$0xff]
    %v4225 = vld [vmem:[%s4187 + $0x128] sm:$0xff]
    %v4226 = vld [vmem:[%s4187 + $0x130] sm:$0xff]
    %v4227 = vld [vmem:[%s4187 + $0x138] sm:$0xff]
    %v4228 = vld [vmem:[%s4187 + $0x140] sm:$0xff]
    %v4229 = vld [vmem:[%s4187 + $0x148] sm:$0xff]
    %v4230 = vld [vmem:[%s4187 + $0x150] sm:$0xff]
    %v4231 = vld [vmem:[%s4187 + $0x158] sm:$0xff]
    %v4232 = vld [vmem:[%s4187 + $0x160] sm:$0xff]
    %v4233 = vld [vmem:[%s4187 + $0x168] sm:$0xff]
    %v4234 = vld [vmem:[%s4187 + $0x170] sm:$0xff]
    %v4235 = vld [vmem:[%s4187 + $0x178] sm:$0xff]
    %4236 = vmatprep.subr.mxu0 %v4189
    %4237 = vmatpush1.msra.mxu0 %v4188
    %4238 = vmatprep.subr.mxu0 %v4191
    %4239 = vmatpush1.msra.mxu0 %v4190
    %4240 = vmatprep.subr.mxu0 %v4193
    %4241 = vmatpush1.msra.mxu0 %v4192
    %4242 = vmatprep.subr.mxu0 %v4195
    %4243 = vmatpush1.msra.mxu0 %v4194
    %4244 = vmatprep.subr.mxu0 %v4197
    %4245 = vmatpush1.msra.mxu0 %v4196
    %4246 = vmatprep.subr.mxu0 %v4199
    %4247 = vmatpush1.msra.mxu0 %v4198
    %4248 = vmatprep.subr.mxu0 %v4201
    %4249 = vmatpush1.msra.mxu0 %v4200
    %4250 = vmatprep.subr.mxu0 %v4203
    %4251 = vmatpush1.msra.mxu0 %v4202
    %4252 = vmatprep.subr.mxu0 %v4205
    %4253 = vmatpush1.msra.mxu0 %v4204
    %4254 = vmatprep.subr.mxu0 %v4207
    %4255 = vmatpush1.msra.mxu0 %v4206
    %4256 = vmatprep.subr.mxu0 %v4209
    %4257 = vmatpush1.msra.mxu0 %v4208
    %4258 = vmatprep.subr.mxu0 %v4211
    %4259 = vmatpush1.msra.mxu0 %v4210
    %4260 = vmatprep.subr.mxu0 %v4213
    %4261 = vmatpush1.msra.mxu0 %v4212
    %4262 = vmatprep.subr.mxu0 %v4215
    %4263 = vmatpush1.msra.mxu0 %v4214
    %4264 = vmatprep.subr.mxu0 %v4217
    %4265 = vmatpush1.msra.mxu0 %v4216
    %4266 = vmatprep.subr.mxu0 %v4219
    %4267 = vmatpush1.msra.mxu0 %v4218
    %4268 = vmatprep.subr.mxu0 %v4221
    %4269 = vmatpush1.msra.mxu0 %v4220
    %4270 = vmatprep.subr.mxu0 %v4223
    %4271 = vmatpush1.msra.mxu0 %v4222
    %4272 = vmatprep.subr.mxu0 %v4225
    %4273 = vmatpush1.msra.mxu0 %v4224
    %4274 = vmatprep.subr.mxu0 %v4227
    %4275 = vmatpush1.msra.mxu0 %v4226
    %4276 = vmatprep.subr.mxu0 %v4229
    %4277 = vmatpush1.msra.mxu0 %v4228
    %4278 = vmatprep.subr.mxu0 %v4231
    %4279 = vmatpush1.msra.mxu0 %v4230
    %4280 = vmatprep.subr.mxu0 %v4233
    %4281 = vmatpush1.msra.mxu0 %v4232
    %4282 = vmatprep.subr.mxu0 %v4235
    %4283 = vmatpush1.msra.mxu0 %v4234
    %4284 = vmatprep.subr.mxu0 0.0
    %4285 = vmatpush1.msra.mxu0 0.0
    %4286 = vmatprep.subr.mxu0 0.0
    %4287 = vmatpush1.msra.mxu0 0.0
    %4288 = vmatprep.subr.mxu0 0.0
    %4289 = vmatpush1.msra.mxu0 0.0
    %4290 = vmatprep.subr.mxu0 0.0
    %4291 = vmatpush1.msra.mxu0 0.0
    %4292 = vmatprep.subr.mxu0 0.0
    %4293 = vmatpush1.msra.mxu0 0.0
    %4294 = vmatprep.subr.mxu0 0.0
    %4295 = vmatpush1.msra.mxu0 0.0
    %4296 = vmatprep.subr.mxu0 0.0
    %4297 = vmatpush1.msra.mxu0 0.0
    %4298 = vmatprep.subr.mxu0 0.0
    %4299 = vmatpush1.msra.mxu0 0.0
    %4300 = vmatprep.mubr.f32.mxu0 %v3547
    %4301 = vmatmul.mubr.f32.gmra.mrb[0].mxu0 %v3486
    %v4302 = vpop.f32.mrb[0].mxu0
    %v4303 = vadd.f32 0.0, %v4302
    %v4304 = vpop.f32.mrb[0].mxu0
    %v4305 = vadd.f32 0.0, %v4304
    %4306 = vmatprep.mubr.f32.mxu0 %v3550
    %4307 = vmatmul.mubr.f32.gmra.mrb[0].mxu0 %v3488
    %v4308 = vpop.f32.mrb[0].mxu0
    %v4309 = vadd.f32 0.0, %v4308
    %v4310 = vpop.f32.mrb[0].mxu0
    %v4311 = vadd.f32 0.0, %v4310
    %4312 = vmatprep.mubr.f32.mxu0 %v3553
    %4313 = vmatmul.mubr.f32.gmra.mrb[0].mxu0 %v3490
    %v4314 = vpop.f32.mrb[0].mxu0
    %v4315 = vadd.f32 0.0, %v4314
    %v4316 = vpop.f32.mrb[0].mxu0
    %v4317 = vadd.f32 0.0, %v4316
    %4318 = vmatprep.mubr.f32.mxu0 %v3556
    %4319 = vmatmul.mubr.f32.gmra.mrb[0].mxu0 %v3492
    %v4320 = vpop.f32.mrb[0].mxu0
    %v4321 = vadd.f32 0.0, %v4320
    %v4322 = vpop.f32.mrb[0].mxu0
    %v4323 = vadd.f32 0.0, %v4322
    %4324 = vmatprep.mubr.f32.mxu0 %v3559
    %4325 = vmatmul.mubr.f32.gmra.mrb[0].mxu0 %v3494
    %v4326 = vpop.f32.mrb[0].mxu0
    %v4327 = vadd.f32 0.0, %v4326
    %v4328 = vpop.f32.mrb[0].mxu0
    %v4329 = vadd.f32 0.0, %v4328
    %4330 = vmatprep.mubr.f32.mxu0 %v3562
    %4331 = vmatmul.mubr.f32.gmra.mrb[0].mxu0 %v3496
    %v4332 = vpop.f32.mrb[0].mxu0
    %v4333 = vadd.f32 0.0, %v4332
    %v4334 = vpop.f32.mrb[0].mxu0
    %v4335 = vadd.f32 0.0, %v4334
    %4336 = vdwg.mxu0
    %s4337 = scalar_lea.vmem %s14, 192
    %v4338 = vld [vmem:[%s4337] sm:$0xff]
    %v4339 = vld [vmem:[%s4337 + $0x8] sm:$0xff]
    %v4340 = vld [vmem:[%s4337 + $0x10] sm:$0xff]
    %v4341 = vld [vmem:[%s4337 + $0x18] sm:$0xff]
    %v4342 = vld [vmem:[%s4337 + $0x20] sm:$0xff]
    %v4343 = vld [vmem:[%s4337 + $0x28] sm:$0xff]
    %v4344 = vld [vmem:[%s4337 + $0x30] sm:$0xff]
    %v4345 = vld [vmem:[%s4337 + $0x38] sm:$0xff]
    %v4346 = vld [vmem:[%s4337 + $0x40] sm:$0xff]
    %v4347 = vld [vmem:[%s4337 + $0x48] sm:$0xff]
    %v4348 = vld [vmem:[%s4337 + $0x50] sm:$0xff]
    %v4349 = vld [vmem:[%s4337 + $0x58] sm:$0xff]
    %v4351 = vsel %vm3840, %v4338, 0
    %v4354 = vsel %vm3840, %v4339, 0
    %v4357 = vsel %vm3840, %v4340, 0
    %v4360 = vsel %vm3840, %v4341, 0
    %v4363 = vsel %vm3840, %v4342, 0
    %v4366 = vsel %vm3840, %v4343, 0
    %v4369 = vsel %vm3840, %v4344, 0
    %v4372 = vsel %vm3840, %v4345, 0
    %v4375 = vsel %vm3840, %v4346, 0
    %v4378 = vsel %vm3840, %v4347, 0
    %v4381 = vsel %vm3840, %v4348, 0
    %v4384 = vsel %vm3840, %v4349, 0
    %4386 = vmatprep.subr.mxu0 %v4305
    %4387 = vmatpush1.msra.mxu0 %v4303
    %4388 = vmatprep.subr.mxu0 %v4311
    %4389 = vmatpush1.msra.mxu0 %v4309
    %4390 = vmatprep.subr.mxu0 %v4317
    %4391 = vmatpush1.msra.mxu0 %v4315
    %4392 = vmatprep.subr.mxu0 %v4323
    %4393 = vmatpush1.msra.mxu0 %v4321
    %4394 = vmatprep.subr.mxu0 %v4329
    %4395 = vmatpush1.msra.mxu0 %v4327
    %4396 = vmatprep.subr.mxu0 %v4335
    %4397 = vmatpush1.msra.mxu0 %v4333
    %4398 = vmatprep.subr.mxu0 0.0
    %4399 = vmatpush1.msra.mxu0 0.0
    %4400 = vmatprep.subr.mxu0 0.0
    %4401 = vmatpush1.msra.mxu0 0.0
    %4402 = vmatprep.subr.mxu0 0.0
    %4403 = vmatpush1.msra.mxu0 0.0
    %4404 = vmatprep.subr.mxu0 0.0
    %4405 = vmatpush1.msra.mxu0 0.0
    %4406 = vmatprep.subr.mxu0 0.0
    %4407 = vmatpush1.msra.mxu0 0.0
    %4408 = vmatprep.subr.mxu0 0.0
    %4409 = vmatpush1.msra.mxu0 0.0
    %4410 = vmatprep.subr.mxu0 0.0
    %4411 = vmatpush1.msra.mxu0 0.0
    %4412 = vmatprep.subr.mxu0 0.0
    %4413 = vmatpush1.msra.mxu0 0.0
    %4414 = vmatprep.subr.mxu0 0.0
    %4415 = vmatpush1.msra.mxu0 0.0
    %4416 = vmatprep.subr.mxu0 0.0
    %4417 = vmatpush1.msra.mxu0 0.0
    %4418 = vmatprep.subr.mxu0 0.0
    %4419 = vmatpush1.msra.mxu0 0.0
    %4420 = vmatprep.subr.mxu0 0.0
    %4421 = vmatpush1.msra.mxu0 0.0
    %4422 = vmatprep.subr.mxu0 0.0
    %4423 = vmatpush1.msra.mxu0 0.0
    %4424 = vmatprep.subr.mxu0 0.0
    %4425 = vmatpush1.msra.mxu0 0.0
    %4426 = vmatprep.subr.mxu0 0.0
    %4427 = vmatpush1.msra.mxu0 0.0
    %4428 = vmatprep.subr.mxu0 0.0
    %4429 = vmatpush1.msra.mxu0 0.0
    %4430 = vmatprep.subr.mxu0 0.0
    %4431 = vmatpush1.msra.mxu0 0.0
    %4432 = vmatprep.subr.mxu0 0.0
    %4433 = vmatpush1.msra.mxu0 0.0
    %4434 = vmatprep.subr.mxu0 0.0
    %4435 = vmatpush1.msra.mxu0 0.0
    %4436 = vmatprep.subr.mxu0 0.0
    %4437 = vmatpush1.msra.mxu0 0.0
    %4438 = vmatprep.subr.mxu0 0.0
    %4439 = vmatpush1.msra.mxu0 0.0
    %4440 = vmatprep.subr.mxu0 0.0
    %4441 = vmatpush1.msra.mxu0 0.0
    %4442 = vmatprep.subr.mxu0 0.0
    %4443 = vmatpush1.msra.mxu0 0.0
    %4444 = vmatprep.subr.mxu0 0.0
    %4445 = vmatpush1.msra.mxu0 0.0
    %4446 = vmatprep.subr.mxu0 0.0
    %4447 = vmatpush1.msra.mxu0 0.0
    %4448 = vmatprep.subr.mxu0 0.0
    %4449 = vmatpush1.msra.mxu0 0.0
    %4450 = vmatprep.mubr.f32.mxu0 0.0
    %4451 = vmatmul.mubr.f32.gmra.mrb[0].mxu0 %v4351
    %v4452 = vpop.f32.mrb[0].mxu0
    %v4453 = vadd.f32 0.0, %v4452
    %v4454 = vpop.f32.mrb[0].mxu0
    %v4455 = vadd.f32 0.0, %v4454
    %4456 = vmatprep.mubr.f32.mxu0 0.0
    %4457 = vmatmul.mubr.f32.gmra.mrb[0].mxu0 %v4354
    %v4458 = vpop.f32.mrb[0].mxu0
    %v4459 = vadd.f32 0.0, %v4458
    %v4460 = vpop.f32.mrb[0].mxu0
    %v4461 = vadd.f32 0.0, %v4460
    %4462 = vmatprep.mubr.f32.mxu0 0.0
    %4463 = vmatmul.mubr.f32.gmra.mrb[0].mxu0 %v4357
    %v4464 = vpop.f32.mrb[0].mxu0
    %v4465 = vadd.f32 0.0, %v4464
    %v4466 = vpop.f32.mrb[0].mxu0
    %v4467 = vadd.f32 0.0, %v4466
    %4468 = vmatprep.mubr.f32.mxu0 0.0
    %4469 = vmatmul.mubr.f32.gmra.mrb[0].mxu0 %v4360
    %v4470 = vpop.f32.mrb[0].mxu0
    %v4471 = vadd.f32 0.0, %v4470
    %v4472 = vpop.f32.mrb[0].mxu0
    %v4473 = vadd.f32 0.0, %v4472
    %4474 = vmatprep.mubr.f32.mxu0 0.0
    %4475 = vmatmul.mubr.f32.gmra.mrb[0].mxu0 %v4363
    %v4476 = vpop.f32.mrb[0].mxu0
    %v4477 = vadd.f32 0.0, %v4476
    %v4478 = vpop.f32.mrb[0].mxu0
    %v4479 = vadd.f32 0.0, %v4478
    %4480 = vmatprep.mubr.f32.mxu0 0.0
    %4481 = vmatmul.mubr.f32.gmra.mrb[0].mxu0 %v4366
    %v4482 = vpop.f32.mrb[0].mxu0
    %v4483 = vadd.f32 0.0, %v4482
    %v4484 = vpop.f32.mrb[0].mxu0
    %v4485 = vadd.f32 0.0, %v4484
    %4486 = vmatprep.mubr.f32.mxu0 0.0
    %4487 = vmatmul.mubr.f32.gmra.mrb[0].mxu0 %v4369
    %v4488 = vpop.f32.mrb[0].mxu0
    %v4489 = vadd.f32 0.0, %v4488
    %v4490 = vpop.f32.mrb[0].mxu0
    %v4491 = vadd.f32 0.0, %v4490
    %4492 = vmatprep.mubr.f32.mxu0 0.0
    %4493 = vmatmul.mubr.f32.gmra.mrb[0].mxu0 %v4372
    %v4494 = vpop.f32.mrb[0].mxu0
    %v4495 = vadd.f32 0.0, %v4494
    %v4496 = vpop.f32.mrb[0].mxu0
    %v4497 = vadd.f32 0.0, %v4496
    %4498 = vmatprep.mubr.f32.mxu0 0.0
    %4499 = vmatmul.mubr.f32.gmra.mrb[0].mxu0 %v4375
    %v4500 = vpop.f32.mrb[0].mxu0
    %v4501 = vadd.f32 0.0, %v4500
    %v4502 = vpop.f32.mrb[0].mxu0
    %v4503 = vadd.f32 0.0, %v4502
    %4504 = vmatprep.mubr.f32.mxu0 0.0
    %4505 = vmatmul.mubr.f32.gmra.mrb[0].mxu0 %v4378
    %v4506 = vpop.f32.mrb[0].mxu0
    %v4507 = vadd.f32 0.0, %v4506
    %v4508 = vpop.f32.mrb[0].mxu0
    %v4509 = vadd.f32 0.0, %v4508
    %4510 = vmatprep.mubr.f32.mxu0 0.0
    %4511 = vmatmul.mubr.f32.gmra.mrb[0].mxu0 %v4381
    %v4512 = vpop.f32.mrb[0].mxu0
    %v4513 = vadd.f32 0.0, %v4512
    %v4514 = vpop.f32.mrb[0].mxu0
    %v4515 = vadd.f32 0.0, %v4514
    %4516 = vmatprep.mubr.f32.mxu0 0.0
    %4517 = vmatmul.mubr.f32.gmra.mrb[0].mxu0 %v4384
    %v4518 = vpop.f32.mrb[0].mxu0
    %v4519 = vadd.f32 0.0, %v4518
    %v4520 = vpop.f32.mrb[0].mxu0
    %v4521 = vadd.f32 0.0, %v4520
    %4522 = vdwg.mxu0
    %v4523 = vadd.f32 %v4117, %v4453
    %v4524 = vadd.f32 %v4119, %v4455
    %v4525 = vadd.f32 %v4123, %v4459
    %v4526 = vadd.f32 %v4125, %v4461
    %v4527 = vadd.f32 %v4129, %v4465
    %v4528 = vadd.f32 %v4131, %v4467
    %v4529 = vadd.f32 %v4135, %v4471
    %v4530 = vadd.f32 %v4137, %v4473
    %v4531 = vadd.f32 %v4141, %v4477
    %v4532 = vadd.f32 %v4143, %v4479
    %v4533 = vadd.f32 %v4147, %v4483
    %v4534 = vadd.f32 %v4149, %v4485
    %v4535 = vadd.f32 %v4153, %v4489
    %v4536 = vadd.f32 %v4155, %v4491
    %v4537 = vadd.f32 %v4159, %v4495
    %v4538 = vadd.f32 %v4161, %v4497
    %v4539 = vadd.f32 %v4165, %v4501
    %v4540 = vadd.f32 %v4167, %v4503
    %v4541 = vadd.f32 %v4171, %v4507
    %v4542 = vadd.f32 %v4173, %v4509
    %v4543 = vadd.f32 %v4177, %v4513
    %v4544 = vadd.f32 %v4179, %v4515
    %v4545 = vadd.f32 %v4183, %v4519
    %v4546 = vadd.f32 %v4185, %v4521
    %s4547 = scalar_lea.vmem %s13, 1152
    %v4548 = vld [vmem:[%s4547] sm:$0xff]
    %v4549 = vld [vmem:[%s4547 + $0x8] sm:$0xff]
    %v4550 = vld [vmem:[%s4547 + $0x10] sm:$0xff]
    %v4551 = vld [vmem:[%s4547 + $0x18] sm:$0xff]
    %v4552 = vld [vmem:[%s4547 + $0x20] sm:$0xff]
    %v4553 = vld [vmem:[%s4547 + $0x28] sm:$0xff]
    %v4554 = vld [vmem:[%s4547 + $0x30] sm:$0xff]
    %v4555 = vld [vmem:[%s4547 + $0x38] sm:$0xff]
    %v4556 = vld [vmem:[%s4547 + $0x40] sm:$0xff]
    %v4557 = vld [vmem:[%s4547 + $0x48] sm:$0xff]
    %v4558 = vld [vmem:[%s4547 + $0x50] sm:$0xff]
    %v4559 = vld [vmem:[%s4547 + $0x58] sm:$0xff]
    %v4560 = vld [vmem:[%s4547 + $0x60] sm:$0xff]
    %v4561 = vld [vmem:[%s4547 + $0x68] sm:$0xff]
    %v4562 = vld [vmem:[%s4547 + $0x70] sm:$0xff]
    %v4563 = vld [vmem:[%s4547 + $0x78] sm:$0xff]
    %v4564 = vld [vmem:[%s4547 + $0x80] sm:$0xff]
    %v4565 = vld [vmem:[%s4547 + $0x88] sm:$0xff]
    %v4566 = vld [vmem:[%s4547 + $0x90] sm:$0xff]
    %v4567 = vld [vmem:[%s4547 + $0x98] sm:$0xff]
    %v4568 = vld [vmem:[%s4547 + $0xa0] sm:$0xff]
    %v4569 = vld [vmem:[%s4547 + $0xa8] sm:$0xff]
    %v4570 = vld [vmem:[%s4547 + $0xb0] sm:$0xff]
    %v4571 = vld [vmem:[%s4547 + $0xb8] sm:$0xff]
    %v4572 = vld [vmem:[%s4547 + $0xc0] sm:$0xff]
    %v4573 = vld [vmem:[%s4547 + $0xc8] sm:$0xff]
    %v4574 = vld [vmem:[%s4547 + $0xd0] sm:$0xff]
    %v4575 = vld [vmem:[%s4547 + $0xd8] sm:$0xff]
    %v4576 = vld [vmem:[%s4547 + $0xe0] sm:$0xff]
    %v4577 = vld [vmem:[%s4547 + $0xe8] sm:$0xff]
    %v4578 = vld [vmem:[%s4547 + $0xf0] sm:$0xff]
    %v4579 = vld [vmem:[%s4547 + $0xf8] sm:$0xff]
    %v4580 = vld [vmem:[%s4547 + $0x100] sm:$0xff]
    %v4581 = vld [vmem:[%s4547 + $0x108] sm:$0xff]
    %v4582 = vld [vmem:[%s4547 + $0x110] sm:$0xff]
    %v4583 = vld [vmem:[%s4547 + $0x118] sm:$0xff]
    %v4584 = vld [vmem:[%s4547 + $0x120] sm:$0xff]
    %v4585 = vld [vmem:[%s4547 + $0x128] sm:$0xff]
    %v4586 = vld [vmem:[%s4547 + $0x130] sm:$0xff]
    %v4587 = vld [vmem:[%s4547 + $0x138] sm:$0xff]
    %v4588 = vld [vmem:[%s4547 + $0x140] sm:$0xff]
    %v4589 = vld [vmem:[%s4547 + $0x148] sm:$0xff]
    %v4590 = vld [vmem:[%s4547 + $0x150] sm:$0xff]
    %v4591 = vld [vmem:[%s4547 + $0x158] sm:$0xff]
    %v4592 = vld [vmem:[%s4547 + $0x160] sm:$0xff]
    %v4593 = vld [vmem:[%s4547 + $0x168] sm:$0xff]
    %v4594 = vld [vmem:[%s4547 + $0x170] sm:$0xff]
    %v4595 = vld [vmem:[%s4547 + $0x178] sm:$0xff]
    %4596 = vmatprep.subr.mxu0 %v4549
    %4597 = vmatpush1.msra.mxu0 %v4548
    %4598 = vmatprep.subr.mxu0 %v4551
    %4599 = vmatpush1.msra.mxu0 %v4550
    %4600 = vmatprep.subr.mxu0 %v4553
    %4601 = vmatpush1.msra.mxu0 %v4552
    %4602 = vmatprep.subr.mxu0 %v4555
    %4603 = vmatpush1.msra.mxu0 %v4554
    %4604 = vmatprep.subr.mxu0 %v4557
    %4605 = vmatpush1.msra.mxu0 %v4556
    %4606 = vmatprep.subr.mxu0 %v4559
    %4607 = vmatpush1.msra.mxu0 %v4558
    %4608 = vmatprep.subr.mxu0 %v4561
    %4609 = vmatpush1.msra.mxu0 %v4560
    %4610 = vmatprep.subr.mxu0 %v4563
    %4611 = vmatpush1.msra.mxu0 %v4562
    %4612 = vmatprep.subr.mxu0 %v4565
    %4613 = vmatpush1.msra.mxu0 %v4564
    %4614 = vmatprep.subr.mxu0 %v4567
    %4615 = vmatpush1.msra.mxu0 %v4566
    %4616 = vmatprep.subr.mxu0 %v4569
    %4617 = vmatpush1.msra.mxu0 %v4568
    %4618 = vmatprep.subr.mxu0 %v4571
    %4619 = vmatpush1.msra.mxu0 %v4570
    %4620 = vmatprep.subr.mxu0 %v4573
    %4621 = vmatpush1.msra.mxu0 %v4572
    %4622 = vmatprep.subr.mxu0 %v4575
    %4623 = vmatpush1.msra.mxu0 %v4574
    %4624 = vmatprep.subr.mxu0 %v4577
    %4625 = vmatpush1.msra.mxu0 %v4576
    %4626 = vmatprep.subr.mxu0 %v4579
    %4627 = vmatpush1.msra.mxu0 %v4578
    %4628 = vmatprep.subr.mxu0 %v4581
    %4629 = vmatpush1.msra.mxu0 %v4580
    %4630 = vmatprep.subr.mxu0 %v4583
    %4631 = vmatpush1.msra.mxu0 %v4582
    %4632 = vmatprep.subr.mxu0 %v4585
    %4633 = vmatpush1.msra.mxu0 %v4584
    %4634 = vmatprep.subr.mxu0 %v4587
    %4635 = vmatpush1.msra.mxu0 %v4586
    %4636 = vmatprep.subr.mxu0 %v4589
    %4637 = vmatpush1.msra.mxu0 %v4588
    %4638 = vmatprep.subr.mxu0 %v4591
    %4639 = vmatpush1.msra.mxu0 %v4590
    %4640 = vmatprep.subr.mxu0 %v4593
    %4641 = vmatpush1.msra.mxu0 %v4592
    %4642 = vmatprep.subr.mxu0 %v4595
    %4643 = vmatpush1.msra.mxu0 %v4594
    %4644 = vmatprep.subr.mxu0 0.0
    %4645 = vmatpush1.msra.mxu0 0.0
    %4646 = vmatprep.subr.mxu0 0.0
    %4647 = vmatpush1.msra.mxu0 0.0
    %4648 = vmatprep.subr.mxu0 0.0
    %4649 = vmatpush1.msra.mxu0 0.0
    %4650 = vmatprep.subr.mxu0 0.0
    %4651 = vmatpush1.msra.mxu0 0.0
    %4652 = vmatprep.subr.mxu0 0.0
    %4653 = vmatpush1.msra.mxu0 0.0
    %4654 = vmatprep.subr.mxu0 0.0
    %4655 = vmatpush1.msra.mxu0 0.0
    %4656 = vmatprep.subr.mxu0 0.0
    %4657 = vmatpush1.msra.mxu0 0.0
    %4658 = vmatprep.subr.mxu0 0.0
    %4659 = vmatpush1.msra.mxu0 0.0
    %4660 = vmatprep.mubr.f32.mxu0 %v3547
    %4661 = vmatmul.mubr.f32.gmra.mrb[0].mxu0 %v3486
    %v4662 = vpop.f32.mrb[0].mxu0
    %v4663 = vadd.f32 0.0, %v4662
    %v4664 = vpop.f32.mrb[0].mxu0
    %v4665 = vadd.f32 0.0, %v4664
    %4666 = vmatprep.mubr.f32.mxu0 %v3550
    %4667 = vmatmul.mubr.f32.gmra.mrb[0].mxu0 %v3488
    %v4668 = vpop.f32.mrb[0].mxu0
    %v4669 = vadd.f32 0.0, %v4668
    %v4670 = vpop.f32.mrb[0].mxu0
    %v4671 = vadd.f32 0.0, %v4670
    %4672 = vmatprep.mubr.f32.mxu0 %v3553
    %4673 = vmatmul.mubr.f32.gmra.mrb[0].mxu0 %v3490
    %v4674 = vpop.f32.mrb[0].mxu0
    %v4675 = vadd.f32 0.0, %v4674
    %v4676 = vpop.f32.mrb[0].mxu0
    %v4677 = vadd.f32 0.0, %v4676
    %4678 = vmatprep.mubr.f32.mxu0 %v3556
    %4679 = vmatmul.mubr.f32.gmra.mrb[0].mxu0 %v3492
    %v4680 = vpop.f32.mrb[0].mxu0
    %v4681 = vadd.f32 0.0, %v4680
    %v4682 = vpop.f32.mrb[0].mxu0
    %v4683 = vadd.f32 0.0, %v4682
    %4684 = vmatprep.mubr.f32.mxu0 %v3559
    %4685 = vmatmul.mubr.f32.gmra.mrb[0].mxu0 %v3494
    %v4686 = vpop.f32.mrb[0].mxu0
    %v4687 = vadd.f32 0.0, %v4686
    %v4688 = vpop.f32.mrb[0].mxu0
    %v4689 = vadd.f32 0.0, %v4688
    %4690 = vmatprep.mubr.f32.mxu0 %v3562
    %4691 = vmatmul.mubr.f32.gmra.mrb[0].mxu0 %v3496
    %v4692 = vpop.f32.mrb[0].mxu0
    %v4693 = vadd.f32 0.0, %v4692
    %v4694 = vpop.f32.mrb[0].mxu0
    %v4695 = vadd.f32 0.0, %v4694
    %4696 = vdwg.mxu0
    %s4697 = scalar_lea.vmem %s14, 288
    %v4698 = vld [vmem:[%s4697] sm:$0xff]
    %v4699 = vld [vmem:[%s4697 + $0x8] sm:$0xff]
    %v4700 = vld [vmem:[%s4697 + $0x10] sm:$0xff]
    %v4701 = vld [vmem:[%s4697 + $0x18] sm:$0xff]
    %v4702 = vld [vmem:[%s4697 + $0x20] sm:$0xff]
    %v4703 = vld [vmem:[%s4697 + $0x28] sm:$0xff]
    %v4704 = vld [vmem:[%s4697 + $0x30] sm:$0xff]
    %v4705 = vld [vmem:[%s4697 + $0x38] sm:$0xff]
    %v4706 = vld [vmem:[%s4697 + $0x40] sm:$0xff]
    %v4707 = vld [vmem:[%s4697 + $0x48] sm:$0xff]
    %v4708 = vld [vmem:[%s4697 + $0x50] sm:$0xff]
    %v4709 = vld [vmem:[%s4697 + $0x58] sm:$0xff]
    %v4711 = vsel %vm3840, %v4698, 0
    %v4714 = vsel %vm3840, %v4699, 0
    %v4717 = vsel %vm3840, %v4700, 0
    %v4720 = vsel %vm3840, %v4701, 0
    %v4723 = vsel %vm3840, %v4702, 0
    %v4726 = vsel %vm3840, %v4703, 0
    %v4729 = vsel %vm3840, %v4704, 0
    %v4732 = vsel %vm3840, %v4705, 0
    %v4735 = vsel %vm3840, %v4706, 0
    %v4738 = vsel %vm3840, %v4707, 0
    %v4741 = vsel %vm3840, %v4708, 0
    %v4744 = vsel %vm3840, %v4709, 0
    %4746 = vmatprep.subr.mxu0 %v4665
    %4747 = vmatpush1.msra.mxu0 %v4663
    %4748 = vmatprep.subr.mxu0 %v4671
    %4749 = vmatpush1.msra.mxu0 %v4669
    %4750 = vmatprep.subr.mxu0 %v4677
    %4751 = vmatpush1.msra.mxu0 %v4675
    %4752 = vmatprep.subr.mxu0 %v4683
    %4753 = vmatpush1.msra.mxu0 %v4681
    %4754 = vmatprep.subr.mxu0 %v4689
    %4755 = vmatpush1.msra.mxu0 %v4687
    %4756 = vmatprep.subr.mxu0 %v4695
    %4757 = vmatpush1.msra.mxu0 %v4693
    %4758 = vmatprep.subr.mxu0 0.0
    %4759 = vmatpush1.msra.mxu0 0.0
    %4760 = vmatprep.subr.mxu0 0.0
    %4761 = vmatpush1.msra.mxu0 0.0
    %4762 = vmatprep.subr.mxu0 0.0
    %4763 = vmatpush1.msra.mxu0 0.0
    %4764 = vmatprep.subr.mxu0 0.0
    %4765 = vmatpush1.msra.mxu0 0.0
    %4766 = vmatprep.subr.mxu0 0.0
    %4767 = vmatpush1.msra.mxu0 0.0
    %4768 = vmatprep.subr.mxu0 0.0
    %4769 = vmatpush1.msra.mxu0 0.0
    %4770 = vmatprep.subr.mxu0 0.0
    %4771 = vmatpush1.msra.mxu0 0.0
    %4772 = vmatprep.subr.mxu0 0.0
    %4773 = vmatpush1.msra.mxu0 0.0
    %4774 = vmatprep.subr.mxu0 0.0
    %4775 = vmatpush1.msra.mxu0 0.0
    %4776 = vmatprep.subr.mxu0 0.0
    %4777 = vmatpush1.msra.mxu0 0.0
    %4778 = vmatprep.subr.mxu0 0.0
    %4779 = vmatpush1.msra.mxu0 0.0
    %4780 = vmatprep.subr.mxu0 0.0
    %4781 = vmatpush1.msra.mxu0 0.0
    %4782 = vmatprep.subr.mxu0 0.0
    %4783 = vmatpush1.msra.mxu0 0.0
    %4784 = vmatprep.subr.mxu0 0.0
    %4785 = vmatpush1.msra.mxu0 0.0
    %4786 = vmatprep.subr.mxu0 0.0
    %4787 = vmatpush1.msra.mxu0 0.0
    %4788 = vmatprep.subr.mxu0 0.0
    %4789 = vmatpush1.msra.mxu0 0.0
    %4790 = vmatprep.subr.mxu0 0.0
    %4791 = vmatpush1.msra.mxu0 0.0
    %4792 = vmatprep.subr.mxu0 0.0
    %4793 = vmatpush1.msra.mxu0 0.0
    %4794 = vmatprep.subr.mxu0 0.0
    %4795 = vmatpush1.msra.mxu0 0.0
    %4796 = vmatprep.subr.mxu0 0.0
    %4797 = vmatpush1.msra.mxu0 0.0
    %4798 = vmatprep.subr.mxu0 0.0
    %4799 = vmatpush1.msra.mxu0 0.0
    %4800 = vmatprep.subr.mxu0 0.0
    %4801 = vmatpush1.msra.mxu0 0.0
    %4802 = vmatprep.subr.mxu0 0.0
    %4803 = vmatpush1.msra.mxu0 0.0
    %4804 = vmatprep.subr.mxu0 0.0
    %4805 = vmatpush1.msra.mxu0 0.0
    %4806 = vmatprep.subr.mxu0 0.0
    %4807 = vmatpush1.msra.mxu0 0.0
    %4808 = vmatprep.subr.mxu0 0.0
    %4809 = vmatpush1.msra.mxu0 0.0
    %4810 = vmatprep.mubr.f32.mxu0 0.0
    %4811 = vmatmul.mubr.f32.gmra.mrb[0].mxu0 %v4711
    %v4812 = vpop.f32.mrb[0].mxu0
    %v4813 = vadd.f32 0.0, %v4812
    %v4814 = vpop.f32.mrb[0].mxu0
    %v4815 = vadd.f32 0.0, %v4814
    %4816 = vmatprep.mubr.f32.mxu0 0.0
    %4817 = vmatmul.mubr.f32.gmra.mrb[0].mxu0 %v4714
    %v4818 = vpop.f32.mrb[0].mxu0
    %v4819 = vadd.f32 0.0, %v4818
    %v4820 = vpop.f32.mrb[0].mxu0
    %v4821 = vadd.f32 0.0, %v4820
    %4822 = vmatprep.mubr.f32.mxu0 0.0
    %4823 = vmatmul.mubr.f32.gmra.mrb[0].mxu0 %v4717
    %v4824 = vpop.f32.mrb[0].mxu0
    %v4825 = vadd.f32 0.0, %v4824
    %v4826 = vpop.f32.mrb[0].mxu0
    %v4827 = vadd.f32 0.0, %v4826
    %4828 = vmatprep.mubr.f32.mxu0 0.0
    %4829 = vmatmul.mubr.f32.gmra.mrb[0].mxu0 %v4720
    %v4830 = vpop.f32.mrb[0].mxu0
    %v4831 = vadd.f32 0.0, %v4830
    %v4832 = vpop.f32.mrb[0].mxu0
    %v4833 = vadd.f32 0.0, %v4832
    %4834 = vmatprep.mubr.f32.mxu0 0.0
    %4835 = vmatmul.mubr.f32.gmra.mrb[0].mxu0 %v4723
    %v4836 = vpop.f32.mrb[0].mxu0
    %v4837 = vadd.f32 0.0, %v4836
    %v4838 = vpop.f32.mrb[0].mxu0
    %v4839 = vadd.f32 0.0, %v4838
    %4840 = vmatprep.mubr.f32.mxu0 0.0
    %4841 = vmatmul.mubr.f32.gmra.mrb[0].mxu0 %v4726
    %v4842 = vpop.f32.mrb[0].mxu0
    %v4843 = vadd.f32 0.0, %v4842
    %v4844 = vpop.f32.mrb[0].mxu0
    %v4845 = vadd.f32 0.0, %v4844
    %4846 = vmatprep.mubr.f32.mxu0 0.0
    %4847 = vmatmul.mubr.f32.gmra.mrb[0].mxu0 %v4729
    %v4848 = vpop.f32.mrb[0].mxu0
    %v4849 = vadd.f32 0.0, %v4848
    %v4850 = vpop.f32.mrb[0].mxu0
    %v4851 = vadd.f32 0.0, %v4850
    %4852 = vmatprep.mubr.f32.mxu0 0.0
    %4853 = vmatmul.mubr.f32.gmra.mrb[0].mxu0 %v4732
    %v4854 = vpop.f32.mrb[0].mxu0
    %v4855 = vadd.f32 0.0, %v4854
    %v4856 = vpop.f32.mrb[0].mxu0
    %v4857 = vadd.f32 0.0, %v4856
    %4858 = vmatprep.mubr.f32.mxu0 0.0
    %4859 = vmatmul.mubr.f32.gmra.mrb[0].mxu0 %v4735
    %v4860 = vpop.f32.mrb[0].mxu0
    %v4861 = vadd.f32 0.0, %v4860
    %v4862 = vpop.f32.mrb[0].mxu0
    %v4863 = vadd.f32 0.0, %v4862
    %4864 = vmatprep.mubr.f32.mxu0 0.0
    %4865 = vmatmul.mubr.f32.gmra.mrb[0].mxu0 %v4738
    %v4866 = vpop.f32.mrb[0].mxu0
    %v4867 = vadd.f32 0.0, %v4866
    %v4868 = vpop.f32.mrb[0].mxu0
    %v4869 = vadd.f32 0.0, %v4868
    %4870 = vmatprep.mubr.f32.mxu0 0.0
    %4871 = vmatmul.mubr.f32.gmra.mrb[0].mxu0 %v4741
    %v4872 = vpop.f32.mrb[0].mxu0
    %v4873 = vadd.f32 0.0, %v4872
    %v4874 = vpop.f32.mrb[0].mxu0
    %v4875 = vadd.f32 0.0, %v4874
    %4876 = vmatprep.mubr.f32.mxu0 0.0
    %4877 = vmatmul.mubr.f32.gmra.mrb[0].mxu0 %v4744
    %v4878 = vpop.f32.mrb[0].mxu0
    %v4879 = vadd.f32 0.0, %v4878
    %v4880 = vpop.f32.mrb[0].mxu0
    %v4881 = vadd.f32 0.0, %v4880
    %4882 = vdwg.mxu0
    %v4883 = vadd.f32 %v4523, %v4813
    %v4884 = vadd.f32 %v4524, %v4815
    %v4885 = vadd.f32 %v4525, %v4819
    %v4886 = vadd.f32 %v4526, %v4821
    %v4887 = vadd.f32 %v4527, %v4825
    %v4888 = vadd.f32 %v4528, %v4827
    %v4889 = vadd.f32 %v4529, %v4831
    %v4890 = vadd.f32 %v4530, %v4833
    %v4891 = vadd.f32 %v4531, %v4837
    %v4892 = vadd.f32 %v4532, %v4839
    %v4893 = vadd.f32 %v4533, %v4843
    %v4894 = vadd.f32 %v4534, %v4845
    %v4895 = vadd.f32 %v4535, %v4849
    %v4896 = vadd.f32 %v4536, %v4851
    %v4897 = vadd.f32 %v4537, %v4855
    %v4898 = vadd.f32 %v4538, %v4857
    %v4899 = vadd.f32 %v4539, %v4861
    %v4900 = vadd.f32 %v4540, %v4863
    %v4901 = vadd.f32 %v4541, %v4867
    %v4902 = vadd.f32 %v4542, %v4869
    %v4903 = vadd.f32 %v4543, %v4873
    %v4904 = vadd.f32 %v4544, %v4875
    %v4905 = vadd.f32 %v4545, %v4879
    %v4906 = vadd.f32 %v4546, %v4881
    %v4907 = vld [vmem:[%s15] sm:$0x3]
    %v4909 = vlaneseq
    %v4910 = vshrl.u32 %v4909, 7
    %v4911 = vsub.s32 0, %v4910
    %v4912 = vrot.slane %v4907, %v4911
    %v4913 = vlaneseq
    %v4914 = vshrl.u32 %v4913, 7
    %v4915 = vsub.s32 1, %v4914
    %v4916 = vrot.slane %v4907, %v4915
    %v4919 = vadd.f32 %v4883, %v4912
    %v4920 = vadd.f32 %v4884, %v4916
    %v4921 = vadd.f32 %v4885, %v4912
    %v4922 = vadd.f32 %v4886, %v4916
    %v4923 = vadd.f32 %v4887, %v4912
    %v4924 = vadd.f32 %v4888, %v4916
    %v4925 = vadd.f32 %v4889, %v4912
    %v4926 = vadd.f32 %v4890, %v4916
    %v4927 = vadd.f32 %v4891, %v4912
    %v4928 = vadd.f32 %v4892, %v4916
    %v4929 = vadd.f32 %v4893, %v4912
    %v4930 = vadd.f32 %v4894, %v4916
    %v4931 = vadd.f32 %v4895, %v4912
    %v4932 = vadd.f32 %v4896, %v4916
    %v4933 = vadd.f32 %v4897, %v4912
    %v4934 = vadd.f32 %v4898, %v4916
    %v4935 = vadd.f32 %v4899, %v4912
    %v4936 = vadd.f32 %v4900, %v4916
    %v4937 = vadd.f32 %v4901, %v4912
    %v4938 = vadd.f32 %v4902, %v4916
    %v4939 = vadd.f32 %v4903, %v4912
    %v4940 = vadd.f32 %v4904, %v4916
    %v4941 = vadd.f32 %v4905, %v4912
    %v4942 = vadd.f32 %v4906, %v4916
    %vm4943 = vcmp.ge.f32.partialorder %v4919, 0.0
    %vm4944 = vcmp.ge.f32.partialorder %v4920, 0.0
    %vm4945 = vcmp.ge.f32.partialorder %v4921, 0.0
    %vm4946 = vcmp.ge.f32.partialorder %v4922, 0.0
    %vm4947 = vcmp.ge.f32.partialorder %v4923, 0.0
    %vm4948 = vcmp.ge.f32.partialorder %v4924, 0.0
    %vm4949 = vcmp.ge.f32.partialorder %v4925, 0.0
    %vm4950 = vcmp.ge.f32.partialorder %v4926, 0.0
    %vm4951 = vcmp.ge.f32.partialorder %v4927, 0.0
    %vm4952 = vcmp.ge.f32.partialorder %v4928, 0.0
    %vm4953 = vcmp.ge.f32.partialorder %v4929, 0.0
    %vm4954 = vcmp.ge.f32.partialorder %v4930, 0.0
    %vm4955 = vcmp.ge.f32.partialorder %v4931, 0.0
    %vm4956 = vcmp.ge.f32.partialorder %v4932, 0.0
    %vm4957 = vcmp.ge.f32.partialorder %v4933, 0.0
    %vm4958 = vcmp.ge.f32.partialorder %v4934, 0.0
    %vm4959 = vcmp.ge.f32.partialorder %v4935, 0.0
    %vm4960 = vcmp.ge.f32.partialorder %v4936, 0.0
    %vm4961 = vcmp.ge.f32.partialorder %v4937, 0.0
    %vm4962 = vcmp.ge.f32.partialorder %v4938, 0.0
    %vm4963 = vcmp.ge.f32.partialorder %v4939, 0.0
    %vm4964 = vcmp.ge.f32.partialorder %v4940, 0.0
    %vm4965 = vcmp.ge.f32.partialorder %v4941, 0.0
    %vm4966 = vcmp.ge.f32.partialorder %v4942, 0.0
    %v4967 = vsub.f32 0.0, %v4919
    %v4968 = vsub.f32 0.0, %v4920
    %v4969 = vsub.f32 0.0, %v4921
    %v4970 = vsub.f32 0.0, %v4922
    %v4971 = vsub.f32 0.0, %v4923
    %v4972 = vsub.f32 0.0, %v4924
    %v4973 = vsub.f32 0.0, %v4925
    %v4974 = vsub.f32 0.0, %v4926
    %v4975 = vsub.f32 0.0, %v4927
    %v4976 = vsub.f32 0.0, %v4928
    %v4977 = vsub.f32 0.0, %v4929
    %v4978 = vsub.f32 0.0, %v4930
    %v4979 = vsub.f32 0.0, %v4931
    %v4980 = vsub.f32 0.0, %v4932
    %v4981 = vsub.f32 0.0, %v4933
    %v4982 = vsub.f32 0.0, %v4934
    %v4983 = vsub.f32 0.0, %v4935
    %v4984 = vsub.f32 0.0, %v4936
    %v4985 = vsub.f32 0.0, %v4937
    %v4986 = vsub.f32 0.0, %v4938
    %v4987 = vsub.f32 0.0, %v4939
    %v4988 = vsub.f32 0.0, %v4940
    %v4989 = vsub.f32 0.0, %v4941
    %v4990 = vsub.f32 0.0, %v4942
    %v4991 = vmul.f32 %v4967, 1.442695
    %v4992 = vpow.pop %v4991
    %v4993 = vmul.f32 %v4968, 1.442695
    %v4994 = vpow.pop %v4993
    %v4995 = vmul.f32 %v4969, 1.442695
    %v4996 = vpow.pop %v4995
    %v4997 = vmul.f32 %v4970, 1.442695
    %v4998 = vpow.pop %v4997
    %v4999 = vmul.f32 %v4971, 1.442695
    %v5000 = vpow.pop %v4999
    %v5001 = vmul.f32 %v4972, 1.442695
    %v5002 = vpow.pop %v5001
    %v5003 = vmul.f32 %v4973, 1.442695
    %v5004 = vpow.pop %v5003
    %v5005 = vmul.f32 %v4974, 1.442695
    %v5006 = vpow.pop %v5005
    %v5007 = vmul.f32 %v4975, 1.442695
    %v5008 = vpow.pop %v5007
    %v5009 = vmul.f32 %v4976, 1.442695
    %v5010 = vpow.pop %v5009
    %v5011 = vmul.f32 %v4977, 1.442695
    %v5012 = vpow.pop %v5011
    %v5013 = vmul.f32 %v4978, 1.442695
    %v5014 = vpow.pop %v5013
    %v5015 = vmul.f32 %v4979, 1.442695
    %v5016 = vpow.pop %v5015
    %v5017 = vmul.f32 %v4980, 1.442695
    %v5018 = vpow.pop %v5017
    %v5019 = vmul.f32 %v4981, 1.442695
    %v5020 = vpow.pop %v5019
    %v5021 = vmul.f32 %v4982, 1.442695
    %v5022 = vpow.pop %v5021
    %v5023 = vmul.f32 %v4983, 1.442695
    %v5024 = vpow.pop %v5023
    %v5025 = vmul.f32 %v4984, 1.442695
    %v5026 = vpow.pop %v5025
    %v5027 = vmul.f32 %v4985, 1.442695
    %v5028 = vpow.pop %v5027
    %v5029 = vmul.f32 %v4986, 1.442695
    %v5030 = vpow.pop %v5029
    %v5031 = vmul.f32 %v4987, 1.442695
    %v5032 = vpow.pop %v5031
    %v5033 = vmul.f32 %v4988, 1.442695
    %v5034 = vpow.pop %v5033
    %v5035 = vmul.f32 %v4989, 1.442695
    %v5036 = vpow.pop %v5035
    %v5037 = vmul.f32 %v4990, 1.442695
    %v5038 = vpow.pop %v5037
    %v5039 = vadd.f32 %v4992, 1.0
    %v5040 = vadd.f32 %v4994, 1.0
    %v5041 = vadd.f32 %v4996, 1.0
    %v5042 = vadd.f32 %v4998, 1.0
    %v5043 = vadd.f32 %v5000, 1.0
    %v5044 = vadd.f32 %v5002, 1.0
    %v5045 = vadd.f32 %v5004, 1.0
    %v5046 = vadd.f32 %v5006, 1.0
    %v5047 = vadd.f32 %v5008, 1.0
    %v5048 = vadd.f32 %v5010, 1.0
    %v5049 = vadd.f32 %v5012, 1.0
    %v5050 = vadd.f32 %v5014, 1.0
    %v5051 = vadd.f32 %v5016, 1.0
    %v5052 = vadd.f32 %v5018, 1.0
    %v5053 = vadd.f32 %v5020, 1.0
    %v5054 = vadd.f32 %v5022, 1.0
    %v5055 = vadd.f32 %v5024, 1.0
    %v5056 = vadd.f32 %v5026, 1.0
    %v5057 = vadd.f32 %v5028, 1.0
    %v5058 = vadd.f32 %v5030, 1.0
    %v5059 = vadd.f32 %v5032, 1.0
    %v5060 = vadd.f32 %v5034, 1.0
    %v5061 = vadd.f32 %v5036, 1.0
    %v5062 = vadd.f32 %v5038, 1.0
    %v5063 = vrcp.pop %v5039
    %v5064 = vmul.f32 1.0, %v5063
    %v5065 = vrcp.pop %v5040
    %v5066 = vmul.f32 1.0, %v5065
    %v5067 = vrcp.pop %v5041
    %v5068 = vmul.f32 1.0, %v5067
    %v5069 = vrcp.pop %v5042
    %v5070 = vmul.f32 1.0, %v5069
    %v5071 = vrcp.pop %v5043
    %v5072 = vmul.f32 1.0, %v5071
    %v5073 = vrcp.pop %v5044
    %v5074 = vmul.f32 1.0, %v5073
    %v5075 = vrcp.pop %v5045
    %v5076 = vmul.f32 1.0, %v5075
    %v5077 = vrcp.pop %v5046
    %v5078 = vmul.f32 1.0, %v5077
    %v5079 = vrcp.pop %v5047
    %v5080 = vmul.f32 1.0, %v5079
    %v5081 = vrcp.pop %v5048
    %v5082 = vmul.f32 1.0, %v5081
    %v5083 = vrcp.pop %v5049
    %v5084 = vmul.f32 1.0, %v5083
    %v5085 = vrcp.pop %v5050
    %v5086 = vmul.f32 1.0, %v5085
    %v5087 = vrcp.pop %v5051
    %v5088 = vmul.f32 1.0, %v5087
    %v5089 = vrcp.pop %v5052
    %v5090 = vmul.f32 1.0, %v5089
    %v5091 = vrcp.pop %v5053
    %v5092 = vmul.f32 1.0, %v5091
    %v5093 = vrcp.pop %v5054
    %v5094 = vmul.f32 1.0, %v5093
    %v5095 = vrcp.pop %v5055
    %v5096 = vmul.f32 1.0, %v5095
    %v5097 = vrcp.pop %v5056
    %v5098 = vmul.f32 1.0, %v5097
    %v5099 = vrcp.pop %v5057
    %v5100 = vmul.f32 1.0, %v5099
    %v5101 = vrcp.pop %v5058
    %v5102 = vmul.f32 1.0, %v5101
    %v5103 = vrcp.pop %v5059
    %v5104 = vmul.f32 1.0, %v5103
    %v5105 = vrcp.pop %v5060
    %v5106 = vmul.f32 1.0, %v5105
    %v5107 = vrcp.pop %v5061
    %v5108 = vmul.f32 1.0, %v5107
    %v5109 = vrcp.pop %v5062
    %v5110 = vmul.f32 1.0, %v5109
    %v5111 = vmul.f32 %v4919, 1.442695
    %v5112 = vpow.pop %v5111
    %v5113 = vmul.f32 %v4920, 1.442695
    %v5114 = vpow.pop %v5113
    %v5115 = vmul.f32 %v4921, 1.442695
    %v5116 = vpow.pop %v5115
    %v5117 = vmul.f32 %v4922, 1.442695
    %v5118 = vpow.pop %v5117
    %v5119 = vmul.f32 %v4923, 1.442695
    %v5120 = vpow.pop %v5119
    %v5121 = vmul.f32 %v4924, 1.442695
    %v5122 = vpow.pop %v5121
    %v5123 = vmul.f32 %v4925, 1.442695
    %v5124 = vpow.pop %v5123
    %v5125 = vmul.f32 %v4926, 1.442695
    %v5126 = vpow.pop %v5125
    %v5127 = vmul.f32 %v4927, 1.442695
    %v5128 = vpow.pop %v5127
    %v5129 = vmul.f32 %v4928, 1.442695
    %v5130 = vpow.pop %v5129
    %v5131 = vmul.f32 %v4929, 1.442695
    %v5132 = vpow.pop %v5131
    %v5133 = vmul.f32 %v4930, 1.442695
    %v5134 = vpow.pop %v5133
    %v5135 = vmul.f32 %v4931, 1.442695
    %v5136 = vpow.pop %v5135
    %v5137 = vmul.f32 %v4932, 1.442695
    %v5138 = vpow.pop %v5137
    %v5139 = vmul.f32 %v4933, 1.442695
    %v5140 = vpow.pop %v5139
    %v5141 = vmul.f32 %v4934, 1.442695
    %v5142 = vpow.pop %v5141
    %v5143 = vmul.f32 %v4935, 1.442695
    %v5144 = vpow.pop %v5143
    %v5145 = vmul.f32 %v4936, 1.442695
    %v5146 = vpow.pop %v5145
    %v5147 = vmul.f32 %v4937, 1.442695
    %v5148 = vpow.pop %v5147
    %v5149 = vmul.f32 %v4938, 1.442695
    %v5150 = vpow.pop %v5149
    %v5151 = vmul.f32 %v4939, 1.442695
    %v5152 = vpow.pop %v5151
    %v5153 = vmul.f32 %v4940, 1.442695
    %v5154 = vpow.pop %v5153
    %v5155 = vmul.f32 %v4941, 1.442695
    %v5156 = vpow.pop %v5155
    %v5157 = vmul.f32 %v4942, 1.442695
    %v5158 = vpow.pop %v5157
    %v5159 = vadd.f32 %v5112, 1.0
    %v5160 = vadd.f32 %v5114, 1.0
    %v5161 = vadd.f32 %v5116, 1.0
    %v5162 = vadd.f32 %v5118, 1.0
    %v5163 = vadd.f32 %v5120, 1.0
    %v5164 = vadd.f32 %v5122, 1.0
    %v5165 = vadd.f32 %v5124, 1.0
    %v5166 = vadd.f32 %v5126, 1.0
    %v5167 = vadd.f32 %v5128, 1.0
    %v5168 = vadd.f32 %v5130, 1.0
    %v5169 = vadd.f32 %v5132, 1.0
    %v5170 = vadd.f32 %v5134, 1.0
    %v5171 = vadd.f32 %v5136, 1.0
    %v5172 = vadd.f32 %v5138, 1.0
    %v5173 = vadd.f32 %v5140, 1.0
    %v5174 = vadd.f32 %v5142, 1.0
    %v5175 = vadd.f32 %v5144, 1.0
    %v5176 = vadd.f32 %v5146, 1.0
    %v5177 = vadd.f32 %v5148, 1.0
    %v5178 = vadd.f32 %v5150, 1.0
    %v5179 = vadd.f32 %v5152, 1.0
    %v5180 = vadd.f32 %v5154, 1.0
    %v5181 = vadd.f32 %v5156, 1.0
    %v5182 = vadd.f32 %v5158, 1.0
    %v5183 = vrcp.pop %v5159
    %v5184 = vmul.f32 %v5112, %v5183
    %v5185 = vrcp.pop %v5160
    %v5186 = vmul.f32 %v5114, %v5185
    %v5187 = vrcp.pop %v5161
    %v5188 = vmul.f32 %v5116, %v5187
    %v5189 = vrcp.pop %v5162
    %v5190 = vmul.f32 %v5118, %v5189
    %v5191 = vrcp.pop %v5163
    %v5192 = vmul.f32 %v5120, %v5191
    %v5193 = vrcp.pop %v5164
    %v5194 = vmul.f32 %v5122, %v5193
    %v5195 = vrcp.pop %v5165
    %v5196 = vmul.f32 %v5124, %v5195
    %v5197 = vrcp.pop %v5166
    %v5198 = vmul.f32 %v5126, %v5197
    %v5199 = vrcp.pop %v5167
    %v5200 = vmul.f32 %v5128, %v5199
    %v5201 = vrcp.pop %v5168
    %v5202 = vmul.f32 %v5130, %v5201
    %v5203 = vrcp.pop %v5169
    %v5204 = vmul.f32 %v5132, %v5203
    %v5205 = vrcp.pop %v5170
    %v5206 = vmul.f32 %v5134, %v5205
    %v5207 = vrcp.pop %v5171
    %v5208 = vmul.f32 %v5136, %v5207
    %v5209 = vrcp.pop %v5172
    %v5210 = vmul.f32 %v5138, %v5209
    %v5211 = vrcp.pop %v5173
    %v5212 = vmul.f32 %v5140, %v5211
    %v5213 = vrcp.pop %v5174
    %v5214 = vmul.f32 %v5142, %v5213
    %v5215 = vrcp.pop %v5175
    %v5216 = vmul.f32 %v5144, %v5215
    %v5217 = vrcp.pop %v5176
    %v5218 = vmul.f32 %v5146, %v5217
    %v5219 = vrcp.pop %v5177
    %v5220 = vmul.f32 %v5148, %v5219
    %v5221 = vrcp.pop %v5178
    %v5222 = vmul.f32 %v5150, %v5221
    %v5223 = vrcp.pop %v5179
    %v5224 = vmul.f32 %v5152, %v5223
    %v5225 = vrcp.pop %v5180
    %v5226 = vmul.f32 %v5154, %v5225
    %v5227 = vrcp.pop %v5181
    %v5228 = vmul.f32 %v5156, %v5227
    %v5229 = vrcp.pop %v5182
    %v5230 = vmul.f32 %v5158, %v5229
    %v5231 = vsel %vm4943, %v5064, %v5184
    %v5232 = vsel %vm4944, %v5066, %v5186
    %v5233 = vsel %vm4945, %v5068, %v5188
    %v5234 = vsel %vm4946, %v5070, %v5190
    %v5235 = vsel %vm4947, %v5072, %v5192
    %v5236 = vsel %vm4948, %v5074, %v5194
    %v5237 = vsel %vm4949, %v5076, %v5196
    %v5238 = vsel %vm4950, %v5078, %v5198
    %v5239 = vsel %vm4951, %v5080, %v5200
    %v5240 = vsel %vm4952, %v5082, %v5202
    %v5241 = vsel %vm4953, %v5084, %v5204
    %v5242 = vsel %vm4954, %v5086, %v5206
    %v5243 = vsel %vm4955, %v5088, %v5208
    %v5244 = vsel %vm4956, %v5090, %v5210
    %v5245 = vsel %vm4957, %v5092, %v5212
    %v5246 = vsel %vm4958, %v5094, %v5214
    %v5247 = vsel %vm4959, %v5096, %v5216
    %v5248 = vsel %vm4960, %v5098, %v5218
    %v5249 = vsel %vm4961, %v5100, %v5220
    %v5250 = vsel %vm4962, %v5102, %v5222
    %v5251 = vsel %vm4963, %v5104, %v5224
    %v5252 = vsel %vm4964, %v5106, %v5226
    %v5253 = vsel %vm4965, %v5108, %v5228
    %v5254 = vsel %vm4966, %v5110, %v5230
    %5255 = vst [vmem:[%s16] sm:$0xff] %v5231
    %5256 = vst.msk [vmem:[%s16 + $0x8] sm:$0xff] %vm72, %v5232
    %5257 = vst [vmem:[%s16 + $0x10] sm:$0xff] %v5233
    %5258 = vst.msk [vmem:[%s16 + $0x18] sm:$0xff] %vm72, %v5234
    %5259 = vst [vmem:[%s16 + $0x20] sm:$0xff] %v5235
    %5260 = vst.msk [vmem:[%s16 + $0x28] sm:$0xff] %vm72, %v5236
    %5261 = vst [vmem:[%s16 + $0x30] sm:$0xff] %v5237
    %5262 = vst.msk [vmem:[%s16 + $0x38] sm:$0xff] %vm72, %v5238
    %5263 = vst [vmem:[%s16 + $0x40] sm:$0xff] %v5239
    %5264 = vst.msk [vmem:[%s16 + $0x48] sm:$0xff] %vm72, %v5240
    %5265 = vst [vmem:[%s16 + $0x50] sm:$0xff] %v5241
    %5266 = vst.msk [vmem:[%s16 + $0x58] sm:$0xff] %vm72, %v5242
    %5267 = vst [vmem:[%s16 + $0x60] sm:$0xff] %v5243
    %5268 = vst.msk [vmem:[%s16 + $0x68] sm:$0xff] %vm72, %v5244
    %5269 = vst [vmem:[%s16 + $0x70] sm:$0xff] %v5245
    %5270 = vst.msk [vmem:[%s16 + $0x78] sm:$0xff] %vm72, %v5246
    %5271 = vst [vmem:[%s16 + $0x80] sm:$0xff] %v5247
    %5272 = vst.msk [vmem:[%s16 + $0x88] sm:$0xff] %vm72, %v5248
    %5273 = vst [vmem:[%s16 + $0x90] sm:$0xff] %v5249
    %5274 = vst.msk [vmem:[%s16 + $0x98] sm:$0xff] %vm72, %v5250
    %5275 = vst [vmem:[%s16 + $0xa0] sm:$0xff] %v5251
    %5276 = vst.msk [vmem:[%s16 + $0xa8] sm:$0xff] %vm72, %v5252
    %5277 = vst [vmem:[%s16 + $0xb0] sm:$0xff] %v5253
    %5278 = vst.msk [vmem:[%s16 + $0xb8] sm:$0xff] %vm72, %v5254
    // Predicated region
    $region70: #{pybullet_decoder_forward.1} parent=1 // pred_check
      _
    $region71: #{pybullet_decoder_forward.1} parent=1 // pred_check_branch
      %5280 = sbr.rel (0) target = $region73
    $region72: #{pybullet_decoder_forward.1} parent=1 // pred_region
      _
    $region73: #{pybullet_decoder_forward.1} parent=1 // pred_fallthru
      _
    // Predicated region
    $region74: #{pybullet_decoder_forward.1} parent=1 // pred_check
      _
    $region75: #{pybullet_decoder_forward.1} parent=1 // pred_check_branch
      %5282 = sbr.rel (0) target = $region77
    $region76: #{pybullet_decoder_forward.1} parent=1 // pred_region
      _
    $region77: #{pybullet_decoder_forward.1} parent=1 // pred_fallthru
      _
    %5283 = vsyncpa [#allocation3], 1

</llo_original>
